<compile_context>
chip_gen: v6e
topology: v6e:2x2x1
jax: 0.10.0
libtpu: 0.0.40
codegen_flags: <defaults>
</compile_context>

<pallas_src>
import functools

import jax
import jax.numpy as jnp
from jax.experimental import pallas as pl
from jax.experimental.pallas import tpu as pltpu


def build_dilations(blocks, layers):
    ds = []
    for _ in range(blocks):
        d = 1
        for _ in range(layers):
            ds.append(d)
            d *= 2
    return ds


# ----------------------------------------------------------------------------
# Single fused kernel: one grid step == one batch element, everything in VMEM.
# ----------------------------------------------------------------------------
def _wo_dg_kernel(*refs, dilations, num_nodes, t_in, cd, t_out):
    L = len(dilations)
    N = num_nodes
    x_ref = refs[0]
    bigA_refs = refs[1:1 + L]                       # kron(I_T, adp^T), per layer
    (start_w, start_b, wfg0, wfg1, bfg, wskip, bskip,
     wmlp, bmlp, e1w, e1b, e2w, e2b) = refs[1 + L:1 + L + 13]
    out_ref = refs[-1]

    # start_conv (1x1): rows = t*N + n (time-major), lanes = channels
    x = (jnp.dot(x_ref[...], start_w[...], preferred_element_type=jnp.float32)
         + start_b[...])                            # (t_in*N, Cr)

    skip = None
    t_cur = t_in
    for l, d in enumerate(dilations):
        t_o = t_cur - d
        xl = x[:t_o * N, :]                         # tap x[t]
        xr = x[d * N:, :]                           # tap x[t+d] == residual[..., -t_o:]

        # gated dilated causal conv, f|g packed along the output dim (2 dots)
        fg = (jnp.dot(xl, wfg0[l], preferred_element_type=jnp.float32)
              + jnp.dot(xr, wfg1[l], preferred_element_type=jnp.float32)
              + bfg[l])                             # (t_o*N, 2*Cd)
        xg = jnp.tanh(fg[:, :cd]) * jax.nn.sigmoid(fg[:, cd:])   # (t_o*N, Cd)

        # skip 1x1 conv + suffix accumulation (only the last t_out steps matter)
        s = jnp.dot(xg, wskip[l], preferred_element_type=jnp.float32) + bskip[l]
        s_tail = s[(t_o - t_out) * N:, :]           # (t_out*N, Cs)
        skip = s_tail if skip is None else skip + s_tail

        # graph conv (order 2) with adaptive adjacency, fully fused
        A = bigA_refs[l][...]                       # (t_o*N, t_o*N) block-diag adp^T
        x1 = jnp.dot(A, xg, preferred_element_type=jnp.float32)
        x2 = jnp.dot(A, x1, preferred_element_type=jnp.float32)
        h = (jnp.dot(xg, wmlp[l, 0], preferred_element_type=jnp.float32)
             + jnp.dot(x1, wmlp[l, 1], preferred_element_type=jnp.float32)
             + jnp.dot(x2, wmlp[l, 2], preferred_element_type=jnp.float32)
             + bmlp[l])                             # (t_o*N, Cr)

        x = h + xr                                  # residual add
        t_cur = t_o

    # relu(skip) -> end_conv_1 + relu -> end_conv_2
    h = jnp.maximum(skip, 0.0)
    h = jnp.maximum(
        jnp.dot(h, e1w[...], preferred_element_type=jnp.float32) + e1b[...], 0.0)
    out_ref[...] = (jnp.dot(h, e2w[...], preferred_element_type=jnp.float32)
                    + e2b[...])


def _full_spec(arr):
    nd = arr.ndim
    return pl.BlockSpec(arr.shape, lambda b: (0,) * nd)


# ----------------------------------------------------------------------------
# Parameters (packed / stacked layout expected by the fused kernel)
# ----------------------------------------------------------------------------
def init_params(key, *, num_nodes, in_dim, out_dim, residual, dilation_ch,
                skip_ch, end_ch, blocks, layers):
    L = blocks * layers
    ks = iter(jax.random.split(key, 16))
    nrm = lambda shape, s=0.2: s * jax.random.normal(next(ks), shape, jnp.float32)
    return {
        "nodevec1": nrm((num_nodes, 10), 1.0),
        "nodevec2": nrm((10, num_nodes), 1.0),
        "start_w": nrm((in_dim, residual)),
        "start_b": nrm((1, residual), 0.05),
        "end1_w": nrm((skip_ch, end_ch)),
        "end1_b": nrm((1, end_ch), 0.05),
        "end2_w": nrm((end_ch, out_dim)),
        "end2_b": nrm((1, out_dim), 0.05),
        # per-layer weights, stacked over layers; gated filter/gate packed [wf|wg]
        "wfg0": nrm((L, residual, 2 * dilation_ch)),
        "wfg1": nrm((L, residual, 2 * dilation_ch)),
        "bfg": nrm((L, 1, 2 * dilation_ch), 0.05),
        "wskip": nrm((L, dilation_ch, skip_ch)),
        "bskip": nrm((L, 1, skip_ch), 0.05),
        "wmlp": nrm((L, 3, dilation_ch, residual)),   # gcn mlp split for [x, x1, x2]
        "bmlp": nrm((L, 1, residual), 0.05),
    }


# ----------------------------------------------------------------------------
# Forward
# ----------------------------------------------------------------------------
def make_forward(dilations):
    dilations = tuple(dilations)

    @jax.jit
    def forward(params, x, stamp):
        del stamp  # unused by wo_dg.forward
        B, T, N, in_dim = x.shape
        t_in = T + 1                                  # F.pad(x, (1,0,0,0)) on time
        t_out = t_in - sum(dilations)
        cd = params["wskip"].shape[1]
        out_dim = params["end2_w"].shape[1]

        # entry: (B, T, N, C) is already time-major channels-last; just pad + flatten
        xin = jnp.pad(x.astype(jnp.float32), ((0, 0), (1, 0), (0, 0), (0, 0)))
        xin = xin.reshape(B, t_in * N, in_dim)

        # adaptive adjacency adp = softmax(relu(nv1 @ nv2), dim=1)  (plain jnp: tiny)
        adp = jax.nn.softmax(
            jnp.maximum(params["nodevec1"] @ params["nodevec2"], 0.0), axis=1)
        adp_t = adp.T
        bigAs = []
        t_cur = t_in
        for d in dilations:
            t_o = t_cur - d
            bigAs.append(jnp.kron(jnp.eye(t_o, dtype=jnp.float32), adp_t))
            t_cur = t_o

        inputs = [xin] + bigAs + [
            params["start_w"], params["start_b"],
            params["wfg0"], params["wfg1"], params["bfg"],
            params["wskip"], params["bskip"],
            params["wmlp"], params["bmlp"],
            params["end1_w"], params["end1_b"],
            params["end2_w"], params["end2_b"],
        ]
        in_specs = ([pl.BlockSpec((None, t_in * N, in_dim), lambda b: (b, 0, 0))]
                    + [_full_spec(a) for a in inputs[1:]])

        out = pl.pallas_call(
            functools.partial(_wo_dg_kernel, dilations=dilations, num_nodes=N,
                              t_in=t_in, cd=cd, t_out=t_out),
            out_shape=jax.ShapeDtypeStruct((B, t_out * N, out_dim), jnp.float32),
            grid=(B,),
            in_specs=in_specs,
            out_specs=pl.BlockSpec((None, t_out * N, out_dim), lambda b: (b, 0, 0)),
            compiler_params=pltpu.CompilerParams(
                dimension_semantics=("parallel",)),
        )(*inputs)

        # exit: (B, t_out*N, out_dim) -> (B, out_dim, N, t_out)  (PyTorch NCHW)
        return out.reshape(B, t_out, N, out_dim).transpose(0, 3, 2, 1)

    return forward


if __name__ == "__main__":
    # Small config consistent with the module's constructor arguments
    B, T, N = 2, 12, 8
    IN_DIM, OUT_DIM = 2, 4
    RESIDUAL, DILATION_CH, SKIP_CH, END_CH = 8, 8, 16, 32
    BLOCKS, LAYERS = 2, 2

    dilations = build_dilations(BLOCKS, LAYERS)       # [1, 2, 1, 2]
    T_out = (T + 1) - sum(dilations)                  # receptive-field shrink

    key = jax.random.PRNGKey(0)
    kp, kx = jax.random.split(key)
    params = init_params(
        kp, num_nodes=N, in_dim=IN_DIM, out_dim=OUT_DIM, residual=RESIDUAL,
        dilation_ch=DILATION_CH, skip_ch=SKIP_CH, end_ch=END_CH,
        blocks=BLOCKS, layers=LAYERS)

    x = jax.random.normal(kx, (B, T, N, IN_DIM), jnp.float32)
    stamp = jnp.zeros((B, T), jnp.float32)            # unused, mirrors forward(x, stamp)

    forward = make_forward(dilations)
    out = forward(params, x, stamp)
    jax.block_until_ready(out)

    assert out.shape == (B, OUT_DIM, N, T_out), out.shape
    assert bool(jnp.all(jnp.isfinite(out)))
    print("KERNEL_OK")
</pallas_src>

<mosaic_0001>
module attributes {stable_mosaic.version = 11 : i64} {
  func.func @_wo_dg_kernel(%arg0: i32, %arg1: memref<1x104x2xf32, #tpu.memory_space<vmem>>, %arg2: memref<96x96xf32, #tpu.memory_space<vmem>>, %arg3: memref<80x80xf32, #tpu.memory_space<vmem>>, %arg4: memref<72x72xf32, #tpu.memory_space<vmem>>, %arg5: memref<56x56xf32, #tpu.memory_space<vmem>>, %arg6: memref<2x8xf32, #tpu.memory_space<vmem>>, %arg7: memref<1x8xf32, #tpu.memory_space<vmem>>, %arg8: memref<4x8x16xf32, #tpu.memory_space<vmem>>, %arg9: memref<4x8x16xf32, #tpu.memory_space<vmem>>, %arg10: memref<4x1x16xf32, #tpu.memory_space<vmem>>, %arg11: memref<4x8x16xf32, #tpu.memory_space<vmem>>, %arg12: memref<4x1x16xf32, #tpu.memory_space<vmem>>, %arg13: memref<4x3x8x8xf32, #tpu.memory_space<vmem>>, %arg14: memref<4x1x8xf32, #tpu.memory_space<vmem>>, %arg15: memref<16x32xf32, #tpu.memory_space<vmem>>, %arg16: memref<1x32xf32, #tpu.memory_space<vmem>>, %arg17: memref<32x4xf32, #tpu.memory_space<vmem>>, %arg18: memref<1x4xf32, #tpu.memory_space<vmem>>, %arg19: memref<1x56x4xf32, #tpu.memory_space<vmem>>) attributes {dimension_semantics = [#tpu.dimension_semantics<parallel>], iteration_bounds = array<i64: 2>, scalar_prefetch = 0 : i64, scratch_operands = 0 : i64, tpu.core_type = #tpu.core_type<tc>, window_params = [{transform_indices = @transform_0, window_bounds = array<i64: 1, 104, 2>}, {pipeline_mode = #tpu.pipeline_mode<synchronous>, transform_indices = @transform_1, window_bounds = array<i64: 96, 96>}, {pipeline_mode = #tpu.pipeline_mode<synchronous>, transform_indices = @transform_2, window_bounds = array<i64: 80, 80>}, {pipeline_mode = #tpu.pipeline_mode<synchronous>, transform_indices = @transform_3, window_bounds = array<i64: 72, 72>}, {pipeline_mode = #tpu.pipeline_mode<synchronous>, transform_indices = @transform_4, window_bounds = array<i64: 56, 56>}, {pipeline_mode = #tpu.pipeline_mode<synchronous>, transform_indices = @transform_5, window_bounds = array<i64: 2, 8>}, {pipeline_mode = #tpu.pipeline_mode<synchronous>, transform_indices = @transform_6, window_bounds = array<i64: 1, 8>}, {pipeline_mode = #tpu.pipeline_mode<synchronous>, transform_indices = @transform_7, window_bounds = array<i64: 4, 8, 16>}, {pipeline_mode = #tpu.pipeline_mode<synchronous>, transform_indices = @transform_8, window_bounds = array<i64: 4, 8, 16>}, {pipeline_mode = #tpu.pipeline_mode<synchronous>, transform_indices = @transform_9, window_bounds = array<i64: 4, 1, 16>}, {pipeline_mode = #tpu.pipeline_mode<synchronous>, transform_indices = @transform_10, window_bounds = array<i64: 4, 8, 16>}, {pipeline_mode = #tpu.pipeline_mode<synchronous>, transform_indices = @transform_11, window_bounds = array<i64: 4, 1, 16>}, {pipeline_mode = #tpu.pipeline_mode<synchronous>, transform_indices = @transform_12, window_bounds = array<i64: 4, 3, 8, 8>}, {pipeline_mode = #tpu.pipeline_mode<synchronous>, transform_indices = @transform_13, window_bounds = array<i64: 4, 1, 8>}, {pipeline_mode = #tpu.pipeline_mode<synchronous>, transform_indices = @transform_14, window_bounds = array<i64: 16, 32>}, {pipeline_mode = #tpu.pipeline_mode<synchronous>, transform_indices = @transform_15, window_bounds = array<i64: 1, 32>}, {pipeline_mode = #tpu.pipeline_mode<synchronous>, transform_indices = @transform_16, window_bounds = array<i64: 32, 4>}, {pipeline_mode = #tpu.pipeline_mode<synchronous>, transform_indices = @transform_17, window_bounds = array<i64: 1, 4>}, {transform_indices = @transform_18, window_bounds = array<i64: 1, 56, 4>}]} {
    %c0 = arith.constant 0 : index
    %c0_0 = arith.constant 0 : index
    %c0_1 = arith.constant 0 : index
    %0 = vector.load %arg1[%c0, %c0_0, %c0_1] : memref<1x104x2xf32, #tpu.memory_space<vmem>>, vector<1x104x2xf32>
    %1 = vector.shape_cast %0 : vector<1x104x2xf32> to vector<104x2xf32>
    %c0_2 = arith.constant 0 : index
    %c0_3 = arith.constant 0 : index
    %2 = vector.load %arg6[%c0_2, %c0_3] : memref<2x8xf32, #tpu.memory_space<vmem>>, vector<2x8xf32>
    %cst = arith.constant dense<0.000000e+00> : vector<104x8xf32>
    %3 = tpu.matmul %1, %2, %cst {dimension_numbers = #tpu.dot_dimension_numbers<[1], [0], [0], [1], [0, 0, 1, 1], [], []>} : vector<104x2xf32>, vector<2x8xf32>, vector<104x8xf32> -> vector<104x8xf32>
    %c0_4 = arith.constant 0 : index
    %c0_5 = arith.constant 0 : index
    %4 = vector.load %arg7[%c0_4, %c0_5] : memref<1x8xf32, #tpu.memory_space<vmem>>, vector<1x8xf32>
    %5 = vector.broadcast %4 : vector<1x8xf32> to vector<104x8xf32>
    %6 = arith.addf %3, %5 : vector<104x8xf32>
    %7 = vector.extract_strided_slice %6 {offsets = [0, 0], sizes = [96, 8], strides = [1, 1]} : vector<104x8xf32> to vector<96x8xf32>
    %8 = vector.extract_strided_slice %6 {offsets = [8, 0], sizes = [96, 8], strides = [1, 1]} : vector<104x8xf32> to vector<96x8xf32>
    %c0_6 = arith.constant 0 : index
    %c0_7 = arith.constant 0 : index
    %c0_8 = arith.constant 0 : index
    %9 = vector.load %arg8[%c0_6, %c0_7, %c0_8] : memref<4x8x16xf32, #tpu.memory_space<vmem>>, vector<1x8x16xf32>
    %10 = vector.shape_cast %9 : vector<1x8x16xf32> to vector<8x16xf32>
    %cst_9 = arith.constant dense<0.000000e+00> : vector<96x16xf32>
    %11 = tpu.matmul %7, %10, %cst_9 {dimension_numbers = #tpu.dot_dimension_numbers<[1], [0], [0], [1], [0, 0, 1, 1], [], []>} : vector<96x8xf32>, vector<8x16xf32>, vector<96x16xf32> -> vector<96x16xf32>
    %c0_10 = arith.constant 0 : index
    %c0_11 = arith.constant 0 : index
    %c0_12 = arith.constant 0 : index
    %12 = vector.load %arg9[%c0_10, %c0_11, %c0_12] : memref<4x8x16xf32, #tpu.memory_space<vmem>>, vector<1x8x16xf32>
    %13 = vector.shape_cast %12 : vector<1x8x16xf32> to vector<8x16xf32>
    %cst_13 = arith.constant dense<0.000000e+00> : vector<96x16xf32>
    %14 = tpu.matmul %8, %13, %cst_13 {dimension_numbers = #tpu.dot_dimension_numbers<[1], [0], [0], [1], [0, 0, 1, 1], [], []>} : vector<96x8xf32>, vector<8x16xf32>, vector<96x16xf32> -> vector<96x16xf32>
    %15 = arith.addf %11, %14 : vector<96x16xf32>
    %c0_14 = arith.constant 0 : index
    %c0_15 = arith.constant 0 : index
    %c0_16 = arith.constant 0 : index
    %16 = vector.load %arg10[%c0_14, %c0_15, %c0_16] : memref<4x1x16xf32, #tpu.memory_space<vmem>>, vector<1x1x16xf32>
    %17 = vector.shape_cast %16 : vector<1x1x16xf32> to vector<1x16xf32>
    %18 = vector.broadcast %17 : vector<1x16xf32> to vector<96x16xf32>
    %19 = arith.addf %15, %18 : vector<96x16xf32>
    %20 = vector.extract_strided_slice %19 {offsets = [0, 0], sizes = [96, 8], strides = [1, 1]} : vector<96x16xf32> to vector<96x8xf32>
    %21 = math.tanh %20 : vector<96x8xf32>
    %22 = vector.extract_strided_slice %19 {offsets = [0, 8], sizes = [96, 8], strides = [1, 1]} : vector<96x16xf32> to vector<96x8xf32>
    %23 = arith.negf %22 : vector<96x8xf32>
    %24 = math.exp %23 : vector<96x8xf32>
    %cst_17 = arith.constant 1.000000e+00 : f32
    %25 = vector.broadcast %cst_17 : f32 to vector<96x8xf32>
    %26 = arith.addf %25, %24 : vector<96x8xf32>
    %27 = arith.divf %25, %26 : vector<96x8xf32>
    %28 = arith.mulf %21, %27 : vector<96x8xf32>
    %c0_18 = arith.constant 0 : index
    %c0_19 = arith.constant 0 : index
    %c0_20 = arith.constant 0 : index
    %29 = vector.load %arg11[%c0_18, %c0_19, %c0_20] : memref<4x8x16xf32, #tpu.memory_space<vmem>>, vector<1x8x16xf32>
    %30 = vector.shape_cast %29 : vector<1x8x16xf32> to vector<8x16xf32>
    %cst_21 = arith.constant dense<0.000000e+00> : vector<96x16xf32>
    %31 = tpu.matmul %28, %30, %cst_21 {dimension_numbers = #tpu.dot_dimension_numbers<[1], [0], [0], [1], [0, 0, 1, 1], [], []>} : vector<96x8xf32>, vector<8x16xf32>, vector<96x16xf32> -> vector<96x16xf32>
    %c0_22 = arith.constant 0 : index
    %c0_23 = arith.constant 0 : index
    %c0_24 = arith.constant 0 : index
    %32 = vector.load %arg12[%c0_22, %c0_23, %c0_24] : memref<4x1x16xf32, #tpu.memory_space<vmem>>, vector<1x1x16xf32>
    %33 = vector.shape_cast %32 : vector<1x1x16xf32> to vector<1x16xf32>
    %34 = vector.broadcast %33 : vector<1x16xf32> to vector<96x16xf32>
    %35 = arith.addf %31, %34 : vector<96x16xf32>
    %36 = vector.extract_strided_slice %35 {offsets = [40, 0], sizes = [56, 16], strides = [1, 1]} : vector<96x16xf32> to vector<56x16xf32>
    %c0_25 = arith.constant 0 : index
    %c0_26 = arith.constant 0 : index
    %37 = vector.load %arg2[%c0_25, %c0_26] : memref<96x96xf32, #tpu.memory_space<vmem>>, vector<96x96xf32>
    %cst_27 = arith.constant dense<0.000000e+00> : vector<96x8xf32>
    %38 = tpu.matmul %37, %28, %cst_27 {dimension_numbers = #tpu.dot_dimension_numbers<[1], [0], [0], [1], [0, 0, 1, 1], [], []>} : vector<96x96xf32>, vector<96x8xf32>, vector<96x8xf32> -> vector<96x8xf32>
    %cst_28 = arith.constant dense<0.000000e+00> : vector<96x8xf32>
    %39 = tpu.matmul %37, %38, %cst_28 {dimension_numbers = #tpu.dot_dimension_numbers<[1], [0], [0], [1], [0, 0, 1, 1], [], []>} : vector<96x96xf32>, vector<96x8xf32>, vector<96x8xf32> -> vector<96x8xf32>
    %c0_29 = arith.constant 0 : index
    %c0_30 = arith.constant 0 : index
    %c0_31 = arith.constant 0 : index
    %c0_32 = arith.constant 0 : index
    %40 = vector.load %arg13[%c0_29, %c0_30, %c0_31, %c0_32] : memref<4x3x8x8xf32, #tpu.memory_space<vmem>>, vector<1x1x8x8xf32>
    %41 = vector.shape_cast %40 : vector<1x1x8x8xf32> to vector<8x8xf32>
    %cst_33 = arith.constant dense<0.000000e+00> : vector<96x8xf32>
    %42 = tpu.matmul %28, %41, %cst_33 {dimension_numbers = #tpu.dot_dimension_numbers<[1], [0], [0], [1], [0, 0, 1, 1], [], []>} : vector<96x8xf32>, vector<8x8xf32>, vector<96x8xf32> -> vector<96x8xf32>
    %c0_34 = arith.constant 0 : index
    %c1 = arith.constant 1 : index
    %c0_35 = arith.constant 0 : index
    %c0_36 = arith.constant 0 : index
    %43 = vector.load %arg13[%c0_34, %c1, %c0_35, %c0_36] : memref<4x3x8x8xf32, #tpu.memory_space<vmem>>, vector<1x1x8x8xf32>
    %44 = vector.shape_cast %43 : vector<1x1x8x8xf32> to vector<8x8xf32>
    %cst_37 = arith.constant dense<0.000000e+00> : vector<96x8xf32>
    %45 = tpu.matmul %38, %44, %cst_37 {dimension_numbers = #tpu.dot_dimension_numbers<[1], [0], [0], [1], [0, 0, 1, 1], [], []>} : vector<96x8xf32>, vector<8x8xf32>, vector<96x8xf32> -> vector<96x8xf32>
    %46 = arith.addf %42, %45 : vector<96x8xf32>
    %c0_38 = arith.constant 0 : index
    %c2 = arith.constant 2 : index
    %c0_39 = arith.constant 0 : index
    %c0_40 = arith.constant 0 : index
    %47 = vector.load %arg13[%c0_38, %c2, %c0_39, %c0_40] : memref<4x3x8x8xf32, #tpu.memory_space<vmem>>, vector<1x1x8x8xf32>
    %48 = vector.shape_cast %47 : vector<1x1x8x8xf32> to vector<8x8xf32>
    %cst_41 = arith.constant dense<0.000000e+00> : vector<96x8xf32>
    %49 = tpu.matmul %39, %48, %cst_41 {dimension_numbers = #tpu.dot_dimension_numbers<[1], [0], [0], [1], [0, 0, 1, 1], [], []>} : vector<96x8xf32>, vector<8x8xf32>, vector<96x8xf32> -> vector<96x8xf32>
    %50 = arith.addf %46, %49 : vector<96x8xf32>
    %c0_42 = arith.constant 0 : index
    %c0_43 = arith.constant 0 : index
    %c0_44 = arith.constant 0 : index
    %51 = vector.load %arg14[%c0_42, %c0_43, %c0_44] : memref<4x1x8xf32, #tpu.memory_space<vmem>>, vector<1x1x8xf32>
    %52 = vector.shape_cast %51 : vector<1x1x8xf32> to vector<1x8xf32>
    %53 = vector.broadcast %52 : vector<1x8xf32> to vector<96x8xf32>
    %54 = arith.addf %50, %53 : vector<96x8xf32>
    %55 = arith.addf %54, %8 : vector<96x8xf32>
    %56 = vector.extract_strided_slice %55 {offsets = [0, 0], sizes = [80, 8], strides = [1, 1]} : vector<96x8xf32> to vector<80x8xf32>
    %57 = vector.extract_strided_slice %55 {offsets = [16, 0], sizes = [80, 8], strides = [1, 1]} : vector<96x8xf32> to vector<80x8xf32>
    %c1_45 = arith.constant 1 : index
    %c0_46 = arith.constant 0 : index
    %c0_47 = arith.constant 0 : index
    %58 = vector.load %arg8[%c1_45, %c0_46, %c0_47] : memref<4x8x16xf32, #tpu.memory_space<vmem>>, vector<1x8x16xf32>
    %59 = vector.shape_cast %58 : vector<1x8x16xf32> to vector<8x16xf32>
    %cst_48 = arith.constant dense<0.000000e+00> : vector<80x16xf32>
    %60 = tpu.matmul %56, %59, %cst_48 {dimension_numbers = #tpu.dot_dimension_numbers<[1], [0], [0], [1], [0, 0, 1, 1], [], []>} : vector<80x8xf32>, vector<8x16xf32>, vector<80x16xf32> -> vector<80x16xf32>
    %c1_49 = arith.constant 1 : index
    %c0_50 = arith.constant 0 : index
    %c0_51 = arith.constant 0 : index
    %61 = vector.load %arg9[%c1_49, %c0_50, %c0_51] : memref<4x8x16xf32, #tpu.memory_space<vmem>>, vector<1x8x16xf32>
    %62 = vector.shape_cast %61 : vector<1x8x16xf32> to vector<8x16xf32>
    %cst_52 = arith.constant dense<0.000000e+00> : vector<80x16xf32>
    %63 = tpu.matmul %57, %62, %cst_52 {dimension_numbers = #tpu.dot_dimension_numbers<[1], [0], [0], [1], [0, 0, 1, 1], [], []>} : vector<80x8xf32>, vector<8x16xf32>, vector<80x16xf32> -> vector<80x16xf32>
    %64 = arith.addf %60, %63 : vector<80x16xf32>
    %c1_53 = arith.constant 1 : index
    %c0_54 = arith.constant 0 : index
    %c0_55 = arith.constant 0 : index
    %65 = vector.load %arg10[%c1_53, %c0_54, %c0_55] : memref<4x1x16xf32, #tpu.memory_space<vmem>>, vector<1x1x16xf32>
    %66 = vector.shape_cast %65 : vector<1x1x16xf32> to vector<1x16xf32>
    %67 = vector.broadcast %66 : vector<1x16xf32> to vector<80x16xf32>
    %68 = arith.addf %64, %67 : vector<80x16xf32>
    %69 = vector.extract_strided_slice %68 {offsets = [0, 0], sizes = [80, 8], strides = [1, 1]} : vector<80x16xf32> to vector<80x8xf32>
    %70 = math.tanh %69 : vector<80x8xf32>
    %71 = vector.extract_strided_slice %68 {offsets = [0, 8], sizes = [80, 8], strides = [1, 1]} : vector<80x16xf32> to vector<80x8xf32>
    %72 = arith.negf %71 : vector<80x8xf32>
    %73 = math.exp %72 : vector<80x8xf32>
    %cst_56 = arith.constant 1.000000e+00 : f32
    %74 = vector.broadcast %cst_56 : f32 to vector<80x8xf32>
    %75 = arith.addf %74, %73 : vector<80x8xf32>
    %76 = arith.divf %74, %75 : vector<80x8xf32>
    %77 = arith.mulf %70, %76 : vector<80x8xf32>
    %c1_57 = arith.constant 1 : index
    %c0_58 = arith.constant 0 : index
    %c0_59 = arith.constant 0 : index
    %78 = vector.load %arg11[%c1_57, %c0_58, %c0_59] : memref<4x8x16xf32, #tpu.memory_space<vmem>>, vector<1x8x16xf32>
    %79 = vector.shape_cast %78 : vector<1x8x16xf32> to vector<8x16xf32>
    %cst_60 = arith.constant dense<0.000000e+00> : vector<80x16xf32>
    %80 = tpu.matmul %77, %79, %cst_60 {dimension_numbers = #tpu.dot_dimension_numbers<[1], [0], [0], [1], [0, 0, 1, 1], [], []>} : vector<80x8xf32>, vector<8x16xf32>, vector<80x16xf32> -> vector<80x16xf32>
    %c1_61 = arith.constant 1 : index
    %c0_62 = arith.constant 0 : index
    %c0_63 = arith.constant 0 : index
    %81 = vector.load %arg12[%c1_61, %c0_62, %c0_63] : memref<4x1x16xf32, #tpu.memory_space<vmem>>, vector<1x1x16xf32>
    %82 = vector.shape_cast %81 : vector<1x1x16xf32> to vector<1x16xf32>
    %83 = vector.broadcast %82 : vector<1x16xf32> to vector<80x16xf32>
    %84 = arith.addf %80, %83 : vector<80x16xf32>
    %85 = vector.extract_strided_slice %84 {offsets = [24, 0], sizes = [56, 16], strides = [1, 1]} : vector<80x16xf32> to vector<56x16xf32>
    %86 = arith.addf %36, %85 : vector<56x16xf32>
    %c0_64 = arith.constant 0 : index
    %c0_65 = arith.constant 0 : index
    %87 = vector.load %arg3[%c0_64, %c0_65] : memref<80x80xf32, #tpu.memory_space<vmem>>, vector<80x80xf32>
    %cst_66 = arith.constant dense<0.000000e+00> : vector<80x8xf32>
    %88 = tpu.matmul %87, %77, %cst_66 {dimension_numbers = #tpu.dot_dimension_numbers<[1], [0], [0], [1], [0, 0, 1, 1], [], []>} : vector<80x80xf32>, vector<80x8xf32>, vector<80x8xf32> -> vector<80x8xf32>
    %cst_67 = arith.constant dense<0.000000e+00> : vector<80x8xf32>
    %89 = tpu.matmul %87, %88, %cst_67 {dimension_numbers = #tpu.dot_dimension_numbers<[1], [0], [0], [1], [0, 0, 1, 1], [], []>} : vector<80x80xf32>, vector<80x8xf32>, vector<80x8xf32> -> vector<80x8xf32>
    %c1_68 = arith.constant 1 : index
    %c0_69 = arith.constant 0 : index
    %c0_70 = arith.constant 0 : index
    %c0_71 = arith.constant 0 : index
    %90 = vector.load %arg13[%c1_68, %c0_69, %c0_70, %c0_71] : memref<4x3x8x8xf32, #tpu.memory_space<vmem>>, vector<1x1x8x8xf32>
    %91 = vector.shape_cast %90 : vector<1x1x8x8xf32> to vector<8x8xf32>
    %cst_72 = arith.constant dense<0.000000e+00> : vector<80x8xf32>
    %92 = tpu.matmul %77, %91, %cst_72 {dimension_numbers = #tpu.dot_dimension_numbers<[1], [0], [0], [1], [0, 0, 1, 1], [], []>} : vector<80x8xf32>, vector<8x8xf32>, vector<80x8xf32> -> vector<80x8xf32>
    %c1_73 = arith.constant 1 : index
    %c1_74 = arith.constant 1 : index
    %c0_75 = arith.constant 0 : index
    %c0_76 = arith.constant 0 : index
    %93 = vector.load %arg13[%c1_73, %c1_74, %c0_75, %c0_76] : memref<4x3x8x8xf32, #tpu.memory_space<vmem>>, vector<1x1x8x8xf32>
    %94 = vector.shape_cast %93 : vector<1x1x8x8xf32> to vector<8x8xf32>
    %cst_77 = arith.constant dense<0.000000e+00> : vector<80x8xf32>
    %95 = tpu.matmul %88, %94, %cst_77 {dimension_numbers = #tpu.dot_dimension_numbers<[1], [0], [0], [1], [0, 0, 1, 1], [], []>} : vector<80x8xf32>, vector<8x8xf32>, vector<80x8xf32> -> vector<80x8xf32>
    %96 = arith.addf %92, %95 : vector<80x8xf32>
    %c1_78 = arith.constant 1 : index
    %c2_79 = arith.constant 2 : index
    %c0_80 = arith.constant 0 : index
    %c0_81 = arith.constant 0 : index
    %97 = vector.load %arg13[%c1_78, %c2_79, %c0_80, %c0_81] : memref<4x3x8x8xf32, #tpu.memory_space<vmem>>, vector<1x1x8x8xf32>
    %98 = vector.shape_cast %97 : vector<1x1x8x8xf32> to vector<8x8xf32>
    %cst_82 = arith.constant dense<0.000000e+00> : vector<80x8xf32>
    %99 = tpu.matmul %89, %98, %cst_82 {dimension_numbers = #tpu.dot_dimension_numbers<[1], [0], [0], [1], [0, 0, 1, 1], [], []>} : vector<80x8xf32>, vector<8x8xf32>, vector<80x8xf32> -> vector<80x8xf32>
    %100 = arith.addf %96, %99 : vector<80x8xf32>
    %c1_83 = arith.constant 1 : index
    %c0_84 = arith.constant 0 : index
    %c0_85 = arith.constant 0 : index
    %101 = vector.load %arg14[%c1_83, %c0_84, %c0_85] : memref<4x1x8xf32, #tpu.memory_space<vmem>>, vector<1x1x8xf32>
    %102 = vector.shape_cast %101 : vector<1x1x8xf32> to vector<1x8xf32>
    %103 = vector.broadcast %102 : vector<1x8xf32> to vector<80x8xf32>
    %104 = arith.addf %100, %103 : vector<80x8xf32>
    %105 = arith.addf %104, %57 : vector<80x8xf32>
    %106 = vector.extract_strided_slice %105 {offsets = [0, 0], sizes = [72, 8], strides = [1, 1]} : vector<80x8xf32> to vector<72x8xf32>
    %107 = vector.extract_strided_slice %105 {offsets = [8, 0], sizes = [72, 8], strides = [1, 1]} : vector<80x8xf32> to vector<72x8xf32>
    %c2_86 = arith.constant 2 : index
    %c0_87 = arith.constant 0 : index
    %c0_88 = arith.constant 0 : index
    %108 = vector.load %arg8[%c2_86, %c0_87, %c0_88] : memref<4x8x16xf32, #tpu.memory_space<vmem>>, vector<1x8x16xf32>
    %109 = vector.shape_cast %108 : vector<1x8x16xf32> to vector<8x16xf32>
    %cst_89 = arith.constant dense<0.000000e+00> : vector<72x16xf32>
    %110 = tpu.matmul %106, %109, %cst_89 {dimension_numbers = #tpu.dot_dimension_numbers<[1], [0], [0], [1], [0, 0, 1, 1], [], []>} : vector<72x8xf32>, vector<8x16xf32>, vector<72x16xf32> -> vector<72x16xf32>
    %c2_90 = arith.constant 2 : index
    %c0_91 = arith.constant 0 : index
    %c0_92 = arith.constant 0 : index
    %111 = vector.load %arg9[%c2_90, %c0_91, %c0_92] : memref<4x8x16xf32, #tpu.memory_space<vmem>>, vector<1x8x16xf32>
    %112 = vector.shape_cast %111 : vector<1x8x16xf32> to vector<8x16xf32>
    %cst_93 = arith.constant dense<0.000000e+00> : vector<72x16xf32>
    %113 = tpu.matmul %107, %112, %cst_93 {dimension_numbers = #tpu.dot_dimension_numbers<[1], [0], [0], [1], [0, 0, 1, 1], [], []>} : vector<72x8xf32>, vector<8x16xf32>, vector<72x16xf32> -> vector<72x16xf32>
    %114 = arith.addf %110, %113 : vector<72x16xf32>
    %c2_94 = arith.constant 2 : index
    %c0_95 = arith.constant 0 : index
    %c0_96 = arith.constant 0 : index
    %115 = vector.load %arg10[%c2_94, %c0_95, %c0_96] : memref<4x1x16xf32, #tpu.memory_space<vmem>>, vector<1x1x16xf32>
    %116 = vector.shape_cast %115 : vector<1x1x16xf32> to vector<1x16xf32>
    %117 = vector.broadcast %116 : vector<1x16xf32> to vector<72x16xf32>
    %118 = arith.addf %114, %117 : vector<72x16xf32>
    %119 = vector.extract_strided_slice %118 {offsets = [0, 0], sizes = [72, 8], strides = [1, 1]} : vector<72x16xf32> to vector<72x8xf32>
    %120 = math.tanh %119 : vector<72x8xf32>
    %121 = vector.extract_strided_slice %118 {offsets = [0, 8], sizes = [72, 8], strides = [1, 1]} : vector<72x16xf32> to vector<72x8xf32>
    %122 = arith.negf %121 : vector<72x8xf32>
    %123 = math.exp %122 : vector<72x8xf32>
    %cst_97 = arith.constant 1.000000e+00 : f32
    %124 = vector.broadcast %cst_97 : f32 to vector<72x8xf32>
    %125 = arith.addf %124, %123 : vector<72x8xf32>
    %126 = arith.divf %124, %125 : vector<72x8xf32>
    %127 = arith.mulf %120, %126 : vector<72x8xf32>
    %c2_98 = arith.constant 2 : index
    %c0_99 = arith.constant 0 : index
    %c0_100 = arith.constant 0 : index
    %128 = vector.load %arg11[%c2_98, %c0_99, %c0_100] : memref<4x8x16xf32, #tpu.memory_space<vmem>>, vector<1x8x16xf32>
    %129 = vector.shape_cast %128 : vector<1x8x16xf32> to vector<8x16xf32>
    %cst_101 = arith.constant dense<0.000000e+00> : vector<72x16xf32>
    %130 = tpu.matmul %127, %129, %cst_101 {dimension_numbers = #tpu.dot_dimension_numbers<[1], [0], [0], [1], [0, 0, 1, 1], [], []>} : vector<72x8xf32>, vector<8x16xf32>, vector<72x16xf32> -> vector<72x16xf32>
    %c2_102 = arith.constant 2 : index
    %c0_103 = arith.constant 0 : index
    %c0_104 = arith.constant 0 : index
    %131 = vector.load %arg12[%c2_102, %c0_103, %c0_104] : memref<4x1x16xf32, #tpu.memory_space<vmem>>, vector<1x1x16xf32>
    %132 = vector.shape_cast %131 : vector<1x1x16xf32> to vector<1x16xf32>
    %133 = vector.broadcast %132 : vector<1x16xf32> to vector<72x16xf32>
    %134 = arith.addf %130, %133 : vector<72x16xf32>
    %135 = vector.extract_strided_slice %134 {offsets = [16, 0], sizes = [56, 16], strides = [1, 1]} : vector<72x16xf32> to vector<56x16xf32>
    %136 = arith.addf %86, %135 : vector<56x16xf32>
    %c0_105 = arith.constant 0 : index
    %c0_106 = arith.constant 0 : index
    %137 = vector.load %arg4[%c0_105, %c0_106] : memref<72x72xf32, #tpu.memory_space<vmem>>, vector<72x72xf32>
    %cst_107 = arith.constant dense<0.000000e+00> : vector<72x8xf32>
    %138 = tpu.matmul %137, %127, %cst_107 {dimension_numbers = #tpu.dot_dimension_numbers<[1], [0], [0], [1], [0, 0, 1, 1], [], []>} : vector<72x72xf32>, vector<72x8xf32>, vector<72x8xf32> -> vector<72x8xf32>
    %cst_108 = arith.constant dense<0.000000e+00> : vector<72x8xf32>
    %139 = tpu.matmul %137, %138, %cst_108 {dimension_numbers = #tpu.dot_dimension_numbers<[1], [0], [0], [1], [0, 0, 1, 1], [], []>} : vector<72x72xf32>, vector<72x8xf32>, vector<72x8xf32> -> vector<72x8xf32>
    %c2_109 = arith.constant 2 : index
    %c0_110 = arith.constant 0 : index
    %c0_111 = arith.constant 0 : index
    %c0_112 = arith.constant 0 : index
    %140 = vector.load %arg13[%c2_109, %c0_110, %c0_111, %c0_112] : memref<4x3x8x8xf32, #tpu.memory_space<vmem>>, vector<1x1x8x8xf32>
    %141 = vector.shape_cast %140 : vector<1x1x8x8xf32> to vector<8x8xf32>
    %cst_113 = arith.constant dense<0.000000e+00> : vector<72x8xf32>
    %142 = tpu.matmul %127, %141, %cst_113 {dimension_numbers = #tpu.dot_dimension_numbers<[1], [0], [0], [1], [0, 0, 1, 1], [], []>} : vector<72x8xf32>, vector<8x8xf32>, vector<72x8xf32> -> vector<72x8xf32>
    %c2_114 = arith.constant 2 : index
    %c1_115 = arith.constant 1 : index
    %c0_116 = arith.constant 0 : index
    %c0_117 = arith.constant 0 : index
    %143 = vector.load %arg13[%c2_114, %c1_115, %c0_116, %c0_117] : memref<4x3x8x8xf32, #tpu.memory_space<vmem>>, vector<1x1x8x8xf32>
    %144 = vector.shape_cast %143 : vector<1x1x8x8xf32> to vector<8x8xf32>
    %cst_118 = arith.constant dense<0.000000e+00> : vector<72x8xf32>
    %145 = tpu.matmul %138, %144, %cst_118 {dimension_numbers = #tpu.dot_dimension_numbers<[1], [0], [0], [1], [0, 0, 1, 1], [], []>} : vector<72x8xf32>, vector<8x8xf32>, vector<72x8xf32> -> vector<72x8xf32>
    %146 = arith.addf %142, %145 : vector<72x8xf32>
    %c2_119 = arith.constant 2 : index
    %c2_120 = arith.constant 2 : index
    %c0_121 = arith.constant 0 : index
    %c0_122 = arith.constant 0 : index
    %147 = vector.load %arg13[%c2_119, %c2_120, %c0_121, %c0_122] : memref<4x3x8x8xf32, #tpu.memory_space<vmem>>, vector<1x1x8x8xf32>
    %148 = vector.shape_cast %147 : vector<1x1x8x8xf32> to vector<8x8xf32>
    %cst_123 = arith.constant dense<0.000000e+00> : vector<72x8xf32>
    %149 = tpu.matmul %139, %148, %cst_123 {dimension_numbers = #tpu.dot_dimension_numbers<[1], [0], [0], [1], [0, 0, 1, 1], [], []>} : vector<72x8xf32>, vector<8x8xf32>, vector<72x8xf32> -> vector<72x8xf32>
    %150 = arith.addf %146, %149 : vector<72x8xf32>
    %c2_124 = arith.constant 2 : index
    %c0_125 = arith.constant 0 : index
    %c0_126 = arith.constant 0 : index
    %151 = vector.load %arg14[%c2_124, %c0_125, %c0_126] : memref<4x1x8xf32, #tpu.memory_space<vmem>>, vector<1x1x8xf32>
    %152 = vector.shape_cast %151 : vector<1x1x8xf32> to vector<1x8xf32>
    %153 = vector.broadcast %152 : vector<1x8xf32> to vector<72x8xf32>
    %154 = arith.addf %150, %153 : vector<72x8xf32>
    %155 = arith.addf %154, %107 : vector<72x8xf32>
    %156 = vector.extract_strided_slice %155 {offsets = [0, 0], sizes = [56, 8], strides = [1, 1]} : vector<72x8xf32> to vector<56x8xf32>
    %157 = vector.extract_strided_slice %155 {offsets = [16, 0], sizes = [56, 8], strides = [1, 1]} : vector<72x8xf32> to vector<56x8xf32>
    %c3 = arith.constant 3 : index
    %c0_127 = arith.constant 0 : index
    %c0_128 = arith.constant 0 : index
    %158 = vector.load %arg8[%c3, %c0_127, %c0_128] : memref<4x8x16xf32, #tpu.memory_space<vmem>>, vector<1x8x16xf32>
    %159 = vector.shape_cast %158 : vector<1x8x16xf32> to vector<8x16xf32>
    %cst_129 = arith.constant dense<0.000000e+00> : vector<56x16xf32>
    %160 = tpu.matmul %156, %159, %cst_129 {dimension_numbers = #tpu.dot_dimension_numbers<[1], [0], [0], [1], [0, 0, 1, 1], [], []>} : vector<56x8xf32>, vector<8x16xf32>, vector<56x16xf32> -> vector<56x16xf32>
    %c3_130 = arith.constant 3 : index
    %c0_131 = arith.constant 0 : index
    %c0_132 = arith.constant 0 : index
    %161 = vector.load %arg9[%c3_130, %c0_131, %c0_132] : memref<4x8x16xf32, #tpu.memory_space<vmem>>, vector<1x8x16xf32>
    %162 = vector.shape_cast %161 : vector<1x8x16xf32> to vector<8x16xf32>
    %cst_133 = arith.constant dense<0.000000e+00> : vector<56x16xf32>
    %163 = tpu.matmul %157, %162, %cst_133 {dimension_numbers = #tpu.dot_dimension_numbers<[1], [0], [0], [1], [0, 0, 1, 1], [], []>} : vector<56x8xf32>, vector<8x16xf32>, vector<56x16xf32> -> vector<56x16xf32>
    %164 = arith.addf %160, %163 : vector<56x16xf32>
    %c3_134 = arith.constant 3 : index
    %c0_135 = arith.constant 0 : index
    %c0_136 = arith.constant 0 : index
    %165 = vector.load %arg10[%c3_134, %c0_135, %c0_136] : memref<4x1x16xf32, #tpu.memory_space<vmem>>, vector<1x1x16xf32>
    %166 = vector.shape_cast %165 : vector<1x1x16xf32> to vector<1x16xf32>
    %167 = vector.broadcast %166 : vector<1x16xf32> to vector<56x16xf32>
    %168 = arith.addf %164, %167 : vector<56x16xf32>
    %169 = vector.extract_strided_slice %168 {offsets = [0, 0], sizes = [56, 8], strides = [1, 1]} : vector<56x16xf32> to vector<56x8xf32>
    %170 = math.tanh %169 : vector<56x8xf32>
    %171 = vector.extract_strided_slice %168 {offsets = [0, 8], sizes = [56, 8], strides = [1, 1]} : vector<56x16xf32> to vector<56x8xf32>
    %172 = arith.negf %171 : vector<56x8xf32>
    %173 = math.exp %172 : vector<56x8xf32>
    %cst_137 = arith.constant 1.000000e+00 : f32
    %174 = vector.broadcast %cst_137 : f32 to vector<56x8xf32>
    %175 = arith.addf %174, %173 : vector<56x8xf32>
    %176 = arith.divf %174, %175 : vector<56x8xf32>
    %177 = arith.mulf %170, %176 : vector<56x8xf32>
    %c3_138 = arith.constant 3 : index
    %c0_139 = arith.constant 0 : index
    %c0_140 = arith.constant 0 : index
    %178 = vector.load %arg11[%c3_138, %c0_139, %c0_140] : memref<4x8x16xf32, #tpu.memory_space<vmem>>, vector<1x8x16xf32>
    %179 = vector.shape_cast %178 : vector<1x8x16xf32> to vector<8x16xf32>
    %cst_141 = arith.constant dense<0.000000e+00> : vector<56x16xf32>
    %180 = tpu.matmul %177, %179, %cst_141 {dimension_numbers = #tpu.dot_dimension_numbers<[1], [0], [0], [1], [0, 0, 1, 1], [], []>} : vector<56x8xf32>, vector<8x16xf32>, vector<56x16xf32> -> vector<56x16xf32>
    %c3_142 = arith.constant 3 : index
    %c0_143 = arith.constant 0 : index
    %c0_144 = arith.constant 0 : index
    %181 = vector.load %arg12[%c3_142, %c0_143, %c0_144] : memref<4x1x16xf32, #tpu.memory_space<vmem>>, vector<1x1x16xf32>
    %182 = vector.shape_cast %181 : vector<1x1x16xf32> to vector<1x16xf32>
    %183 = vector.broadcast %182 : vector<1x16xf32> to vector<56x16xf32>
    %184 = arith.addf %180, %183 : vector<56x16xf32>
    %185 = arith.addf %136, %184 : vector<56x16xf32>
    %cst_145 = arith.constant 0.000000e+00 : f32
    %186 = vector.broadcast %cst_145 : f32 to vector<56x16xf32>
    %187 = arith.maximumf %185, %186 : vector<56x16xf32>
    %c0_146 = arith.constant 0 : index
    %c0_147 = arith.constant 0 : index
    %188 = vector.load %arg15[%c0_146, %c0_147] : memref<16x32xf32, #tpu.memory_space<vmem>>, vector<16x32xf32>
    %cst_148 = arith.constant dense<0.000000e+00> : vector<56x32xf32>
    %189 = tpu.matmul %187, %188, %cst_148 {dimension_numbers = #tpu.dot_dimension_numbers<[1], [0], [0], [1], [0, 0, 1, 1], [], []>} : vector<56x16xf32>, vector<16x32xf32>, vector<56x32xf32> -> vector<56x32xf32>
    %c0_149 = arith.constant 0 : index
    %c0_150 = arith.constant 0 : index
    %190 = vector.load %arg16[%c0_149, %c0_150] : memref<1x32xf32, #tpu.memory_space<vmem>>, vector<1x32xf32>
    %191 = vector.broadcast %190 : vector<1x32xf32> to vector<56x32xf32>
    %192 = arith.addf %189, %191 : vector<56x32xf32>
    %cst_151 = arith.constant 0.000000e+00 : f32
    %193 = vector.broadcast %cst_151 : f32 to vector<56x32xf32>
    %194 = arith.maximumf %192, %193 : vector<56x32xf32>
    %c0_152 = arith.constant 0 : index
    %c0_153 = arith.constant 0 : index
    %195 = vector.load %arg17[%c0_152, %c0_153] : memref<32x4xf32, #tpu.memory_space<vmem>>, vector<32x4xf32>
    %cst_154 = arith.constant dense<0.000000e+00> : vector<56x4xf32>
    %196 = tpu.matmul %194, %195, %cst_154 {dimension_numbers = #tpu.dot_dimension_numbers<[1], [0], [0], [1], [0, 0, 1, 1], [], []>} : vector<56x32xf32>, vector<32x4xf32>, vector<56x4xf32> -> vector<56x4xf32>
    %c0_155 = arith.constant 0 : index
    %c0_156 = arith.constant 0 : index
    %197 = vector.load %arg18[%c0_155, %c0_156] : memref<1x4xf32, #tpu.memory_space<vmem>>, vector<1x4xf32>
    %198 = vector.broadcast %197 : vector<1x4xf32> to vector<56x4xf32>
    %199 = arith.addf %196, %198 : vector<56x4xf32>
    %c0_157 = arith.constant 0 : index
    %c0_158 = arith.constant 0 : index
    %c0_159 = arith.constant 0 : index
    %200 = vector.load %arg19[%c0_157, %c0_158, %c0_159] : memref<1x56x4xf32, #tpu.memory_space<vmem>>, vector<1x56x4xf32>
    %201 = vector.shape_cast %200 : vector<1x56x4xf32> to vector<56x4xf32>
    %202 = vector.shape_cast %199 : vector<56x4xf32> to vector<1x56x4xf32>
    tpu.vector_store %arg19[%c0_157, %c0_158, %c0_159], %202 {strides = array<i32>} : memref<1x56x4xf32, #tpu.memory_space<vmem>>, vector<1x56x4xf32>,
    return
  }
  func.func @transform_0(%arg0: i32) -> (i32, i32, i32) {
    %c0_i32 = arith.constant 0 : i32
    %c0_i32_0 = arith.constant 0 : i32
    %c0_i32_1 = arith.constant 0 : i32
    return %arg0, %c0_i32, %c0_i32_0 : i32, i32, i32
  }
  func.func @transform_1(%arg0: i32) -> (i32, i32) {
    %c0_i32 = arith.constant 0 : i32
    %c0_i32_0 = arith.constant 0 : i32
    %c0_i32_1 = arith.constant 0 : i32
    return %c0_i32, %c0_i32_0 : i32, i32
  }
  func.func @transform_2(%arg0: i32) -> (i32, i32) {
    %c0_i32 = arith.constant 0 : i32
    %c0_i32_0 = arith.constant 0 : i32
    %c0_i32_1 = arith.constant 0 : i32
    return %c0_i32, %c0_i32_0 : i32, i32
  }
  func.func @transform_3(%arg0: i32) -> (i32, i32) {
    %c0_i32 = arith.constant 0 : i32
    %c0_i32_0 = arith.constant 0 : i32
    %c0_i32_1 = arith.constant 0 : i32
    return %c0_i32, %c0_i32_0 : i32, i32
  }
  func.func @transform_4(%arg0: i32) -> (i32, i32) {
    %c0_i32 = arith.constant 0 : i32
    %c0_i32_0 = arith.constant 0 : i32
    %c0_i32_1 = arith.constant 0 : i32
    return %c0_i32, %c0_i32_0 : i32, i32
  }
  func.func @transform_5(%arg0: i32) -> (i32, i32) {
    %c0_i32 = arith.constant 0 : i32
    %c0_i32_0 = arith.constant 0 : i32
    %c0_i32_1 = arith.constant 0 : i32
    return %c0_i32, %c0_i32_0 : i32, i32
  }
  func.func @transform_6(%arg0: i32) -> (i32, i32) {
    %c0_i32 = arith.constant 0 : i32
    %c0_i32_0 = arith.constant 0 : i32
    %c0_i32_1 = arith.constant 0 : i32
    return %c0_i32, %c0_i32_0 : i32, i32
  }
  func.func @transform_7(%arg0: i32) -> (i32, i32, i32) {
    %c0_i32 = arith.constant 0 : i32
    %c0_i32_0 = arith.constant 0 : i32
    %c0_i32_1 = arith.constant 0 : i32
    %c0_i32_2 = arith.constant 0 : i32
    return %c0_i32, %c0_i32_0, %c0_i32_1 : i32, i32, i32
  }
  func.func @transform_8(%arg0: i32) -> (i32, i32, i32) {
    %c0_i32 = arith.constant 0 : i32
    %c0_i32_0 = arith.constant 0 : i32
    %c0_i32_1 = arith.constant 0 : i32
    %c0_i32_2 = arith.constant 0 : i32
    return %c0_i32, %c0_i32_0, %c0_i32_1 : i32, i32, i32
  }
  func.func @transform_9(%arg0: i32) -> (i32, i32, i32) {
    %c0_i32 = arith.constant 0 : i32
    %c0_i32_0 = arith.constant 0 : i32
    %c0_i32_1 = arith.constant 0 : i32
    %c0_i32_2 = arith.constant 0 : i32
    return %c0_i32, %c0_i32_0, %c0_i32_1 : i32, i32, i32
  }
  func.func @transform_10(%arg0: i32) -> (i32, i32, i32) {
    %c0_i32 = arith.constant 0 : i32
    %c0_i32_0 = arith.constant 0 : i32
    %c0_i32_1 = arith.constant 0 : i32
    %c0_i32_2 = arith.constant 0 : i32
    return %c0_i32, %c0_i32_0, %c0_i32_1 : i32, i32, i32
  }
  func.func @transform_11(%arg0: i32) -> (i32, i32, i32) {
    %c0_i32 = arith.constant 0 : i32
    %c0_i32_0 = arith.constant 0 : i32
    %c0_i32_1 = arith.constant 0 : i32
    %c0_i32_2 = arith.constant 0 : i32
    return %c0_i32, %c0_i32_0, %c0_i32_1 : i32, i32, i32
  }
  func.func @transform_12(%arg0: i32) -> (i32, i32, i32, i32) {
    %c0_i32 = arith.constant 0 : i32
    %c0_i32_0 = arith.constant 0 : i32
    %c0_i32_1 = arith.constant 0 : i32
    %c0_i32_2 = arith.constant 0 : i32
    %c0_i32_3 = arith.constant 0 : i32
    return %c0_i32, %c0_i32_0, %c0_i32_1, %c0_i32_2 : i32, i32, i32, i32
  }
  func.func @transform_13(%arg0: i32) -> (i32, i32, i32) {
    %c0_i32 = arith.constant 0 : i32
    %c0_i32_0 = arith.constant 0 : i32
    %c0_i32_1 = arith.constant 0 : i32
    %c0_i32_2 = arith.constant 0 : i32
    return %c0_i32, %c0_i32_0, %c0_i32_1 : i32, i32, i32
  }
  func.func @transform_14(%arg0: i32) -> (i32, i32) {
    %c0_i32 = arith.constant 0 : i32
    %c0_i32_0 = arith.constant 0 : i32
    %c0_i32_1 = arith.constant 0 : i32
    return %c0_i32, %c0_i32_0 : i32, i32
  }
  func.func @transform_15(%arg0: i32) -> (i32, i32) {
    %c0_i32 = arith.constant 0 : i32
    %c0_i32_0 = arith.constant 0 : i32
    %c0_i32_1 = arith.constant 0 : i32
    return %c0_i32, %c0_i32_0 : i32, i32
  }
  func.func @transform_16(%arg0: i32) -> (i32, i32) {
    %c0_i32 = arith.constant 0 : i32
    %c0_i32_0 = arith.constant 0 : i32
    %c0_i32_1 = arith.constant 0 : i32
    return %c0_i32, %c0_i32_0 : i32, i32
  }
  func.func @transform_17(%arg0: i32) -> (i32, i32) {
    %c0_i32 = arith.constant 0 : i32
    %c0_i32_0 = arith.constant 0 : i32
    %c0_i32_1 = arith.constant 0 : i32
    return %c0_i32, %c0_i32_0 : i32, i32
  }
  func.func @transform_18(%arg0: i32) -> (i32, i32, i32) {
    %c0_i32 = arith.constant 0 : i32
    %c0_i32_0 = arith.constant 0 : i32
    %c0_i32_1 = arith.constant 0 : i32
    return %arg0, %c0_i32, %c0_i32_0 : i32, i32, i32
  }
}

</mosaic_0001>

<llo_original>
// kernel: forward.1
$region0: #{forward.1}
  #allocation0 [shape = 'u32[]', space=smem, size = 0x4, offset = 0x4, fixed_abs, tag = 'smem constant byte address 0x4 - core index']
  #allocation1 [shape = 'u32[144,128]{1,0:T(1,128)}', space=vmem, size = 0x12000, scoped, tag = 'internal scratch']
  %s0 = inlined_call_operand.vmem [shape: f32[2,104,2], index: 0, kind: input, shape index: {}]
  %s1 = inlined_call_operand.vmem [shape: f32[96,96], index: 1, kind: input, shape index: {}]
  %s2 = inlined_call_operand.vmem [shape: f32[80,80], index: 2, kind: input, shape index: {}]
  %s3 = inlined_call_operand.vmem [shape: f32[72,72], index: 3, kind: input, shape index: {}]
  %s4 = inlined_call_operand.vmem [shape: f32[56,56], index: 4, kind: input, shape index: {}]
  %s5 = inlined_call_operand.vmem [shape: f32[2,8], index: 5, kind: input, shape index: {}]
  %s6 = inlined_call_operand.vmem [shape: f32[1,8], index: 6, kind: input, shape index: {}]
  %s7 = inlined_call_operand.vmem [shape: f32[4,8,16], index: 7, kind: input, shape index: {}]
  %s8 = inlined_call_operand.vmem [shape: f32[4,8,16], index: 8, kind: input, shape index: {}]
  %s9 = inlined_call_operand.vmem [shape: f32[4,1,16], index: 9, kind: input, shape index: {}]
  %s10 = inlined_call_operand.vmem [shape: f32[4,8,16], index: 10, kind: input, shape index: {}]
  %s11 = inlined_call_operand.vmem [shape: f32[4,1,16], index: 11, kind: input, shape index: {}]
  %s12 = inlined_call_operand.vmem [shape: f32[4,3,8,8], index: 12, kind: input, shape index: {}]
  %s13 = inlined_call_operand.vmem [shape: f32[4,1,8], index: 13, kind: input, shape index: {}]
  %s14 = inlined_call_operand.vmem [shape: f32[16,32], index: 14, kind: input, shape index: {}]
  %s15 = inlined_call_operand.vmem [shape: f32[1,32], index: 15, kind: input, shape index: {}]
  %s16 = inlined_call_operand.vmem [shape: f32[32,4], index: 16, kind: input, shape index: {}]
  %s17 = inlined_call_operand.vmem [shape: f32[1,4], index: 17, kind: input, shape index: {}]
  %s18 = inlined_call_operand.vmem [shape: f32[2,56,4], index: 18, kind: output, shape index: {}]
  %s19 = sld [smem:[#allocation0]]
  $region105: #{forward.1} parent=0
    _
  %s21 = ssub.s32 1, %s19
  %s22 = scalar_select 0, %s21, %s19
  loop: start=0, step=1, limit=4
  $region2: #{forward.1} parent=0 // loop_pre_header
    _
  $region3: #{forward.1} parent=0 // loop_header
    %s24 = sphi 0, %s28
    %p25 = scmp.ge.s32.totalorder %s24, 4
    %s34 = sphi 0, %s36
    %s37 = sphi 0, %s34
    %s38 = sphi 0, %s37
    %s54 = sphi 0, %s38
    %s58 = sphi 0, %s58
    %s60 = sphi 0, %s58
    %s61 = sphi 0, %s60
    %s75 = sphi 0, %s61
    %s79 = sphi 0, %s79
    %s81 = sphi 0, %s79
    %s82 = sphi 0, %s81
    %s96 = sphi 0, %s82
    %s100 = sphi 0, %s100
    %s102 = sphi 0, %s100
    %s103 = sphi 0, %s102
    %s117 = sphi 0, %s103
    %s121 = sphi 0, %s121
    %s123 = sphi 0, %s121
    %s124 = sphi 0, %s123
    %s138 = sphi 0, %s124
    %s142 = sphi 0, %s142
    %s144 = sphi 0, %s142
    %s145 = sphi 0, %s144
    %s159 = sphi 0, %s145
    %s163 = sphi 0, %s163
    %s165 = sphi 0, %s163
    %s166 = sphi 0, %s165
    %s180 = sphi 0, %s166
    %s184 = sphi 0, %s184
    %s186 = sphi 0, %s184
    %s187 = sphi 0, %s186
    %s201 = sphi 0, %s187
    %s205 = sphi 0, %s205
    %s207 = sphi 0, %s205
    %s208 = sphi 0, %s207
    %s222 = sphi 0, %s208
    %s226 = sphi 0, %s226
    %s228 = sphi 0, %s226
    %s229 = sphi 0, %s228
    %s243 = sphi 0, %s229
    %s247 = sphi 0, %s247
    %s249 = sphi 0, %s247
    %s250 = sphi 0, %s249
    %s264 = sphi 0, %s250
    %s268 = sphi 0, %s268
    %s270 = sphi 0, %s268
    %s271 = sphi 0, %s270
    %s285 = sphi 0, %s271
    %s289 = sphi 0, %s289
    %s291 = sphi 0, %s289
    %s292 = sphi 0, %s291
    %s306 = sphi 0, %s292
    %s310 = sphi 0, %s310
    %s312 = sphi 0, %s310
    %s313 = sphi 0, %s312
    %s327 = sphi 0, %s313
    %s331 = sphi 0, %s331
    %s333 = sphi 0, %s331
    %s334 = sphi 0, %s333
    %s348 = sphi 0, %s334
    %s352 = sphi 0, %s352
    %s354 = sphi 0, %s352
    %s355 = sphi 0, %s354
    %s369 = sphi 0, %s355
    %s373 = sphi 0, %s373
    %s375 = sphi 0, %s373
    %s376 = sphi 0, %s375
    %s390 = sphi 0, %s376
    %s394 = sphi 0, %s394
    %s396 = sphi 0, %s394
    %s397 = sphi 0, %s396
    %s411 = sphi 0, %s397
    %s417 = sphi 0, %s419
    %s420 = sphi 0, %s417
    %s421 = sphi 0, %s420
    %s437 = sphi 0, %s421
  $region4: #{forward.1} parent=0 // loop_header_branch
    %27 = sbr.rel (%p25) target = $region8
  $region5: #{forward.1} parent=0 // loop_body
    %s29 = ssub.s32 %s24, 1
    %s30 = ssub.s32 %s24, 2
    %s31 = sadd.s32 %s24, 1
    %s32 = ssub.s32 %s24, %s31
    %p33 = scmp.eq.s32.totalorder %s32, 0
    %s35 = sadd.s32 %s34, 1
    %s36 = scalar_select %p33, %s34, %s35
    %p39 = pneg %p33
    %p40 = scmp.eq.s32.totalorder %s24, 1
    %p41 = por %p39, %p40
    %p42 = scmp.ne.s32.totalorder %s34, %s37
    %p43 = scmp.eq.s32.totalorder %s24, 0
    %p44 = por %p42, %p43
    %p45 = scmp.ne.s32.totalorder %s34, %s37
    %p46 = scmp.eq.s32.totalorder %s29, 1
    %p47 = por %p45, %p46
    %p48 = scmp.ne.s32.totalorder %s37, %s38
    %p49 = scmp.eq.s32.totalorder %s29, 0
    %p50 = por %p48, %p49
    %p51 = scmp.ne.s32.totalorder %s37, %s38
    %p52 = scmp.eq.s32.totalorder %s30, 1
    %p53 = por %p51, %p52
    %p55 = scmp.ne.s32.totalorder %s38, %s54
    %p56 = scmp.eq.s32.totalorder %s30, 0
    %p57 = por %p55, %p56
    %s59 = sadd.s32 %s58, 1
    %p62 = scmp.eq.s32.totalorder %s24, 1
    %p63 = scmp.ne.s32.totalorder %s58, %s60
    %p64 = scmp.eq.s32.totalorder %s24, 0
    %p65 = por %p63, %p64
    %p66 = scmp.ne.s32.totalorder %s58, %s60
    %p67 = scmp.eq.s32.totalorder %s29, 1
    %p68 = por %p66, %p67
    %p69 = scmp.ne.s32.totalorder %s60, %s61
    %p70 = scmp.eq.s32.totalorder %s29, 0
    %p71 = por %p69, %p70
    %p72 = scmp.ne.s32.totalorder %s60, %s61
    %p73 = scmp.eq.s32.totalorder %s30, 1
    %p74 = por %p72, %p73
    %p76 = scmp.ne.s32.totalorder %s61, %s75
    %p77 = scmp.eq.s32.totalorder %s30, 0
    %p78 = por %p76, %p77
    %s80 = sadd.s32 %s79, 1
    %p83 = scmp.eq.s32.totalorder %s24, 1
    %p84 = scmp.ne.s32.totalorder %s79, %s81
    %p85 = scmp.eq.s32.totalorder %s24, 0
    %p86 = por %p84, %p85
    %p87 = scmp.ne.s32.totalorder %s79, %s81
    %p88 = scmp.eq.s32.totalorder %s29, 1
    %p89 = por %p87, %p88
    %p90 = scmp.ne.s32.totalorder %s81, %s82
    %p91 = scmp.eq.s32.totalorder %s29, 0
    %p92 = por %p90, %p91
    %p93 = scmp.ne.s32.totalorder %s81, %s82
    %p94 = scmp.eq.s32.totalorder %s30, 1
    %p95 = por %p93, %p94
    %p97 = scmp.ne.s32.totalorder %s82, %s96
    %p98 = scmp.eq.s32.totalorder %s30, 0
    %p99 = por %p97, %p98
    %s101 = sadd.s32 %s100, 1
    %p104 = scmp.eq.s32.totalorder %s24, 1
    %p105 = scmp.ne.s32.totalorder %s100, %s102
    %p106 = scmp.eq.s32.totalorder %s24, 0
    %p107 = por %p105, %p106
    %p108 = scmp.ne.s32.totalorder %s100, %s102
    %p109 = scmp.eq.s32.totalorder %s29, 1
    %p110 = por %p108, %p109
    %p111 = scmp.ne.s32.totalorder %s102, %s103
    %p112 = scmp.eq.s32.totalorder %s29, 0
    %p113 = por %p111, %p112
    %p114 = scmp.ne.s32.totalorder %s102, %s103
    %p115 = scmp.eq.s32.totalorder %s30, 1
    %p116 = por %p114, %p115
    %p118 = scmp.ne.s32.totalorder %s103, %s117
    %p119 = scmp.eq.s32.totalorder %s30, 0
    %p120 = por %p118, %p119
    %s122 = sadd.s32 %s121, 1
    %p125 = scmp.eq.s32.totalorder %s24, 1
    %p126 = scmp.ne.s32.totalorder %s121, %s123
    %p127 = scmp.eq.s32.totalorder %s24, 0
    %p128 = por %p126, %p127
    %p129 = scmp.ne.s32.totalorder %s121, %s123
    %p130 = scmp.eq.s32.totalorder %s29, 1
    %p131 = por %p129, %p130
    %p132 = scmp.ne.s32.totalorder %s123, %s124
    %p133 = scmp.eq.s32.totalorder %s29, 0
    %p134 = por %p132, %p133
    %p135 = scmp.ne.s32.totalorder %s123, %s124
    %p136 = scmp.eq.s32.totalorder %s30, 1
    %p137 = por %p135, %p136
    %p139 = scmp.ne.s32.totalorder %s124, %s138
    %p140 = scmp.eq.s32.totalorder %s30, 0
    %p141 = por %p139, %p140
    %s143 = sadd.s32 %s142, 1
    %p146 = scmp.eq.s32.totalorder %s24, 1
    %p147 = scmp.ne.s32.totalorder %s142, %s144
    %p148 = scmp.eq.s32.totalorder %s24, 0
    %p149 = por %p147, %p148
    %p150 = scmp.ne.s32.totalorder %s142, %s144
    %p151 = scmp.eq.s32.totalorder %s29, 1
    %p152 = por %p150, %p151
    %p153 = scmp.ne.s32.totalorder %s144, %s145
    %p154 = scmp.eq.s32.totalorder %s29, 0
    %p155 = por %p153, %p154
    %p156 = scmp.ne.s32.totalorder %s144, %s145
    %p157 = scmp.eq.s32.totalorder %s30, 1
    %p158 = por %p156, %p157
    %p160 = scmp.ne.s32.totalorder %s145, %s159
    %p161 = scmp.eq.s32.totalorder %s30, 0
    %p162 = por %p160, %p161
    %s164 = sadd.s32 %s163, 1
    %p167 = scmp.eq.s32.totalorder %s24, 1
    %p168 = scmp.ne.s32.totalorder %s163, %s165
    %p169 = scmp.eq.s32.totalorder %s24, 0
    %p170 = por %p168, %p169
    %p171 = scmp.ne.s32.totalorder %s163, %s165
    %p172 = scmp.eq.s32.totalorder %s29, 1
    %p173 = por %p171, %p172
    %p174 = scmp.ne.s32.totalorder %s165, %s166
    %p175 = scmp.eq.s32.totalorder %s29, 0
    %p176 = por %p174, %p175
    %p177 = scmp.ne.s32.totalorder %s165, %s166
    %p178 = scmp.eq.s32.totalorder %s30, 1
    %p179 = por %p177, %p178
    %p181 = scmp.ne.s32.totalorder %s166, %s180
    %p182 = scmp.eq.s32.totalorder %s30, 0
    %p183 = por %p181, %p182
    %s185 = sadd.s32 %s184, 1
    %p188 = scmp.eq.s32.totalorder %s24, 1
    %p189 = scmp.ne.s32.totalorder %s184, %s186
    %p190 = scmp.eq.s32.totalorder %s24, 0
    %p191 = por %p189, %p190
    %p192 = scmp.ne.s32.totalorder %s184, %s186
    %p193 = scmp.eq.s32.totalorder %s29, 1
    %p194 = por %p192, %p193
    %p195 = scmp.ne.s32.totalorder %s186, %s187
    %p196 = scmp.eq.s32.totalorder %s29, 0
    %p197 = por %p195, %p196
    %p198 = scmp.ne.s32.totalorder %s186, %s187
    %p199 = scmp.eq.s32.totalorder %s30, 1
    %p200 = por %p198, %p199
    %p202 = scmp.ne.s32.totalorder %s187, %s201
    %p203 = scmp.eq.s32.totalorder %s30, 0
    %p204 = por %p202, %p203
    %s206 = sadd.s32 %s205, 1
    %p209 = scmp.eq.s32.totalorder %s24, 1
    %p210 = scmp.ne.s32.totalorder %s205, %s207
    %p211 = scmp.eq.s32.totalorder %s24, 0
    %p212 = por %p210, %p211
    %p213 = scmp.ne.s32.totalorder %s205, %s207
    %p214 = scmp.eq.s32.totalorder %s29, 1
    %p215 = por %p213, %p214
    %p216 = scmp.ne.s32.totalorder %s207, %s208
    %p217 = scmp.eq.s32.totalorder %s29, 0
    %p218 = por %p216, %p217
    %p219 = scmp.ne.s32.totalorder %s207, %s208
    %p220 = scmp.eq.s32.totalorder %s30, 1
    %p221 = por %p219, %p220
    %p223 = scmp.ne.s32.totalorder %s208, %s222
    %p224 = scmp.eq.s32.totalorder %s30, 0
    %p225 = por %p223, %p224
    %s227 = sadd.s32 %s226, 1
    %p230 = scmp.eq.s32.totalorder %s24, 1
    %p231 = scmp.ne.s32.totalorder %s226, %s228
    %p232 = scmp.eq.s32.totalorder %s24, 0
    %p233 = por %p231, %p232
    %p234 = scmp.ne.s32.totalorder %s226, %s228
    %p235 = scmp.eq.s32.totalorder %s29, 1
    %p236 = por %p234, %p235
    %p237 = scmp.ne.s32.totalorder %s228, %s229
    %p238 = scmp.eq.s32.totalorder %s29, 0
    %p239 = por %p237, %p238
    %p240 = scmp.ne.s32.totalorder %s228, %s229
    %p241 = scmp.eq.s32.totalorder %s30, 1
    %p242 = por %p240, %p241
    %p244 = scmp.ne.s32.totalorder %s229, %s243
    %p245 = scmp.eq.s32.totalorder %s30, 0
    %p246 = por %p244, %p245
    %s248 = sadd.s32 %s247, 1
    %p251 = scmp.eq.s32.totalorder %s24, 1
    %p252 = scmp.ne.s32.totalorder %s247, %s249
    %p253 = scmp.eq.s32.totalorder %s24, 0
    %p254 = por %p252, %p253
    %p255 = scmp.ne.s32.totalorder %s247, %s249
    %p256 = scmp.eq.s32.totalorder %s29, 1
    %p257 = por %p255, %p256
    %p258 = scmp.ne.s32.totalorder %s249, %s250
    %p259 = scmp.eq.s32.totalorder %s29, 0
    %p260 = por %p258, %p259
    %p261 = scmp.ne.s32.totalorder %s249, %s250
    %p262 = scmp.eq.s32.totalorder %s30, 1
    %p263 = por %p261, %p262
    %p265 = scmp.ne.s32.totalorder %s250, %s264
    %p266 = scmp.eq.s32.totalorder %s30, 0
    %p267 = por %p265, %p266
    %s269 = sadd.s32 %s268, 1
    %p272 = scmp.eq.s32.totalorder %s24, 1
    %p273 = scmp.ne.s32.totalorder %s268, %s270
    %p274 = scmp.eq.s32.totalorder %s24, 0
    %p275 = por %p273, %p274
    %p276 = scmp.ne.s32.totalorder %s268, %s270
    %p277 = scmp.eq.s32.totalorder %s29, 1
    %p278 = por %p276, %p277
    %p279 = scmp.ne.s32.totalorder %s270, %s271
    %p280 = scmp.eq.s32.totalorder %s29, 0
    %p281 = por %p279, %p280
    %p282 = scmp.ne.s32.totalorder %s270, %s271
    %p283 = scmp.eq.s32.totalorder %s30, 1
    %p284 = por %p282, %p283
    %p286 = scmp.ne.s32.totalorder %s271, %s285
    %p287 = scmp.eq.s32.totalorder %s30, 0
    %p288 = por %p286, %p287
    %s290 = sadd.s32 %s289, 1
    %p293 = scmp.eq.s32.totalorder %s24, 1
    %p294 = scmp.ne.s32.totalorder %s289, %s291
    %p295 = scmp.eq.s32.totalorder %s24, 0
    %p296 = por %p294, %p295
    %p297 = scmp.ne.s32.totalorder %s289, %s291
    %p298 = scmp.eq.s32.totalorder %s29, 1
    %p299 = por %p297, %p298
    %p300 = scmp.ne.s32.totalorder %s291, %s292
    %p301 = scmp.eq.s32.totalorder %s29, 0
    %p302 = por %p300, %p301
    %p303 = scmp.ne.s32.totalorder %s291, %s292
    %p304 = scmp.eq.s32.totalorder %s30, 1
    %p305 = por %p303, %p304
    %p307 = scmp.ne.s32.totalorder %s292, %s306
    %p308 = scmp.eq.s32.totalorder %s30, 0
    %p309 = por %p307, %p308
    %s311 = sadd.s32 %s310, 1
    %p314 = scmp.eq.s32.totalorder %s24, 1
    %p315 = scmp.ne.s32.totalorder %s310, %s312
    %p316 = scmp.eq.s32.totalorder %s24, 0
    %p317 = por %p315, %p316
    %p318 = scmp.ne.s32.totalorder %s310, %s312
    %p319 = scmp.eq.s32.totalorder %s29, 1
    %p320 = por %p318, %p319
    %p321 = scmp.ne.s32.totalorder %s312, %s313
    %p322 = scmp.eq.s32.totalorder %s29, 0
    %p323 = por %p321, %p322
    %p324 = scmp.ne.s32.totalorder %s312, %s313
    %p325 = scmp.eq.s32.totalorder %s30, 1
    %p326 = por %p324, %p325
    %p328 = scmp.ne.s32.totalorder %s313, %s327
    %p329 = scmp.eq.s32.totalorder %s30, 0
    %p330 = por %p328, %p329
    %s332 = sadd.s32 %s331, 1
    %p335 = scmp.eq.s32.totalorder %s24, 1
    %p336 = scmp.ne.s32.totalorder %s331, %s333
    %p337 = scmp.eq.s32.totalorder %s24, 0
    %p338 = por %p336, %p337
    %p339 = scmp.ne.s32.totalorder %s331, %s333
    %p340 = scmp.eq.s32.totalorder %s29, 1
    %p341 = por %p339, %p340
    %p342 = scmp.ne.s32.totalorder %s333, %s334
    %p343 = scmp.eq.s32.totalorder %s29, 0
    %p344 = por %p342, %p343
    %p345 = scmp.ne.s32.totalorder %s333, %s334
    %p346 = scmp.eq.s32.totalorder %s30, 1
    %p347 = por %p345, %p346
    %p349 = scmp.ne.s32.totalorder %s334, %s348
    %p350 = scmp.eq.s32.totalorder %s30, 0
    %p351 = por %p349, %p350
    %s353 = sadd.s32 %s352, 1
    %p356 = scmp.eq.s32.totalorder %s24, 1
    %p357 = scmp.ne.s32.totalorder %s352, %s354
    %p358 = scmp.eq.s32.totalorder %s24, 0
    %p359 = por %p357, %p358
    %p360 = scmp.ne.s32.totalorder %s352, %s354
    %p361 = scmp.eq.s32.totalorder %s29, 1
    %p362 = por %p360, %p361
    %p363 = scmp.ne.s32.totalorder %s354, %s355
    %p364 = scmp.eq.s32.totalorder %s29, 0
    %p365 = por %p363, %p364
    %p366 = scmp.ne.s32.totalorder %s354, %s355
    %p367 = scmp.eq.s32.totalorder %s30, 1
    %p368 = por %p366, %p367
    %p370 = scmp.ne.s32.totalorder %s355, %s369
    %p371 = scmp.eq.s32.totalorder %s30, 0
    %p372 = por %p370, %p371
    %s374 = sadd.s32 %s373, 1
    %p377 = scmp.eq.s32.totalorder %s24, 1
    %p378 = scmp.ne.s32.totalorder %s373, %s375
    %p379 = scmp.eq.s32.totalorder %s24, 0
    %p380 = por %p378, %p379
    %p381 = scmp.ne.s32.totalorder %s373, %s375
    %p382 = scmp.eq.s32.totalorder %s29, 1
    %p383 = por %p381, %p382
    %p384 = scmp.ne.s32.totalorder %s375, %s376
    %p385 = scmp.eq.s32.totalorder %s29, 0
    %p386 = por %p384, %p385
    %p387 = scmp.ne.s32.totalorder %s375, %s376
    %p388 = scmp.eq.s32.totalorder %s30, 1
    %p389 = por %p387, %p388
    %p391 = scmp.ne.s32.totalorder %s376, %s390
    %p392 = scmp.eq.s32.totalorder %s30, 0
    %p393 = por %p391, %p392
    %s395 = sadd.s32 %s394, 1
    %p398 = scmp.eq.s32.totalorder %s24, 1
    %p399 = scmp.ne.s32.totalorder %s394, %s396
    %p400 = scmp.eq.s32.totalorder %s24, 0
    %p401 = por %p399, %p400
    %p402 = scmp.ne.s32.totalorder %s394, %s396
    %p403 = scmp.eq.s32.totalorder %s29, 1
    %p404 = por %p402, %p403
    %p405 = scmp.ne.s32.totalorder %s396, %s397
    %p406 = scmp.eq.s32.totalorder %s29, 0
    %p407 = por %p405, %p406
    %p408 = scmp.ne.s32.totalorder %s396, %s397
    %p409 = scmp.eq.s32.totalorder %s30, 1
    %p410 = por %p408, %p409
    %p412 = scmp.ne.s32.totalorder %s397, %s411
    %p413 = scmp.eq.s32.totalorder %s30, 0
    %p414 = por %p412, %p413
    %s415 = ssub.s32 %s24, %s31
    %p416 = scmp.eq.s32.totalorder %s415, 0
    %s418 = sadd.s32 %s417, 1
    %s419 = scalar_select %p416, %s417, %s418
    %p422 = pneg %p416
    %p423 = scmp.eq.s32.totalorder %s24, 1
    %p424 = por %p422, %p423
    %p425 = scmp.ne.s32.totalorder %s417, %s420
    %p426 = scmp.eq.s32.totalorder %s24, 0
    %p427 = por %p425, %p426
    %p428 = scmp.ne.s32.totalorder %s417, %s420
    %p429 = scmp.eq.s32.totalorder %s29, 1
    %p430 = por %p428, %p429
    %p431 = scmp.ne.s32.totalorder %s420, %s421
    %p432 = scmp.eq.s32.totalorder %s29, 0
    %p433 = por %p431, %p432
    %p434 = scmp.ne.s32.totalorder %s420, %s421
    %p435 = scmp.eq.s32.totalorder %s30, 1
    %p436 = por %p434, %p435
    %p438 = scmp.ne.s32.totalorder %s421, %s437
    %p439 = scmp.eq.s32.totalorder %s30, 0
    %p440 = por %p438, %p439
    %p441 = scmp.le.s32.totalorder 1, %s24
    %p442 = scmp.lt.s32.totalorder %s24, 3
    %p443 = pnand %p441, %p442
    %p444 = pneg %p443
    // Predicated region
    $region9: #{forward.1} parent=5 // pred_check
      _
    $region10: #{forward.1} parent=5 // pred_check_branch
      %446 = sbr.rel (%p443) target = $region12
    $region11: #{forward.1} parent=5 // pred_region
      %s447 = ssub.s32 %s24, 1
      // Predicated region
      $region13: #{forward.1} parent=11 // pred_check
        %p448 = pneg %p71
      $region14: #{forward.1} parent=11 // pred_check_branch
        %450 = sbr.rel (%p448) target = $region16
      $region15: #{forward.1} parent=11 // pred_region
        _
      $region16: #{forward.1} parent=11 // pred_fallthru
        _
      // Predicated region
      $region17: #{forward.1} parent=11 // pred_check
        %p451 = pneg %p92
      $region18: #{forward.1} parent=11 // pred_check_branch
        %453 = sbr.rel (%p451) target = $region20
      $region19: #{forward.1} parent=11 // pred_region
        _
      $region20: #{forward.1} parent=11 // pred_fallthru
        _
      // Predicated region
      $region21: #{forward.1} parent=11 // pred_check
        %p454 = pneg %p113
      $region22: #{forward.1} parent=11 // pred_check_branch
        %456 = sbr.rel (%p454) target = $region24
      $region23: #{forward.1} parent=11 // pred_region
        _
      $region24: #{forward.1} parent=11 // pred_fallthru
        _
      // Predicated region
      $region25: #{forward.1} parent=11 // pred_check
        %p457 = pneg %p134
      $region26: #{forward.1} parent=11 // pred_check_branch
        %459 = sbr.rel (%p457) target = $region28
      $region27: #{forward.1} parent=11 // pred_region
        _
      $region28: #{forward.1} parent=11 // pred_fallthru
        _
      // Predicated region
      $region29: #{forward.1} parent=11 // pred_check
        %p460 = pneg %p155
      $region30: #{forward.1} parent=11 // pred_check_branch
        %462 = sbr.rel (%p460) target = $region32
      $region31: #{forward.1} parent=11 // pred_region
        _
      $region32: #{forward.1} parent=11 // pred_fallthru
        _
      // Predicated region
      $region33: #{forward.1} parent=11 // pred_check
        %p463 = pneg %p176
      $region34: #{forward.1} parent=11 // pred_check_branch
        %465 = sbr.rel (%p463) target = $region36
      $region35: #{forward.1} parent=11 // pred_region
        _
      $region36: #{forward.1} parent=11 // pred_fallthru
        _
      // Predicated region
      $region37: #{forward.1} parent=11 // pred_check
        %p466 = pneg %p197
      $region38: #{forward.1} parent=11 // pred_check_branch
        %468 = sbr.rel (%p466) target = $region40
      $region39: #{forward.1} parent=11 // pred_region
        _
      $region40: #{forward.1} parent=11 // pred_fallthru
        _
      // Predicated region
      $region41: #{forward.1} parent=11 // pred_check
        %p469 = pneg %p218
      $region42: #{forward.1} parent=11 // pred_check_branch
        %471 = sbr.rel (%p469) target = $region44
      $region43: #{forward.1} parent=11 // pred_region
        _
      $region44: #{forward.1} parent=11 // pred_fallthru
        _
      // Predicated region
      $region45: #{forward.1} parent=11 // pred_check
        %p472 = pneg %p239
      $region46: #{forward.1} parent=11 // pred_check_branch
        %474 = sbr.rel (%p472) target = $region48
      $region47: #{forward.1} parent=11 // pred_region
        _
      $region48: #{forward.1} parent=11 // pred_fallthru
        _
      // Predicated region
      $region49: #{forward.1} parent=11 // pred_check
        %p475 = pneg %p260
      $region50: #{forward.1} parent=11 // pred_check_branch
        %477 = sbr.rel (%p475) target = $region52
      $region51: #{forward.1} parent=11 // pred_region
        _
      $region52: #{forward.1} parent=11 // pred_fallthru
        _
      // Predicated region
      $region53: #{forward.1} parent=11 // pred_check
        %p478 = pneg %p281
      $region54: #{forward.1} parent=11 // pred_check_branch
        %480 = sbr.rel (%p478) target = $region56
      $region55: #{forward.1} parent=11 // pred_region
        _
      $region56: #{forward.1} parent=11 // pred_fallthru
        _
      // Predicated region
      $region57: #{forward.1} parent=11 // pred_check
        %p481 = pneg %p302
      $region58: #{forward.1} parent=11 // pred_check_branch
        %483 = sbr.rel (%p481) target = $region60
      $region59: #{forward.1} parent=11 // pred_region
        _
      $region60: #{forward.1} parent=11 // pred_fallthru
        _
      // Predicated region
      $region61: #{forward.1} parent=11 // pred_check
        %p484 = pneg %p323
      $region62: #{forward.1} parent=11 // pred_check_branch
        %486 = sbr.rel (%p484) target = $region64
      $region63: #{forward.1} parent=11 // pred_region
        _
      $region64: #{forward.1} parent=11 // pred_fallthru
        _
      // Predicated region
      $region65: #{forward.1} parent=11 // pred_check
        %p487 = pneg %p344
      $region66: #{forward.1} parent=11 // pred_check_branch
        %489 = sbr.rel (%p487) target = $region68
      $region67: #{forward.1} parent=11 // pred_region
        _
      $region68: #{forward.1} parent=11 // pred_fallthru
        _
      // Predicated region
      $region69: #{forward.1} parent=11 // pred_check
        %p490 = pneg %p365
      $region70: #{forward.1} parent=11 // pred_check_branch
        %492 = sbr.rel (%p490) target = $region72
      $region71: #{forward.1} parent=11 // pred_region
        _
      $region72: #{forward.1} parent=11 // pred_fallthru
        _
      // Predicated region
      $region73: #{forward.1} parent=11 // pred_check
        %p493 = pneg %p386
      $region74: #{forward.1} parent=11 // pred_check_branch
        %495 = sbr.rel (%p493) target = $region76
      $region75: #{forward.1} parent=11 // pred_region
        _
      $region76: #{forward.1} parent=11 // pred_fallthru
        _
      // Predicated region
      $region77: #{forward.1} parent=11 // pred_check
        %p496 = pneg %p407
      $region78: #{forward.1} parent=11 // pred_check_branch
        %498 = sbr.rel (%p496) target = $region80
      $region79: #{forward.1} parent=11 // pred_region
        _
      $region80: #{forward.1} parent=11 // pred_fallthru
        _
    $region12: #{forward.1} parent=5 // pred_fallthru
      _
    %p499 = scmp.lt.s32.totalorder %s24, 2
    // Predicated region
    $region81: #{forward.1} parent=5 // pred_check
      %p500 = pneg %p499
    $region82: #{forward.1} parent=5 // pred_check_branch
      %502 = sbr.rel (%p500) target = $region84
    $region83: #{forward.1} parent=5 // pred_region
      // Predicated region
      $region85: #{forward.1} parent=83 // pred_check
        %p503 = pneg %p44
      $region86: #{forward.1} parent=83 // pred_check_branch
        %505 = sbr.rel (%p503) target = $region88
      $region87: #{forward.1} parent=83 // pred_region
        %p506 = scmp.lt.s32.totalorder %s24, 1
        %s507 = scalar_select %p506, %s24, 1
        %s508 = smul.addr %s507, 13
        %s509 = smul.addr %s508, 8
        %s510 = scalar_lea.vmem %s0, %s509
      $region88: #{forward.1} parent=83 // pred_fallthru
        _
    $region84: #{forward.1} parent=5 // pred_fallthru
      _
    %p511 = scmp.le.s32.totalorder 1, %s24
    %p512 = scmp.lt.s32.totalorder %s24, 3
    %p513 = pnand %p511, %p512
    %p514 = pneg %p513
    // Predicated region
    $region89: #{forward.1} parent=5 // pred_check
      _
    $region90: #{forward.1} parent=5 // pred_check_branch
      %516 = sbr.rel (%p513) target = $region92
    $region91: #{forward.1} parent=5 // pred_region
      %s517 = ssub.s32 %s24, 1
      %p518 = scmp.lt.s32.totalorder %s29, 1
      %s519 = scalar_select %p518, %s29, 1
      %s520 = smul.addr %s519, 13
      %s521 = smul.addr %s520, 8
      %s522 = scalar_lea.vmem %s0, %s521
      %p523 = pneg %p50
      %p524 = pneg %p47
      %p525 = pneg %p71
      %p526 = pneg %p68
      %p527 = pneg %p92
      %p528 = pneg %p89
      %p529 = pneg %p113
      %p530 = pneg %p110
      %p531 = pneg %p134
      %p532 = pneg %p131
      %p533 = pneg %p155
      %p534 = pneg %p152
      %p535 = pneg %p176
      %p536 = pneg %p173
      %p537 = pneg %p197
      %p538 = pneg %p194
      %p539 = pneg %p218
      %p540 = pneg %p215
      %p541 = pneg %p239
      %p542 = pneg %p236
      %p543 = pneg %p260
      %p544 = pneg %p257
      %p545 = pneg %p281
      %p546 = pneg %p278
      %p547 = pneg %p302
      %p548 = pneg %p299
      %p549 = pneg %p323
      %p550 = pneg %p320
      %p551 = pneg %p344
      %p552 = pneg %p341
      %p553 = pneg %p365
      %p554 = pneg %p362
      %p555 = pneg %p386
      %p556 = pneg %p383
      %p557 = pneg %p407
      %p558 = pneg %p404
      %p559 = pneg %p433
      %p560 = pneg %p430
      %p561 = scmp.lt.s32.totalorder %s29, 1
      %s562 = scalar_select %p561, %s29, 1
      %s563 = smul.addr %s562, 7
      %s564 = smul.addr %s563, 8
      %s565 = scalar_lea.vmem %s18, %s564
      %p566 = scmp.lt.s32.totalorder %s29, 1
      %s567 = scalar_select %p566, %s29, 1
      %s568 = smul.addr %s567, 13
      %s569 = smul.addr %s568, 8
      %s570 = scalar_lea.vmem %s0, %s569
      %p571 = scmp.lt.s32.totalorder %s29, 1
      %s572 = scalar_select %p571, %s29, 1
      %s573 = smul.addr %s572, 7
      %s574 = smul.addr %s573, 8
      %s575 = scalar_lea.vmem %s18, %s574
      %v576 = vld [vmem:[%s570] sm:$0xff]
      %v577 = vld [vmem:[%s570 + $0x8] sm:$0xff]
      %v578 = vld [vmem:[%s570 + $0x10] sm:$0xff]
      %v579 = vld [vmem:[%s570 + $0x18] sm:$0xff]
      %v580 = vld [vmem:[%s570 + $0x20] sm:$0xff]
      %v581 = vld [vmem:[%s570 + $0x28] sm:$0xff]
      %v582 = vld [vmem:[%s570 + $0x30] sm:$0xff]
      %v583 = vld [vmem:[%s570 + $0x38] sm:$0xff]
      %v584 = vld [vmem:[%s570 + $0x40] sm:$0xff]
      %v585 = vld [vmem:[%s570 + $0x48] sm:$0xff]
      %v586 = vld [vmem:[%s570 + $0x50] sm:$0xff]
      %v587 = vld [vmem:[%s570 + $0x58] sm:$0xff]
      %v588 = vld [vmem:[%s570 + $0x60] sm:$0xff]
      %v589 = vld [vmem:[%s5] sm:$0x3]
      %v590 = vld [vmem:[%s6] sm:$0x1]
      %v592 = vlaneseq
      %v593 = vshrl.u32 %v592, 7
      %v594 = vsub.s32 0, %v593
      %v595 = vrot.slane %v590, %v594
      %vm597 = vcmask 15360
      %v599 = vsel %vm597, %v576, 0
      %v602 = vsel %vm597, %v577, 0
      %v605 = vsel %vm597, %v578, 0
      %v608 = vsel %vm597, %v579, 0
      %v611 = vsel %vm597, %v580, 0
      %v614 = vsel %vm597, %v581, 0
      %v617 = vsel %vm597, %v582, 0
      %v620 = vsel %vm597, %v583, 0
      %v623 = vsel %vm597, %v584, 0
      %v626 = vsel %vm597, %v585, 0
      %v629 = vsel %vm597, %v586, 0
      %v632 = vsel %vm597, %v587, 0
      %v635 = vsel %vm597, %v588, 0
      %vm637 = vcmask 1041408
      %v639 = vsel %vm637, %v589, 0
      %641 = vmatprep.subr.mxu0 0.0
      %642 = vmatpush1.msra.mxu0 0.0
      %643 = vmatprep.subr.mxu0 0.0
      %644 = vmatpush1.msra.mxu0 0.0
      %645 = vmatprep.subr.mxu0 0.0
      %646 = vmatpush1.msra.mxu0 0.0
      %647 = vmatprep.subr.mxu0 0.0
      %648 = vmatpush1.msra.mxu0 0.0
      %649 = vmatprep.subr.mxu0 0.0
      %650 = vmatpush1.msra.mxu0 0.0
      %651 = vmatprep.subr.mxu0 0.0
      %652 = vmatpush1.msra.mxu0 0.0
      %653 = vmatprep.subr.mxu0 0.0
      %654 = vmatpush1.msra.mxu0 0.0
      %655 = vmatprep.subr.mxu0 0.0
      %656 = vmatpush1.msra.mxu0 0.0
      %657 = vmatprep.subr.mxu0 0.0
      %658 = vmatpush1.msra.mxu0 0.0
      %659 = vmatprep.subr.mxu0 0.0
      %660 = vmatpush1.msra.mxu0 0.0
      %661 = vmatprep.subr.mxu0 0.0
      %662 = vmatpush1.msra.mxu0 0.0
      %663 = vmatprep.subr.mxu0 0.0
      %664 = vmatpush1.msra.mxu0 0.0
      %665 = vmatprep.subr.mxu0 0.0
      %666 = vmatpush1.msra.mxu0 0.0
      %667 = vmatprep.subr.mxu0 0.0
      %668 = vmatpush1.msra.mxu0 0.0
      %669 = vmatprep.subr.mxu0 0.0
      %670 = vmatpush1.msra.mxu0 0.0
      %671 = vmatprep.subr.mxu0 0.0
      %672 = vmatpush1.msra.mxu0 %v639
      %673 = vmatprep.subr.mxu0 0.0
      %674 = vmatpush2.msra.mxu0 0.0
      %675 = vmatprep.subr.mxu0 0.0
      %676 = vmatpush2.msra.mxu0 0.0
      %677 = vmatprep.subr.mxu0 0.0
      %678 = vmatpush2.msra.mxu0 0.0
      %679 = vmatprep.subr.mxu0 0.0
      %680 = vmatpush2.msra.mxu0 0.0
      %681 = vmatprep.subr.mxu0 0.0
      %682 = vmatpush2.msra.mxu0 0.0
      %683 = vmatprep.subr.mxu0 0.0
      %684 = vmatpush2.msra.mxu0 0.0
      %685 = vmatprep.subr.mxu0 0.0
      %686 = vmatpush2.msra.mxu0 0.0
      %687 = vmatprep.subr.mxu0 0.0
      %688 = vmatpush2.msra.mxu0 0.0
      %689 = vmatprep.subr.mxu0 0.0
      %690 = vmatpush2.msra.mxu0 0.0
      %691 = vmatprep.subr.mxu0 0.0
      %692 = vmatpush2.msra.mxu0 0.0
      %693 = vmatprep.subr.mxu0 0.0
      %694 = vmatpush2.msra.mxu0 0.0
      %695 = vmatprep.subr.mxu0 0.0
      %696 = vmatpush2.msra.mxu0 0.0
      %697 = vmatprep.subr.mxu0 0.0
      %698 = vmatpush2.msra.mxu0 0.0
      %699 = vmatprep.subr.mxu0 0.0
      %700 = vmatpush2.msra.mxu0 0.0
      %701 = vmatprep.subr.mxu0 0.0
      %702 = vmatpush2.msra.mxu0 0.0
      %703 = vmatprep.subr.mxu0 0.0
      %704 = vmatpush2.msra.mxu0 0.0
      %705 = vmatprep.mubr.f32.mxu0 0.0
      %706 = vmatmul.mubr.f32.gmra.mxu0 %v599
      %v707 = vpop.f32.mrf.mxu0
      %v708 = vadd.f32 %v595, %v707
      %v709 = vpop.f32.mrf.mxu0
      %710 = vmatprep.mubr.f32.mxu0 0.0
      %711 = vmatmul.mubr.f32.gmra.mxu0 %v602
      %v712 = vpop.f32.mrf.mxu0
      %v713 = vadd.f32 %v595, %v712
      %v714 = vpop.f32.mrf.mxu0
      %715 = vmatprep.mubr.f32.mxu0 0.0
      %716 = vmatmul.mubr.f32.gmra.mxu0 %v605
      %v717 = vpop.f32.mrf.mxu0
      %v718 = vadd.f32 %v595, %v717
      %v719 = vpop.f32.mrf.mxu0
      %720 = vmatprep.mubr.f32.mxu0 0.0
      %721 = vmatmul.mubr.f32.gmra.mxu0 %v608
      %v722 = vpop.f32.mrf.mxu0
      %v723 = vadd.f32 %v595, %v722
      %v724 = vpop.f32.mrf.mxu0
      %725 = vmatprep.mubr.f32.mxu0 0.0
      %726 = vmatmul.mubr.f32.gmra.mxu0 %v611
      %v727 = vpop.f32.mrf.mxu0
      %v728 = vadd.f32 %v595, %v727
      %v729 = vpop.f32.mrf.mxu0
      %730 = vmatprep.mubr.f32.mxu0 0.0
      %731 = vmatmul.mubr.f32.gmra.mxu0 %v614
      %v732 = vpop.f32.mrf.mxu0
      %v733 = vadd.f32 %v595, %v732
      %v734 = vpop.f32.mrf.mxu0
      %735 = vmatprep.mubr.f32.mxu0 0.0
      %736 = vmatmul.mubr.f32.gmra.mxu0 %v617
      %v737 = vpop.f32.mrf.mxu0
      %v738 = vadd.f32 %v595, %v737
      %v739 = vpop.f32.mrf.mxu0
      %740 = vmatprep.mubr.f32.mxu0 0.0
      %741 = vmatmul.mubr.f32.gmra.mxu0 %v620
      %v742 = vpop.f32.mrf.mxu0
      %v743 = vadd.f32 %v595, %v742
      %v744 = vpop.f32.mrf.mxu0
      %745 = vmatprep.mubr.f32.mxu0 0.0
      %746 = vmatmul.mubr.f32.gmra.mxu0 %v623
      %v747 = vpop.f32.mrf.mxu0
      %v748 = vadd.f32 %v595, %v747
      %v749 = vpop.f32.mrf.mxu0
      %750 = vmatprep.mubr.f32.mxu0 0.0
      %751 = vmatmul.mubr.f32.gmra.mxu0 %v626
      %v752 = vpop.f32.mrf.mxu0
      %v753 = vadd.f32 %v595, %v752
      %v754 = vpop.f32.mrf.mxu0
      %755 = vmatprep.mubr.f32.mxu0 0.0
      %756 = vmatmul.mubr.f32.gmra.mxu0 %v629
      %v757 = vpop.f32.mrf.mxu0
      %v758 = vadd.f32 %v595, %v757
      %v759 = vpop.f32.mrf.mxu0
      %760 = vmatprep.mubr.f32.mxu0 0.0
      %761 = vmatmul.mubr.f32.gmra.mxu0 %v632
      %v762 = vpop.f32.mrf.mxu0
      %v763 = vadd.f32 %v595, %v762
      %v764 = vpop.f32.mrf.mxu0
      %765 = vmatprep.mubr.f32.mxu0 0.0
      %766 = vmatmul.mubr.f32.gmra.mxu0 %v635
      %v767 = vpop.f32.mrf.mxu0
      %v768 = vadd.f32 %v595, %v767
      %v769 = vpop.f32.mrf.mxu0
      %770 = vdwg.mxu0
      %v771 = vld [vmem:[%s7] sm:$0xff]
      %v772 = vld [vmem:[%s8] sm:$0xff]
      %vm773 = vcmask 64512
      %v775 = vsel %vm773, %v713, 0
      %v778 = vsel %vm773, %v718, 0
      %v781 = vsel %vm773, %v723, 0
      %v784 = vsel %vm773, %v728, 0
      %v787 = vsel %vm773, %v733, 0
      %v790 = vsel %vm773, %v738, 0
      %v793 = vsel %vm773, %v743, 0
      %v796 = vsel %vm773, %v748, 0
      %v799 = vsel %vm773, %v753, 0
      %v802 = vsel %vm773, %v758, 0
      %v805 = vsel %vm773, %v763, 0
      %v808 = vsel %vm773, %v768, 0
      %810 = vmatprep.subr.mxu0 0.0
      %811 = vmatpush1.msra.mxu0 0.0
      %812 = vmatprep.subr.mxu0 0.0
      %813 = vmatpush1.msra.mxu0 0.0
      %814 = vmatprep.subr.mxu0 0.0
      %815 = vmatpush1.msra.mxu0 0.0
      %816 = vmatprep.subr.mxu0 0.0
      %817 = vmatpush1.msra.mxu0 0.0
      %818 = vmatprep.subr.mxu0 0.0
      %819 = vmatpush1.msra.mxu0 0.0
      %820 = vmatprep.subr.mxu0 0.0
      %821 = vmatpush1.msra.mxu0 0.0
      %822 = vmatprep.subr.mxu0 0.0
      %823 = vmatpush1.msra.mxu0 0.0
      %824 = vmatprep.subr.mxu0 0.0
      %825 = vmatpush1.msra.mxu0 0.0
      %826 = vmatprep.subr.mxu0 0.0
      %827 = vmatpush1.msra.mxu0 0.0
      %828 = vmatprep.subr.mxu0 0.0
      %829 = vmatpush1.msra.mxu0 0.0
      %830 = vmatprep.subr.mxu0 0.0
      %831 = vmatpush1.msra.mxu0 0.0
      %832 = vmatprep.subr.mxu0 0.0
      %833 = vmatpush1.msra.mxu0 0.0
      %834 = vmatprep.subr.mxu0 0.0
      %835 = vmatpush1.msra.mxu0 0.0
      %836 = vmatprep.subr.mxu0 0.0
      %837 = vmatpush1.msra.mxu0 0.0
      %838 = vmatprep.subr.mxu0 0.0
      %839 = vmatpush1.msra.mxu0 0.0
      %840 = vmatprep.subr.mxu0 0.0
      %841 = vmatpush1.msra.mxu0 %v772
      %842 = vmatprep.subr.mxu0 0.0
      %843 = vmatpush2.msra.mxu0 0.0
      %844 = vmatprep.subr.mxu0 0.0
      %845 = vmatpush2.msra.mxu0 0.0
      %846 = vmatprep.subr.mxu0 0.0
      %847 = vmatpush2.msra.mxu0 0.0
      %848 = vmatprep.subr.mxu0 0.0
      %849 = vmatpush2.msra.mxu0 0.0
      %850 = vmatprep.subr.mxu0 0.0
      %851 = vmatpush2.msra.mxu0 0.0
      %852 = vmatprep.subr.mxu0 0.0
      %853 = vmatpush2.msra.mxu0 0.0
      %854 = vmatprep.subr.mxu0 0.0
      %855 = vmatpush2.msra.mxu0 0.0
      %856 = vmatprep.subr.mxu0 0.0
      %857 = vmatpush2.msra.mxu0 0.0
      %858 = vmatprep.subr.mxu0 0.0
      %859 = vmatpush2.msra.mxu0 0.0
      %860 = vmatprep.subr.mxu0 0.0
      %861 = vmatpush2.msra.mxu0 0.0
      %862 = vmatprep.subr.mxu0 0.0
      %863 = vmatpush2.msra.mxu0 0.0
      %864 = vmatprep.subr.mxu0 0.0
      %865 = vmatpush2.msra.mxu0 0.0
      %866 = vmatprep.subr.mxu0 0.0
      %867 = vmatpush2.msra.mxu0 0.0
      %868 = vmatprep.subr.mxu0 0.0
      %869 = vmatpush2.msra.mxu0 0.0
      %870 = vmatprep.subr.mxu0 0.0
      %871 = vmatpush2.msra.mxu0 0.0
      %872 = vmatprep.subr.mxu0 0.0
      %873 = vmatpush2.msra.mxu0 0.0
      %874 = vmatprep.mubr.f32.mxu0 0.0
      %875 = vmatmul.mubr.f32.gmra.mxu0 %v775
      %v876 = vpop.f32.mrf.mxu0
      %v877 = vadd.f32 0.0, %v876
      %v878 = vpop.f32.mrf.mxu0
      %879 = vmatprep.mubr.f32.mxu0 0.0
      %880 = vmatmul.mubr.f32.gmra.mxu0 %v778
      %v881 = vpop.f32.mrf.mxu0
      %v882 = vadd.f32 0.0, %v881
      %v883 = vpop.f32.mrf.mxu0
      %884 = vmatprep.mubr.f32.mxu0 0.0
      %885 = vmatmul.mubr.f32.gmra.mxu0 %v781
      %v886 = vpop.f32.mrf.mxu0
      %v887 = vadd.f32 0.0, %v886
      %v888 = vpop.f32.mrf.mxu0
      %889 = vmatprep.mubr.f32.mxu0 0.0
      %890 = vmatmul.mubr.f32.gmra.mxu0 %v784
      %v891 = vpop.f32.mrf.mxu0
      %v892 = vadd.f32 0.0, %v891
      %v893 = vpop.f32.mrf.mxu0
      %894 = vmatprep.mubr.f32.mxu0 0.0
      %895 = vmatmul.mubr.f32.gmra.mxu0 %v787
      %v896 = vpop.f32.mrf.mxu0
      %v897 = vadd.f32 0.0, %v896
      %v898 = vpop.f32.mrf.mxu0
      %899 = vmatprep.mubr.f32.mxu0 0.0
      %900 = vmatmul.mubr.f32.gmra.mxu0 %v790
      %v901 = vpop.f32.mrf.mxu0
      %v902 = vadd.f32 0.0, %v901
      %v903 = vpop.f32.mrf.mxu0
      %904 = vmatprep.mubr.f32.mxu0 0.0
      %905 = vmatmul.mubr.f32.gmra.mxu0 %v793
      %v906 = vpop.f32.mrf.mxu0
      %v907 = vadd.f32 0.0, %v906
      %v908 = vpop.f32.mrf.mxu0
      %909 = vmatprep.mubr.f32.mxu0 0.0
      %910 = vmatmul.mubr.f32.gmra.mxu0 %v796
      %v911 = vpop.f32.mrf.mxu0
      %v912 = vadd.f32 0.0, %v911
      %v913 = vpop.f32.mrf.mxu0
      %914 = vmatprep.mubr.f32.mxu0 0.0
      %915 = vmatmul.mubr.f32.gmra.mxu0 %v799
      %v916 = vpop.f32.mrf.mxu0
      %v917 = vadd.f32 0.0, %v916
      %v918 = vpop.f32.mrf.mxu0
      %919 = vmatprep.mubr.f32.mxu0 0.0
      %920 = vmatmul.mubr.f32.gmra.mxu0 %v802
      %v921 = vpop.f32.mrf.mxu0
      %v922 = vadd.f32 0.0, %v921
      %v923 = vpop.f32.mrf.mxu0
      %924 = vmatprep.mubr.f32.mxu0 0.0
      %925 = vmatmul.mubr.f32.gmra.mxu0 %v805
      %v926 = vpop.f32.mrf.mxu0
      %v927 = vadd.f32 0.0, %v926
      %v928 = vpop.f32.mrf.mxu0
      %929 = vmatprep.mubr.f32.mxu0 0.0
      %930 = vmatmul.mubr.f32.gmra.mxu0 %v808
      %v931 = vpop.f32.mrf.mxu0
      %v932 = vadd.f32 0.0, %v931
      %v933 = vpop.f32.mrf.mxu0
      %934 = vdwg.mxu0
      %v936 = vsel %vm773, %v708, 0
      %938 = vmatprep.subr.mxu0 0.0
      %939 = vmatpush1.msra.mxu0 0.0
      %940 = vmatprep.subr.mxu0 0.0
      %941 = vmatpush1.msra.mxu0 0.0
      %942 = vmatprep.subr.mxu0 0.0
      %943 = vmatpush1.msra.mxu0 0.0
      %944 = vmatprep.subr.mxu0 0.0
      %945 = vmatpush1.msra.mxu0 0.0
      %946 = vmatprep.subr.mxu0 0.0
      %947 = vmatpush1.msra.mxu0 0.0
      %948 = vmatprep.subr.mxu0 0.0
      %949 = vmatpush1.msra.mxu0 0.0
      %950 = vmatprep.subr.mxu0 0.0
      %951 = vmatpush1.msra.mxu0 0.0
      %952 = vmatprep.subr.mxu0 0.0
      %953 = vmatpush1.msra.mxu0 0.0
      %954 = vmatprep.subr.mxu0 0.0
      %955 = vmatpush1.msra.mxu0 0.0
      %956 = vmatprep.subr.mxu0 0.0
      %957 = vmatpush1.msra.mxu0 0.0
      %958 = vmatprep.subr.mxu0 0.0
      %959 = vmatpush1.msra.mxu0 0.0
      %960 = vmatprep.subr.mxu0 0.0
      %961 = vmatpush1.msra.mxu0 0.0
      %962 = vmatprep.subr.mxu0 0.0
      %963 = vmatpush1.msra.mxu0 0.0
      %964 = vmatprep.subr.mxu0 0.0
      %965 = vmatpush1.msra.mxu0 0.0
      %966 = vmatprep.subr.mxu0 0.0
      %967 = vmatpush1.msra.mxu0 0.0
      %968 = vmatprep.subr.mxu0 0.0
      %969 = vmatpush1.msra.mxu0 %v771
      %970 = vmatprep.subr.mxu0 0.0
      %971 = vmatpush2.msra.mxu0 0.0
      %972 = vmatprep.subr.mxu0 0.0
      %973 = vmatpush2.msra.mxu0 0.0
      %974 = vmatprep.subr.mxu0 0.0
      %975 = vmatpush2.msra.mxu0 0.0
      %976 = vmatprep.subr.mxu0 0.0
      %977 = vmatpush2.msra.mxu0 0.0
      %978 = vmatprep.subr.mxu0 0.0
      %979 = vmatpush2.msra.mxu0 0.0
      %980 = vmatprep.subr.mxu0 0.0
      %981 = vmatpush2.msra.mxu0 0.0
      %982 = vmatprep.subr.mxu0 0.0
      %983 = vmatpush2.msra.mxu0 0.0
      %984 = vmatprep.subr.mxu0 0.0
      %985 = vmatpush2.msra.mxu0 0.0
      %986 = vmatprep.subr.mxu0 0.0
      %987 = vmatpush2.msra.mxu0 0.0
      %988 = vmatprep.subr.mxu0 0.0
      %989 = vmatpush2.msra.mxu0 0.0
      %990 = vmatprep.subr.mxu0 0.0
      %991 = vmatpush2.msra.mxu0 0.0
      %992 = vmatprep.subr.mxu0 0.0
      %993 = vmatpush2.msra.mxu0 0.0
      %994 = vmatprep.subr.mxu0 0.0
      %995 = vmatpush2.msra.mxu0 0.0
      %996 = vmatprep.subr.mxu0 0.0
      %997 = vmatpush2.msra.mxu0 0.0
      %998 = vmatprep.subr.mxu0 0.0
      %999 = vmatpush2.msra.mxu0 0.0
      %1000 = vmatprep.subr.mxu0 0.0
      %1001 = vmatpush2.msra.mxu0 0.0
      %1002 = vmatprep.mubr.f32.mxu0 0.0
      %1003 = vmatmul.mubr.f32.gmra.mxu0 %v936
      %v1004 = vpop.f32.mrf.mxu0
      %v1005 = vadd.f32 %v877, %v1004
      %v1006 = vpop.f32.mrf.mxu0
      %1007 = vmatprep.mubr.f32.mxu0 0.0
      %1008 = vmatmul.mubr.f32.gmra.mxu0 %v775
      %v1009 = vpop.f32.mrf.mxu0
      %v1010 = vadd.f32 %v882, %v1009
      %v1011 = vpop.f32.mrf.mxu0
      %1012 = vmatprep.mubr.f32.mxu0 0.0
      %1013 = vmatmul.mubr.f32.gmra.mxu0 %v778
      %v1014 = vpop.f32.mrf.mxu0
      %v1015 = vadd.f32 %v887, %v1014
      %v1016 = vpop.f32.mrf.mxu0
      %1017 = vmatprep.mubr.f32.mxu0 0.0
      %1018 = vmatmul.mubr.f32.gmra.mxu0 %v781
      %v1019 = vpop.f32.mrf.mxu0
      %v1020 = vadd.f32 %v892, %v1019
      %v1021 = vpop.f32.mrf.mxu0
      %1022 = vmatprep.mubr.f32.mxu0 0.0
      %1023 = vmatmul.mubr.f32.gmra.mxu0 %v784
      %v1024 = vpop.f32.mrf.mxu0
      %v1025 = vadd.f32 %v897, %v1024
      %v1026 = vpop.f32.mrf.mxu0
      %1027 = vmatprep.mubr.f32.mxu0 0.0
      %1028 = vmatmul.mubr.f32.gmra.mxu0 %v787
      %v1029 = vpop.f32.mrf.mxu0
      %v1030 = vadd.f32 %v902, %v1029
      %v1031 = vpop.f32.mrf.mxu0
      %1032 = vmatprep.mubr.f32.mxu0 0.0
      %1033 = vmatmul.mubr.f32.gmra.mxu0 %v790
      %v1034 = vpop.f32.mrf.mxu0
      %v1035 = vadd.f32 %v907, %v1034
      %v1036 = vpop.f32.mrf.mxu0
      %1037 = vmatprep.mubr.f32.mxu0 0.0
      %1038 = vmatmul.mubr.f32.gmra.mxu0 %v793
      %v1039 = vpop.f32.mrf.mxu0
      %v1040 = vadd.f32 %v912, %v1039
      %v1041 = vpop.f32.mrf.mxu0
      %1042 = vmatprep.mubr.f32.mxu0 0.0
      %1043 = vmatmul.mubr.f32.gmra.mxu0 %v796
      %v1044 = vpop.f32.mrf.mxu0
      %v1045 = vadd.f32 %v917, %v1044
      %v1046 = vpop.f32.mrf.mxu0
      %1047 = vmatprep.mubr.f32.mxu0 0.0
      %1048 = vmatmul.mubr.f32.gmra.mxu0 %v799
      %v1049 = vpop.f32.mrf.mxu0
      %v1050 = vadd.f32 %v922, %v1049
      %v1051 = vpop.f32.mrf.mxu0
      %1052 = vmatprep.mubr.f32.mxu0 0.0
      %1053 = vmatmul.mubr.f32.gmra.mxu0 %v802
      %v1054 = vpop.f32.mrf.mxu0
      %v1055 = vadd.f32 %v927, %v1054
      %v1056 = vpop.f32.mrf.mxu0
      %1057 = vmatprep.mubr.f32.mxu0 0.0
      %1058 = vmatmul.mubr.f32.gmra.mxu0 %v805
      %v1059 = vpop.f32.mrf.mxu0
      %v1060 = vadd.f32 %v932, %v1059
      %v1061 = vpop.f32.mrf.mxu0
      %1062 = vdwg.mxu0
      %v1063 = vld [vmem:[%s9] sm:$0x1]
      %v1065 = vlaneseq
      %v1066 = vshrl.u32 %v1065, 7
      %v1067 = vsub.s32 0, %v1066
      %v1068 = vrot.slane %v1063, %v1067
      %v1070 = vadd.f32 %v1005, %v1068
      %v1071 = vadd.f32 %v1010, %v1068
      %v1072 = vadd.f32 %v1015, %v1068
      %v1073 = vadd.f32 %v1020, %v1068
      %v1074 = vadd.f32 %v1025, %v1068
      %v1075 = vadd.f32 %v1030, %v1068
      %v1076 = vadd.f32 %v1035, %v1068
      %v1077 = vadd.f32 %v1040, %v1068
      %v1078 = vadd.f32 %v1045, %v1068
      %v1079 = vadd.f32 %v1050, %v1068
      %v1080 = vadd.f32 %v1055, %v1068
      %v1081 = vadd.f32 %v1060, %v1068
      %v1082 = vtanh.pop %v1070
      %v1083 = vtanh.pop %v1071
      %v1084 = vtanh.pop %v1072
      %v1085 = vtanh.pop %v1073
      %v1086 = vtanh.pop %v1074
      %v1087 = vtanh.pop %v1075
      %v1088 = vtanh.pop %v1076
      %v1089 = vtanh.pop %v1077
      %v1090 = vtanh.pop %v1078
      %v1091 = vtanh.pop %v1079
      %v1092 = vtanh.pop %v1080
      %v1093 = vtanh.pop %v1081
      %v1094 = vxor.u32 %v1070, 2147483648
      %v1095 = vxor.u32 %v1071, 2147483648
      %v1096 = vxor.u32 %v1072, 2147483648
      %v1097 = vxor.u32 %v1073, 2147483648
      %v1098 = vxor.u32 %v1074, 2147483648
      %v1099 = vxor.u32 %v1075, 2147483648
      %v1100 = vxor.u32 %v1076, 2147483648
      %v1101 = vxor.u32 %v1077, 2147483648
      %v1102 = vxor.u32 %v1078, 2147483648
      %v1103 = vxor.u32 %v1079, 2147483648
      %v1104 = vxor.u32 %v1080, 2147483648
      %v1105 = vxor.u32 %v1081, 2147483648
      %v1106 = vmul.f32 %v1094, 1.442695
      %v1107 = vpow.pop %v1106
      %v1108 = vmul.f32 %v1095, 1.442695
      %v1109 = vpow.pop %v1108
      %v1110 = vmul.f32 %v1096, 1.442695
      %v1111 = vpow.pop %v1110
      %v1112 = vmul.f32 %v1097, 1.442695
      %v1113 = vpow.pop %v1112
      %v1114 = vmul.f32 %v1098, 1.442695
      %v1115 = vpow.pop %v1114
      %v1116 = vmul.f32 %v1099, 1.442695
      %v1117 = vpow.pop %v1116
      %v1118 = vmul.f32 %v1100, 1.442695
      %v1119 = vpow.pop %v1118
      %v1120 = vmul.f32 %v1101, 1.442695
      %v1121 = vpow.pop %v1120
      %v1122 = vmul.f32 %v1102, 1.442695
      %v1123 = vpow.pop %v1122
      %v1124 = vmul.f32 %v1103, 1.442695
      %v1125 = vpow.pop %v1124
      %v1126 = vmul.f32 %v1104, 1.442695
      %v1127 = vpow.pop %v1126
      %v1128 = vmul.f32 %v1105, 1.442695
      %v1129 = vpow.pop %v1128
      %v1130 = vadd.f32 %v1107, 1.0
      %v1131 = vadd.f32 %v1109, 1.0
      %v1132 = vadd.f32 %v1111, 1.0
      %v1133 = vadd.f32 %v1113, 1.0
      %v1134 = vadd.f32 %v1115, 1.0
      %v1135 = vadd.f32 %v1117, 1.0
      %v1136 = vadd.f32 %v1119, 1.0
      %v1137 = vadd.f32 %v1121, 1.0
      %v1138 = vadd.f32 %v1123, 1.0
      %v1139 = vadd.f32 %v1125, 1.0
      %v1140 = vadd.f32 %v1127, 1.0
      %v1141 = vadd.f32 %v1129, 1.0
      %v1142 = vrcp.pop %v1130
      %v1143 = vmul.f32 1.0, %v1142
      %v1144 = vrcp.pop %v1131
      %v1145 = vmul.f32 1.0, %v1144
      %v1146 = vrcp.pop %v1132
      %v1147 = vmul.f32 1.0, %v1146
      %v1148 = vrcp.pop %v1133
      %v1149 = vmul.f32 1.0, %v1148
      %v1150 = vrcp.pop %v1134
      %v1151 = vmul.f32 1.0, %v1150
      %v1152 = vrcp.pop %v1135
      %v1153 = vmul.f32 1.0, %v1152
      %v1154 = vrcp.pop %v1136
      %v1155 = vmul.f32 1.0, %v1154
      %v1156 = vrcp.pop %v1137
      %v1157 = vmul.f32 1.0, %v1156
      %v1158 = vrcp.pop %v1138
      %v1159 = vmul.f32 1.0, %v1158
      %v1160 = vrcp.pop %v1139
      %v1161 = vmul.f32 1.0, %v1160
      %v1162 = vrcp.pop %v1140
      %v1163 = vmul.f32 1.0, %v1162
      %v1164 = vrcp.pop %v1141
      %v1165 = vmul.f32 1.0, %v1164
      %1178 = vrot.lane.b32.xlu0 %v1143, 120
      %v1179 = vpop.permute.xlu0 %1178
      %1180 = vrot.lane.b32.xlu0 %v1145, 120
      %v1181 = vpop.permute.xlu0 %1180
      %1182 = vrot.lane.b32.xlu0 %v1147, 120
      %v1183 = vpop.permute.xlu0 %1182
      %1184 = vrot.lane.b32.xlu0 %v1149, 120
      %v1185 = vpop.permute.xlu0 %1184
      %1186 = vrot.lane.b32.xlu0 %v1151, 120
      %v1187 = vpop.permute.xlu0 %1186
      %1188 = vrot.lane.b32.xlu0 %v1153, 120
      %v1189 = vpop.permute.xlu0 %1188
      %1190 = vrot.lane.b32.xlu0 %v1155, 120
      %v1191 = vpop.permute.xlu0 %1190
      %1192 = vrot.lane.b32.xlu0 %v1157, 120
      %v1193 = vpop.permute.xlu0 %1192
      %1194 = vrot.lane.b32.xlu0 %v1159, 120
      %v1195 = vpop.permute.xlu0 %1194
      %1196 = vrot.lane.b32.xlu0 %v1161, 120
      %v1197 = vpop.permute.xlu0 %1196
      %1198 = vrot.lane.b32.xlu0 %v1163, 120
      %v1199 = vpop.permute.xlu0 %1198
      %1200 = vrot.lane.b32.xlu0 %v1165, 120
      %v1201 = vpop.permute.xlu0 %1200
      %v1214 = vmul.f32 %v1082, %v1179
      %v1215 = vmul.f32 %v1083, %v1181
      %v1216 = vmul.f32 %v1084, %v1183
      %v1217 = vmul.f32 %v1085, %v1185
      %v1218 = vmul.f32 %v1086, %v1187
      %v1219 = vmul.f32 %v1087, %v1189
      %v1220 = vmul.f32 %v1088, %v1191
      %v1221 = vmul.f32 %v1089, %v1193
      %v1222 = vmul.f32 %v1090, %v1195
      %v1223 = vmul.f32 %v1091, %v1197
      %v1224 = vmul.f32 %v1092, %v1199
      %v1225 = vmul.f32 %v1093, %v1201
      %v1226 = vld [vmem:[%s10] sm:$0xff]
      %v1227 = vld [vmem:[%s11] sm:$0x1]
      %v1229 = vlaneseq
      %v1230 = vshrl.u32 %v1229, 7
      %v1231 = vsub.s32 0, %v1230
      %v1232 = vrot.slane %v1227, %v1231
      %v1235 = vsel %vm773, %v1214, 0
      %v1238 = vsel %vm773, %v1215, 0
      %v1241 = vsel %vm773, %v1216, 0
      %v1244 = vsel %vm773, %v1217, 0
      %v1247 = vsel %vm773, %v1218, 0
      %v1250 = vsel %vm773, %v1219, 0
      %v1253 = vsel %vm773, %v1220, 0
      %v1256 = vsel %vm773, %v1221, 0
      %v1259 = vsel %vm773, %v1222, 0
      %v1262 = vsel %vm773, %v1223, 0
      %v1265 = vsel %vm773, %v1224, 0
      %v1268 = vsel %vm773, %v1225, 0
      %1270 = vmatprep.subr.mxu0 0.0
      %1271 = vmatpush1.msra.mxu0 0.0
      %1272 = vmatprep.subr.mxu0 0.0
      %1273 = vmatpush1.msra.mxu0 0.0
      %1274 = vmatprep.subr.mxu0 0.0
      %1275 = vmatpush1.msra.mxu0 0.0
      %1276 = vmatprep.subr.mxu0 0.0
      %1277 = vmatpush1.msra.mxu0 0.0
      %1278 = vmatprep.subr.mxu0 0.0
      %1279 = vmatpush1.msra.mxu0 0.0
      %1280 = vmatprep.subr.mxu0 0.0
      %1281 = vmatpush1.msra.mxu0 0.0
      %1282 = vmatprep.subr.mxu0 0.0
      %1283 = vmatpush1.msra.mxu0 0.0
      %1284 = vmatprep.subr.mxu0 0.0
      %1285 = vmatpush1.msra.mxu0 0.0
      %1286 = vmatprep.subr.mxu0 0.0
      %1287 = vmatpush1.msra.mxu0 0.0
      %1288 = vmatprep.subr.mxu0 0.0
      %1289 = vmatpush1.msra.mxu0 0.0
      %1290 = vmatprep.subr.mxu0 0.0
      %1291 = vmatpush1.msra.mxu0 0.0
      %1292 = vmatprep.subr.mxu0 0.0
      %1293 = vmatpush1.msra.mxu0 0.0
      %1294 = vmatprep.subr.mxu0 0.0
      %1295 = vmatpush1.msra.mxu0 0.0
      %1296 = vmatprep.subr.mxu0 0.0
      %1297 = vmatpush1.msra.mxu0 0.0
      %1298 = vmatprep.subr.mxu0 0.0
      %1299 = vmatpush1.msra.mxu0 0.0
      %1300 = vmatprep.subr.mxu0 0.0
      %1301 = vmatpush1.msra.mxu0 %v1226
      %1302 = vmatprep.subr.mxu0 0.0
      %1303 = vmatpush2.msra.mxu0 0.0
      %1304 = vmatprep.subr.mxu0 0.0
      %1305 = vmatpush2.msra.mxu0 0.0
      %1306 = vmatprep.subr.mxu0 0.0
      %1307 = vmatpush2.msra.mxu0 0.0
      %1308 = vmatprep.subr.mxu0 0.0
      %1309 = vmatpush2.msra.mxu0 0.0
      %1310 = vmatprep.subr.mxu0 0.0
      %1311 = vmatpush2.msra.mxu0 0.0
      %1312 = vmatprep.subr.mxu0 0.0
      %1313 = vmatpush2.msra.mxu0 0.0
      %1314 = vmatprep.subr.mxu0 0.0
      %1315 = vmatpush2.msra.mxu0 0.0
      %1316 = vmatprep.subr.mxu0 0.0
      %1317 = vmatpush2.msra.mxu0 0.0
      %1318 = vmatprep.subr.mxu0 0.0
      %1319 = vmatpush2.msra.mxu0 0.0
      %1320 = vmatprep.subr.mxu0 0.0
      %1321 = vmatpush2.msra.mxu0 0.0
      %1322 = vmatprep.subr.mxu0 0.0
      %1323 = vmatpush2.msra.mxu0 0.0
      %1324 = vmatprep.subr.mxu0 0.0
      %1325 = vmatpush2.msra.mxu0 0.0
      %1326 = vmatprep.subr.mxu0 0.0
      %1327 = vmatpush2.msra.mxu0 0.0
      %1328 = vmatprep.subr.mxu0 0.0
      %1329 = vmatpush2.msra.mxu0 0.0
      %1330 = vmatprep.subr.mxu0 0.0
      %1331 = vmatpush2.msra.mxu0 0.0
      %1332 = vmatprep.subr.mxu0 0.0
      %1333 = vmatpush2.msra.mxu0 0.0
      %1334 = vmatprep.mubr.f32.mxu0 0.0
      %1335 = vmatmul.mubr.f32.gmra.mxu0 %v1235
      %v1336 = vpop.f32.mrf.mxu0
      %v1337 = vpop.f32.mrf.mxu0
      %1338 = vmatprep.mubr.f32.mxu0 0.0
      %1339 = vmatmul.mubr.f32.gmra.mxu0 %v1238
      %v1340 = vpop.f32.mrf.mxu0
      %v1341 = vpop.f32.mrf.mxu0
      %1342 = vmatprep.mubr.f32.mxu0 0.0
      %1343 = vmatmul.mubr.f32.gmra.mxu0 %v1241
      %v1344 = vpop.f32.mrf.mxu0
      %v1345 = vpop.f32.mrf.mxu0
      %1346 = vmatprep.mubr.f32.mxu0 0.0
      %1347 = vmatmul.mubr.f32.gmra.mxu0 %v1244
      %v1348 = vpop.f32.mrf.mxu0
      %v1349 = vpop.f32.mrf.mxu0
      %1350 = vmatprep.mubr.f32.mxu0 0.0
      %1351 = vmatmul.mubr.f32.gmra.mxu0 %v1247
      %v1352 = vpop.f32.mrf.mxu0
      %v1353 = vpop.f32.mrf.mxu0
      %1354 = vmatprep.mubr.f32.mxu0 0.0
      %1355 = vmatmul.mubr.f32.gmra.mxu0 %v1250
      %v1356 = vpop.f32.mrf.mxu0
      %v1357 = vadd.f32 %v1232, %v1356
      %v1358 = vpop.f32.mrf.mxu0
      %1359 = vmatprep.mubr.f32.mxu0 0.0
      %1360 = vmatmul.mubr.f32.gmra.mxu0 %v1253
      %v1361 = vpop.f32.mrf.mxu0
      %v1362 = vadd.f32 %v1232, %v1361
      %v1363 = vpop.f32.mrf.mxu0
      %1364 = vmatprep.mubr.f32.mxu0 0.0
      %1365 = vmatmul.mubr.f32.gmra.mxu0 %v1256
      %v1366 = vpop.f32.mrf.mxu0
      %v1367 = vadd.f32 %v1232, %v1366
      %v1368 = vpop.f32.mrf.mxu0
      %1369 = vmatprep.mubr.f32.mxu0 0.0
      %1370 = vmatmul.mubr.f32.gmra.mxu0 %v1259
      %v1371 = vpop.f32.mrf.mxu0
      %v1372 = vadd.f32 %v1232, %v1371
      %v1373 = vpop.f32.mrf.mxu0
      %1374 = vmatprep.mubr.f32.mxu0 0.0
      %1375 = vmatmul.mubr.f32.gmra.mxu0 %v1262
      %v1376 = vpop.f32.mrf.mxu0
      %v1377 = vadd.f32 %v1232, %v1376
      %v1378 = vpop.f32.mrf.mxu0
      %1379 = vmatprep.mubr.f32.mxu0 0.0
      %1380 = vmatmul.mubr.f32.gmra.mxu0 %v1265
      %v1381 = vpop.f32.mrf.mxu0
      %v1382 = vadd.f32 %v1232, %v1381
      %v1383 = vpop.f32.mrf.mxu0
      %1384 = vmatprep.mubr.f32.mxu0 0.0
      %1385 = vmatmul.mubr.f32.gmra.mxu0 %v1268
      %v1386 = vpop.f32.mrf.mxu0
      %v1387 = vadd.f32 %v1232, %v1386
      %v1388 = vpop.f32.mrf.mxu0
      %1389 = vdwg.mxu0
      %v1390 = vld [vmem:[%s1] sm:$0xff]
      %v1391 = vld [vmem:[%s1 + $0x8] sm:$0xff]
      %v1392 = vld [vmem:[%s1 + $0x10] sm:$0xff]
      %v1393 = vld [vmem:[%s1 + $0x18] sm:$0xff]
      %v1394 = vld [vmem:[%s1 + $0x20] sm:$0xff]
      %v1395 = vld [vmem:[%s1 + $0x28] sm:$0xff]
      %v1396 = vld [vmem:[%s1 + $0x30] sm:$0xff]
      %v1397 = vld [vmem:[%s1 + $0x38] sm:$0xff]
      %v1398 = vld [vmem:[%s1 + $0x40] sm:$0xff]
      %v1399 = vld [vmem:[%s1 + $0x48] sm:$0xff]
      %v1400 = vld [vmem:[%s1 + $0x50] sm:$0xff]
      %v1401 = vld [vmem:[%s1 + $0x58] sm:$0xff]
      %vm1402 = vcmask 785408
      %v1404 = vsel %vm1402, %v1390, 0
      %v1407 = vsel %vm1402, %v1391, 0
      %v1410 = vsel %vm1402, %v1392, 0
      %v1413 = vsel %vm1402, %v1393, 0
      %v1416 = vsel %vm1402, %v1394, 0
      %v1419 = vsel %vm1402, %v1395, 0
      %v1422 = vsel %vm1402, %v1396, 0
      %v1425 = vsel %vm1402, %v1397, 0
      %v1428 = vsel %vm1402, %v1398, 0
      %v1431 = vsel %vm1402, %v1399, 0
      %v1434 = vsel %vm1402, %v1400, 0
      %v1437 = vsel %vm1402, %v1401, 0
      %1439 = vmatprep.subr.mxu0 0.0
      %1440 = vmatpush1.msra.mxu0 0.0
      %1441 = vmatprep.subr.mxu0 0.0
      %1442 = vmatpush1.msra.mxu0 0.0
      %1443 = vmatprep.subr.mxu0 0.0
      %1444 = vmatpush1.msra.mxu0 0.0
      %1445 = vmatprep.subr.mxu0 0.0
      %1446 = vmatpush1.msra.mxu0 0.0
      %1447 = vmatprep.subr.mxu0 0.0
      %1448 = vmatpush1.msra.mxu0 %v1225
      %1449 = vmatprep.subr.mxu0 0.0
      %1450 = vmatpush1.msra.mxu0 %v1224
      %1451 = vmatprep.subr.mxu0 0.0
      %1452 = vmatpush1.msra.mxu0 %v1223
      %1453 = vmatprep.subr.mxu0 0.0
      %1454 = vmatpush1.msra.mxu0 %v1222
      %1455 = vmatprep.subr.mxu0 0.0
      %1456 = vmatpush1.msra.mxu0 %v1221
      %1457 = vmatprep.subr.mxu0 0.0
      %1458 = vmatpush1.msra.mxu0 %v1220
      %1459 = vmatprep.subr.mxu0 0.0
      %1460 = vmatpush1.msra.mxu0 %v1219
      %1461 = vmatprep.subr.mxu0 0.0
      %1462 = vmatpush1.msra.mxu0 %v1218
      %1463 = vmatprep.subr.mxu0 0.0
      %1464 = vmatpush1.msra.mxu0 %v1217
      %1465 = vmatprep.subr.mxu0 0.0
      %1466 = vmatpush1.msra.mxu0 %v1216
      %1467 = vmatprep.subr.mxu0 0.0
      %1468 = vmatpush1.msra.mxu0 %v1215
      %1469 = vmatprep.subr.mxu0 0.0
      %1470 = vmatpush1.msra.mxu0 %v1214
      %1471 = vmatprep.subr.mxu0 0.0
      %1472 = vmatpush2.msra.mxu0 0.0
      %1473 = vmatprep.subr.mxu0 0.0
      %1474 = vmatpush2.msra.mxu0 0.0
      %1475 = vmatprep.subr.mxu0 0.0
      %1476 = vmatpush2.msra.mxu0 0.0
      %1477 = vmatprep.subr.mxu0 0.0
      %1478 = vmatpush2.msra.mxu0 0.0
      %1479 = vmatprep.subr.mxu0 0.0
      %1480 = vmatpush2.msra.mxu0 0.0
      %1481 = vmatprep.subr.mxu0 0.0
      %1482 = vmatpush2.msra.mxu0 0.0
      %1483 = vmatprep.subr.mxu0 0.0
      %1484 = vmatpush2.msra.mxu0 0.0
      %1485 = vmatprep.subr.mxu0 0.0
      %1486 = vmatpush2.msra.mxu0 0.0
      %1487 = vmatprep.subr.mxu0 0.0
      %1488 = vmatpush2.msra.mxu0 0.0
      %1489 = vmatprep.subr.mxu0 0.0
      %1490 = vmatpush2.msra.mxu0 0.0
      %1491 = vmatprep.subr.mxu0 0.0
      %1492 = vmatpush2.msra.mxu0 0.0
      %1493 = vmatprep.subr.mxu0 0.0
      %1494 = vmatpush2.msra.mxu0 0.0
      %1495 = vmatprep.subr.mxu0 0.0
      %1496 = vmatpush2.msra.mxu0 0.0
      %1497 = vmatprep.subr.mxu0 0.0
      %1498 = vmatpush2.msra.mxu0 0.0
      %1499 = vmatprep.subr.mxu0 0.0
      %1500 = vmatpush2.msra.mxu0 0.0
      %1501 = vmatprep.subr.mxu0 0.0
      %1502 = vmatpush2.msra.mxu0 0.0
      %1503 = vmatprep.mubr.f32.mxu0 0.0
      %1504 = vmatmul.mubr.f32.gmra.mxu0 %v1404
      %v1505 = vpop.f32.mrf.mxu0
      %v1506 = vadd.f32 0.0, %v1505
      %v1507 = vpop.f32.mrf.mxu0
      %1508 = vmatprep.mubr.f32.mxu0 0.0
      %1509 = vmatmul.mubr.f32.gmra.mxu0 %v1407
      %v1510 = vpop.f32.mrf.mxu0
      %v1511 = vadd.f32 0.0, %v1510
      %v1512 = vpop.f32.mrf.mxu0
      %1513 = vmatprep.mubr.f32.mxu0 0.0
      %1514 = vmatmul.mubr.f32.gmra.mxu0 %v1410
      %v1515 = vpop.f32.mrf.mxu0
      %v1516 = vadd.f32 0.0, %v1515
      %v1517 = vpop.f32.mrf.mxu0
      %1518 = vmatprep.mubr.f32.mxu0 0.0
      %1519 = vmatmul.mubr.f32.gmra.mxu0 %v1413
      %v1520 = vpop.f32.mrf.mxu0
      %v1521 = vadd.f32 0.0, %v1520
      %v1522 = vpop.f32.mrf.mxu0
      %1523 = vmatprep.mubr.f32.mxu0 0.0
      %1524 = vmatmul.mubr.f32.gmra.mxu0 %v1416
      %v1525 = vpop.f32.mrf.mxu0
      %v1526 = vadd.f32 0.0, %v1525
      %v1527 = vpop.f32.mrf.mxu0
      %1528 = vmatprep.mubr.f32.mxu0 0.0
      %1529 = vmatmul.mubr.f32.gmra.mxu0 %v1419
      %v1530 = vpop.f32.mrf.mxu0
      %v1531 = vadd.f32 0.0, %v1530
      %v1532 = vpop.f32.mrf.mxu0
      %1533 = vmatprep.mubr.f32.mxu0 0.0
      %1534 = vmatmul.mubr.f32.gmra.mxu0 %v1422
      %v1535 = vpop.f32.mrf.mxu0
      %v1536 = vadd.f32 0.0, %v1535
      %v1537 = vpop.f32.mrf.mxu0
      %1538 = vmatprep.mubr.f32.mxu0 0.0
      %1539 = vmatmul.mubr.f32.gmra.mxu0 %v1425
      %v1540 = vpop.f32.mrf.mxu0
      %v1541 = vadd.f32 0.0, %v1540
      %v1542 = vpop.f32.mrf.mxu0
      %1543 = vmatprep.mubr.f32.mxu0 0.0
      %1544 = vmatmul.mubr.f32.gmra.mxu0 %v1428
      %v1545 = vpop.f32.mrf.mxu0
      %v1546 = vadd.f32 0.0, %v1545
      %v1547 = vpop.f32.mrf.mxu0
      %1548 = vmatprep.mubr.f32.mxu0 0.0
      %1549 = vmatmul.mubr.f32.gmra.mxu0 %v1431
      %v1550 = vpop.f32.mrf.mxu0
      %v1551 = vadd.f32 0.0, %v1550
      %v1552 = vpop.f32.mrf.mxu0
      %1553 = vmatprep.mubr.f32.mxu0 0.0
      %1554 = vmatmul.mubr.f32.gmra.mxu0 %v1434
      %v1555 = vpop.f32.mrf.mxu0
      %v1556 = vadd.f32 0.0, %v1555
      %v1557 = vpop.f32.mrf.mxu0
      %1558 = vmatprep.mubr.f32.mxu0 0.0
      %1559 = vmatmul.mubr.f32.gmra.mxu0 %v1437
      %v1560 = vpop.f32.mrf.mxu0
      %v1561 = vadd.f32 0.0, %v1560
      %v1562 = vpop.f32.mrf.mxu0
      %1563 = vdwg.mxu0
      %1564 = vmatprep.subr.mxu0 0.0
      %1565 = vmatpush1.msra.mxu0 0.0
      %1566 = vmatprep.subr.mxu0 0.0
      %1567 = vmatpush1.msra.mxu0 0.0
      %1568 = vmatprep.subr.mxu0 0.0
      %1569 = vmatpush1.msra.mxu0 0.0
      %1570 = vmatprep.subr.mxu0 0.0
      %1571 = vmatpush1.msra.mxu0 0.0
      %1572 = vmatprep.subr.mxu0 0.0
      %1573 = vmatpush1.msra.mxu0 %v1561
      %1574 = vmatprep.subr.mxu0 0.0
      %1575 = vmatpush1.msra.mxu0 %v1556
      %1576 = vmatprep.subr.mxu0 0.0
      %1577 = vmatpush1.msra.mxu0 %v1551
      %1578 = vmatprep.subr.mxu0 0.0
      %1579 = vmatpush1.msra.mxu0 %v1546
      %1580 = vmatprep.subr.mxu0 0.0
      %1581 = vmatpush1.msra.mxu0 %v1541
      %1582 = vmatprep.subr.mxu0 0.0
      %1583 = vmatpush1.msra.mxu0 %v1536
      %1584 = vmatprep.subr.mxu0 0.0
      %1585 = vmatpush1.msra.mxu0 %v1531
      %1586 = vmatprep.subr.mxu0 0.0
      %1587 = vmatpush1.msra.mxu0 %v1526
      %1588 = vmatprep.subr.mxu0 0.0
      %1589 = vmatpush1.msra.mxu0 %v1521
      %1590 = vmatprep.subr.mxu0 0.0
      %1591 = vmatpush1.msra.mxu0 %v1516
      %1592 = vmatprep.subr.mxu0 0.0
      %1593 = vmatpush1.msra.mxu0 %v1511
      %1594 = vmatprep.subr.mxu0 0.0
      %1595 = vmatpush1.msra.mxu0 %v1506
      %1596 = vmatprep.subr.mxu0 0.0
      %1597 = vmatpush2.msra.mxu0 0.0
      %1598 = vmatprep.subr.mxu0 0.0
      %1599 = vmatpush2.msra.mxu0 0.0
      %1600 = vmatprep.subr.mxu0 0.0
      %1601 = vmatpush2.msra.mxu0 0.0
      %1602 = vmatprep.subr.mxu0 0.0
      %1603 = vmatpush2.msra.mxu0 0.0
      %1604 = vmatprep.subr.mxu0 0.0
      %1605 = vmatpush2.msra.mxu0 0.0
      %1606 = vmatprep.subr.mxu0 0.0
      %1607 = vmatpush2.msra.mxu0 0.0
      %1608 = vmatprep.subr.mxu0 0.0
      %1609 = vmatpush2.msra.mxu0 0.0
      %1610 = vmatprep.subr.mxu0 0.0
      %1611 = vmatpush2.msra.mxu0 0.0
      %1612 = vmatprep.subr.mxu0 0.0
      %1613 = vmatpush2.msra.mxu0 0.0
      %1614 = vmatprep.subr.mxu0 0.0
      %1615 = vmatpush2.msra.mxu0 0.0
      %1616 = vmatprep.subr.mxu0 0.0
      %1617 = vmatpush2.msra.mxu0 0.0
      %1618 = vmatprep.subr.mxu0 0.0
      %1619 = vmatpush2.msra.mxu0 0.0
      %1620 = vmatprep.subr.mxu0 0.0
      %1621 = vmatpush2.msra.mxu0 0.0
      %1622 = vmatprep.subr.mxu0 0.0
      %1623 = vmatpush2.msra.mxu0 0.0
      %1624 = vmatprep.subr.mxu0 0.0
      %1625 = vmatpush2.msra.mxu0 0.0
      %1626 = vmatprep.subr.mxu0 0.0
      %1627 = vmatpush2.msra.mxu0 0.0
      %1628 = vmatprep.mubr.f32.mxu0 0.0
      %1629 = vmatmul.mubr.f32.gmra.mxu0 %v1404
      %v1630 = vpop.f32.mrf.mxu0
      %v1631 = vadd.f32 0.0, %v1630
      %v1632 = vpop.f32.mrf.mxu0
      %1633 = vmatprep.mubr.f32.mxu0 0.0
      %1634 = vmatmul.mubr.f32.gmra.mxu0 %v1407
      %v1635 = vpop.f32.mrf.mxu0
      %v1636 = vadd.f32 0.0, %v1635
      %v1637 = vpop.f32.mrf.mxu0
      %1638 = vmatprep.mubr.f32.mxu0 0.0
      %1639 = vmatmul.mubr.f32.gmra.mxu0 %v1410
      %v1640 = vpop.f32.mrf.mxu0
      %v1641 = vadd.f32 0.0, %v1640
      %v1642 = vpop.f32.mrf.mxu0
      %1643 = vmatprep.mubr.f32.mxu0 0.0
      %1644 = vmatmul.mubr.f32.gmra.mxu0 %v1413
      %v1645 = vpop.f32.mrf.mxu0
      %v1646 = vadd.f32 0.0, %v1645
      %v1647 = vpop.f32.mrf.mxu0
      %1648 = vmatprep.mubr.f32.mxu0 0.0
      %1649 = vmatmul.mubr.f32.gmra.mxu0 %v1416
      %v1650 = vpop.f32.mrf.mxu0
      %v1651 = vadd.f32 0.0, %v1650
      %v1652 = vpop.f32.mrf.mxu0
      %1653 = vmatprep.mubr.f32.mxu0 0.0
      %1654 = vmatmul.mubr.f32.gmra.mxu0 %v1419
      %v1655 = vpop.f32.mrf.mxu0
      %v1656 = vadd.f32 0.0, %v1655
      %v1657 = vpop.f32.mrf.mxu0
      %1658 = vmatprep.mubr.f32.mxu0 0.0
      %1659 = vmatmul.mubr.f32.gmra.mxu0 %v1422
      %v1660 = vpop.f32.mrf.mxu0
      %v1661 = vadd.f32 0.0, %v1660
      %v1662 = vpop.f32.mrf.mxu0
      %1663 = vmatprep.mubr.f32.mxu0 0.0
      %1664 = vmatmul.mubr.f32.gmra.mxu0 %v1425
      %v1665 = vpop.f32.mrf.mxu0
      %v1666 = vadd.f32 0.0, %v1665
      %v1667 = vpop.f32.mrf.mxu0
      %1668 = vmatprep.mubr.f32.mxu0 0.0
      %1669 = vmatmul.mubr.f32.gmra.mxu0 %v1428
      %v1670 = vpop.f32.mrf.mxu0
      %v1671 = vadd.f32 0.0, %v1670
      %v1672 = vpop.f32.mrf.mxu0
      %1673 = vmatprep.mubr.f32.mxu0 0.0
      %1674 = vmatmul.mubr.f32.gmra.mxu0 %v1431
      %v1675 = vpop.f32.mrf.mxu0
      %v1676 = vadd.f32 0.0, %v1675
      %v1677 = vpop.f32.mrf.mxu0
      %1678 = vmatprep.mubr.f32.mxu0 0.0
      %1679 = vmatmul.mubr.f32.gmra.mxu0 %v1434
      %v1680 = vpop.f32.mrf.mxu0
      %v1681 = vadd.f32 0.0, %v1680
      %v1682 = vpop.f32.mrf.mxu0
      %1683 = vmatprep.mubr.f32.mxu0 0.0
      %1684 = vmatmul.mubr.f32.gmra.mxu0 %v1437
      %v1685 = vpop.f32.mrf.mxu0
      %v1686 = vadd.f32 0.0, %v1685
      %v1687 = vpop.f32.mrf.mxu0
      %1688 = vdwg.mxu0
      %v1689 = vld [vmem:[%s12] sm:$0xff]
      %s1690 = scalar_lea.vmem %s12, 8
      %v1691 = vld [vmem:[%s1690] sm:$0xff]
      %v1693 = vsel %vm773, %v1506, 0
      %v1696 = vsel %vm773, %v1511, 0
      %v1699 = vsel %vm773, %v1516, 0
      %v1702 = vsel %vm773, %v1521, 0
      %v1705 = vsel %vm773, %v1526, 0
      %v1708 = vsel %vm773, %v1531, 0
      %v1711 = vsel %vm773, %v1536, 0
      %v1714 = vsel %vm773, %v1541, 0
      %v1717 = vsel %vm773, %v1546, 0
      %v1720 = vsel %vm773, %v1551, 0
      %v1723 = vsel %vm773, %v1556, 0
      %v1726 = vsel %vm773, %v1561, 0
      %1728 = vmatprep.subr.mxu0 0.0
      %1729 = vmatpush1.msra.mxu0 0.0
      %1730 = vmatprep.subr.mxu0 0.0
      %1731 = vmatpush1.msra.mxu0 0.0
      %1732 = vmatprep.subr.mxu0 0.0
      %1733 = vmatpush1.msra.mxu0 0.0
      %1734 = vmatprep.subr.mxu0 0.0
      %1735 = vmatpush1.msra.mxu0 0.0
      %1736 = vmatprep.subr.mxu0 0.0
      %1737 = vmatpush1.msra.mxu0 0.0
      %1738 = vmatprep.subr.mxu0 0.0
      %1739 = vmatpush1.msra.mxu0 0.0
      %1740 = vmatprep.subr.mxu0 0.0
      %1741 = vmatpush1.msra.mxu0 0.0
      %1742 = vmatprep.subr.mxu0 0.0
      %1743 = vmatpush1.msra.mxu0 0.0
      %1744 = vmatprep.subr.mxu0 0.0
      %1745 = vmatpush1.msra.mxu0 0.0
      %1746 = vmatprep.subr.mxu0 0.0
      %1747 = vmatpush1.msra.mxu0 0.0
      %1748 = vmatprep.subr.mxu0 0.0
      %1749 = vmatpush1.msra.mxu0 0.0
      %1750 = vmatprep.subr.mxu0 0.0
      %1751 = vmatpush1.msra.mxu0 0.0
      %1752 = vmatprep.subr.mxu0 0.0
      %1753 = vmatpush1.msra.mxu0 0.0
      %1754 = vmatprep.subr.mxu0 0.0
      %1755 = vmatpush1.msra.mxu0 0.0
      %1756 = vmatprep.subr.mxu0 0.0
      %1757 = vmatpush1.msra.mxu0 0.0
      %1758 = vmatprep.subr.mxu0 0.0
      %1759 = vmatpush1.msra.mxu0 %v1691
      %1760 = vmatprep.subr.mxu0 0.0
      %1761 = vmatpush2.msra.mxu0 0.0
      %1762 = vmatprep.subr.mxu0 0.0
      %1763 = vmatpush2.msra.mxu0 0.0
      %1764 = vmatprep.subr.mxu0 0.0
      %1765 = vmatpush2.msra.mxu0 0.0
      %1766 = vmatprep.subr.mxu0 0.0
      %1767 = vmatpush2.msra.mxu0 0.0
      %1768 = vmatprep.subr.mxu0 0.0
      %1769 = vmatpush2.msra.mxu0 0.0
      %1770 = vmatprep.subr.mxu0 0.0
      %1771 = vmatpush2.msra.mxu0 0.0
      %1772 = vmatprep.subr.mxu0 0.0
      %1773 = vmatpush2.msra.mxu0 0.0
      %1774 = vmatprep.subr.mxu0 0.0
      %1775 = vmatpush2.msra.mxu0 0.0
      %1776 = vmatprep.subr.mxu0 0.0
      %1777 = vmatpush2.msra.mxu0 0.0
      %1778 = vmatprep.subr.mxu0 0.0
      %1779 = vmatpush2.msra.mxu0 0.0
      %1780 = vmatprep.subr.mxu0 0.0
      %1781 = vmatpush2.msra.mxu0 0.0
      %1782 = vmatprep.subr.mxu0 0.0
      %1783 = vmatpush2.msra.mxu0 0.0
      %1784 = vmatprep.subr.mxu0 0.0
      %1785 = vmatpush2.msra.mxu0 0.0
      %1786 = vmatprep.subr.mxu0 0.0
      %1787 = vmatpush2.msra.mxu0 0.0
      %1788 = vmatprep.subr.mxu0 0.0
      %1789 = vmatpush2.msra.mxu0 0.0
      %1790 = vmatprep.subr.mxu0 0.0
      %1791 = vmatpush2.msra.mxu0 0.0
      %1792 = vmatprep.mubr.f32.mxu0 0.0
      %1793 = vmatmul.mubr.f32.gmra.mxu0 %v1693
      %v1794 = vpop.f32.mrf.mxu0
      %v1795 = vadd.f32 0.0, %v1794
      %v1796 = vpop.f32.mrf.mxu0
      %1797 = vmatprep.mubr.f32.mxu0 0.0
      %1798 = vmatmul.mubr.f32.gmra.mxu0 %v1696
      %v1799 = vpop.f32.mrf.mxu0
      %v1800 = vadd.f32 0.0, %v1799
      %v1801 = vpop.f32.mrf.mxu0
      %1802 = vmatprep.mubr.f32.mxu0 0.0
      %1803 = vmatmul.mubr.f32.gmra.mxu0 %v1699
      %v1804 = vpop.f32.mrf.mxu0
      %v1805 = vadd.f32 0.0, %v1804
      %v1806 = vpop.f32.mrf.mxu0
      %1807 = vmatprep.mubr.f32.mxu0 0.0
      %1808 = vmatmul.mubr.f32.gmra.mxu0 %v1702
      %v1809 = vpop.f32.mrf.mxu0
      %v1810 = vadd.f32 0.0, %v1809
      %v1811 = vpop.f32.mrf.mxu0
      %1812 = vmatprep.mubr.f32.mxu0 0.0
      %1813 = vmatmul.mubr.f32.gmra.mxu0 %v1705
      %v1814 = vpop.f32.mrf.mxu0
      %v1815 = vadd.f32 0.0, %v1814
      %v1816 = vpop.f32.mrf.mxu0
      %1817 = vmatprep.mubr.f32.mxu0 0.0
      %1818 = vmatmul.mubr.f32.gmra.mxu0 %v1708
      %v1819 = vpop.f32.mrf.mxu0
      %v1820 = vadd.f32 0.0, %v1819
      %v1821 = vpop.f32.mrf.mxu0
      %1822 = vmatprep.mubr.f32.mxu0 0.0
      %1823 = vmatmul.mubr.f32.gmra.mxu0 %v1711
      %v1824 = vpop.f32.mrf.mxu0
      %v1825 = vadd.f32 0.0, %v1824
      %v1826 = vpop.f32.mrf.mxu0
      %1827 = vmatprep.mubr.f32.mxu0 0.0
      %1828 = vmatmul.mubr.f32.gmra.mxu0 %v1714
      %v1829 = vpop.f32.mrf.mxu0
      %v1830 = vadd.f32 0.0, %v1829
      %v1831 = vpop.f32.mrf.mxu0
      %1832 = vmatprep.mubr.f32.mxu0 0.0
      %1833 = vmatmul.mubr.f32.gmra.mxu0 %v1717
      %v1834 = vpop.f32.mrf.mxu0
      %v1835 = vadd.f32 0.0, %v1834
      %v1836 = vpop.f32.mrf.mxu0
      %1837 = vmatprep.mubr.f32.mxu0 0.0
      %1838 = vmatmul.mubr.f32.gmra.mxu0 %v1720
      %v1839 = vpop.f32.mrf.mxu0
      %v1840 = vadd.f32 0.0, %v1839
      %v1841 = vpop.f32.mrf.mxu0
      %1842 = vmatprep.mubr.f32.mxu0 0.0
      %1843 = vmatmul.mubr.f32.gmra.mxu0 %v1723
      %v1844 = vpop.f32.mrf.mxu0
      %v1845 = vadd.f32 0.0, %v1844
      %v1846 = vpop.f32.mrf.mxu0
      %1847 = vmatprep.mubr.f32.mxu0 0.0
      %1848 = vmatmul.mubr.f32.gmra.mxu0 %v1726
      %v1849 = vpop.f32.mrf.mxu0
      %v1850 = vadd.f32 0.0, %v1849
      %v1851 = vpop.f32.mrf.mxu0
      %1852 = vdwg.mxu0
      %1853 = vmatprep.subr.mxu0 0.0
      %1854 = vmatpush1.msra.mxu0 0.0
      %1855 = vmatprep.subr.mxu0 0.0
      %1856 = vmatpush1.msra.mxu0 0.0
      %1857 = vmatprep.subr.mxu0 0.0
      %1858 = vmatpush1.msra.mxu0 0.0
      %1859 = vmatprep.subr.mxu0 0.0
      %1860 = vmatpush1.msra.mxu0 0.0
      %1861 = vmatprep.subr.mxu0 0.0
      %1862 = vmatpush1.msra.mxu0 0.0
      %1863 = vmatprep.subr.mxu0 0.0
      %1864 = vmatpush1.msra.mxu0 0.0
      %1865 = vmatprep.subr.mxu0 0.0
      %1866 = vmatpush1.msra.mxu0 0.0
      %1867 = vmatprep.subr.mxu0 0.0
      %1868 = vmatpush1.msra.mxu0 0.0
      %1869 = vmatprep.subr.mxu0 0.0
      %1870 = vmatpush1.msra.mxu0 0.0
      %1871 = vmatprep.subr.mxu0 0.0
      %1872 = vmatpush1.msra.mxu0 0.0
      %1873 = vmatprep.subr.mxu0 0.0
      %1874 = vmatpush1.msra.mxu0 0.0
      %1875 = vmatprep.subr.mxu0 0.0
      %1876 = vmatpush1.msra.mxu0 0.0
      %1877 = vmatprep.subr.mxu0 0.0
      %1878 = vmatpush1.msra.mxu0 0.0
      %1879 = vmatprep.subr.mxu0 0.0
      %1880 = vmatpush1.msra.mxu0 0.0
      %1881 = vmatprep.subr.mxu0 0.0
      %1882 = vmatpush1.msra.mxu0 0.0
      %1883 = vmatprep.subr.mxu0 0.0
      %1884 = vmatpush1.msra.mxu0 %v1689
      %1885 = vmatprep.subr.mxu0 0.0
      %1886 = vmatpush2.msra.mxu0 0.0
      %1887 = vmatprep.subr.mxu0 0.0
      %1888 = vmatpush2.msra.mxu0 0.0
      %1889 = vmatprep.subr.mxu0 0.0
      %1890 = vmatpush2.msra.mxu0 0.0
      %1891 = vmatprep.subr.mxu0 0.0
      %1892 = vmatpush2.msra.mxu0 0.0
      %1893 = vmatprep.subr.mxu0 0.0
      %1894 = vmatpush2.msra.mxu0 0.0
      %1895 = vmatprep.subr.mxu0 0.0
      %1896 = vmatpush2.msra.mxu0 0.0
      %1897 = vmatprep.subr.mxu0 0.0
      %1898 = vmatpush2.msra.mxu0 0.0
      %1899 = vmatprep.subr.mxu0 0.0
      %1900 = vmatpush2.msra.mxu0 0.0
      %1901 = vmatprep.subr.mxu0 0.0
      %1902 = vmatpush2.msra.mxu0 0.0
      %1903 = vmatprep.subr.mxu0 0.0
      %1904 = vmatpush2.msra.mxu0 0.0
      %1905 = vmatprep.subr.mxu0 0.0
      %1906 = vmatpush2.msra.mxu0 0.0
      %1907 = vmatprep.subr.mxu0 0.0
      %1908 = vmatpush2.msra.mxu0 0.0
      %1909 = vmatprep.subr.mxu0 0.0
      %1910 = vmatpush2.msra.mxu0 0.0
      %1911 = vmatprep.subr.mxu0 0.0
      %1912 = vmatpush2.msra.mxu0 0.0
      %1913 = vmatprep.subr.mxu0 0.0
      %1914 = vmatpush2.msra.mxu0 0.0
      %1915 = vmatprep.subr.mxu0 0.0
      %1916 = vmatpush2.msra.mxu0 0.0
      %1917 = vmatprep.mubr.f32.mxu0 0.0
      %1918 = vmatmul.mubr.f32.gmra.mxu0 %v1235
      %v1919 = vpop.f32.mrf.mxu0
      %v1920 = vadd.f32 %v1795, %v1919
      %v1921 = vpop.f32.mrf.mxu0
      %1922 = vmatprep.mubr.f32.mxu0 0.0
      %1923 = vmatmul.mubr.f32.gmra.mxu0 %v1238
      %v1924 = vpop.f32.mrf.mxu0
      %v1925 = vadd.f32 %v1800, %v1924
      %v1926 = vpop.f32.mrf.mxu0
      %1927 = vmatprep.mubr.f32.mxu0 0.0
      %1928 = vmatmul.mubr.f32.gmra.mxu0 %v1241
      %v1929 = vpop.f32.mrf.mxu0
      %v1930 = vadd.f32 %v1805, %v1929
      %v1931 = vpop.f32.mrf.mxu0
      %1932 = vmatprep.mubr.f32.mxu0 0.0
      %1933 = vmatmul.mubr.f32.gmra.mxu0 %v1244
      %v1934 = vpop.f32.mrf.mxu0
      %v1935 = vadd.f32 %v1810, %v1934
      %v1936 = vpop.f32.mrf.mxu0
      %1937 = vmatprep.mubr.f32.mxu0 0.0
      %1938 = vmatmul.mubr.f32.gmra.mxu0 %v1247
      %v1939 = vpop.f32.mrf.mxu0
      %v1940 = vadd.f32 %v1815, %v1939
      %v1941 = vpop.f32.mrf.mxu0
      %1942 = vmatprep.mubr.f32.mxu0 0.0
      %1943 = vmatmul.mubr.f32.gmra.mxu0 %v1250
      %v1944 = vpop.f32.mrf.mxu0
      %v1945 = vadd.f32 %v1820, %v1944
      %v1946 = vpop.f32.mrf.mxu0
      %1947 = vmatprep.mubr.f32.mxu0 0.0
      %1948 = vmatmul.mubr.f32.gmra.mxu0 %v1253
      %v1949 = vpop.f32.mrf.mxu0
      %v1950 = vadd.f32 %v1825, %v1949
      %v1951 = vpop.f32.mrf.mxu0
      %1952 = vmatprep.mubr.f32.mxu0 0.0
      %1953 = vmatmul.mubr.f32.gmra.mxu0 %v1256
      %v1954 = vpop.f32.mrf.mxu0
      %v1955 = vadd.f32 %v1830, %v1954
      %v1956 = vpop.f32.mrf.mxu0
      %1957 = vmatprep.mubr.f32.mxu0 0.0
      %1958 = vmatmul.mubr.f32.gmra.mxu0 %v1259
      %v1959 = vpop.f32.mrf.mxu0
      %v1960 = vadd.f32 %v1835, %v1959
      %v1961 = vpop.f32.mrf.mxu0
      %1962 = vmatprep.mubr.f32.mxu0 0.0
      %1963 = vmatmul.mubr.f32.gmra.mxu0 %v1262
      %v1964 = vpop.f32.mrf.mxu0
      %v1965 = vadd.f32 %v1840, %v1964
      %v1966 = vpop.f32.mrf.mxu0
      %1967 = vmatprep.mubr.f32.mxu0 0.0
      %1968 = vmatmul.mubr.f32.gmra.mxu0 %v1265
      %v1969 = vpop.f32.mrf.mxu0
      %v1970 = vadd.f32 %v1845, %v1969
      %v1971 = vpop.f32.mrf.mxu0
      %1972 = vmatprep.mubr.f32.mxu0 0.0
      %1973 = vmatmul.mubr.f32.gmra.mxu0 %v1268
      %v1974 = vpop.f32.mrf.mxu0
      %v1975 = vadd.f32 %v1850, %v1974
      %v1976 = vpop.f32.mrf.mxu0
      %1977 = vdwg.mxu0
      %s1978 = scalar_lea.vmem %s12, 16
      %v1979 = vld [vmem:[%s1978] sm:$0xff]
      %v1981 = vsel %vm773, %v1631, 0
      %v1984 = vsel %vm773, %v1636, 0
      %v1987 = vsel %vm773, %v1641, 0
      %v1990 = vsel %vm773, %v1646, 0
      %v1993 = vsel %vm773, %v1651, 0
      %v1996 = vsel %vm773, %v1656, 0
      %v1999 = vsel %vm773, %v1661, 0
      %v2002 = vsel %vm773, %v1666, 0
      %v2005 = vsel %vm773, %v1671, 0
      %v2008 = vsel %vm773, %v1676, 0
      %v2011 = vsel %vm773, %v1681, 0
      %v2014 = vsel %vm773, %v1686, 0
      %2016 = vmatprep.subr.mxu0 0.0
      %2017 = vmatpush1.msra.mxu0 0.0
      %2018 = vmatprep.subr.mxu0 0.0
      %2019 = vmatpush1.msra.mxu0 0.0
      %2020 = vmatprep.subr.mxu0 0.0
      %2021 = vmatpush1.msra.mxu0 0.0
      %2022 = vmatprep.subr.mxu0 0.0
      %2023 = vmatpush1.msra.mxu0 0.0
      %2024 = vmatprep.subr.mxu0 0.0
      %2025 = vmatpush1.msra.mxu0 0.0
      %2026 = vmatprep.subr.mxu0 0.0
      %2027 = vmatpush1.msra.mxu0 0.0
      %2028 = vmatprep.subr.mxu0 0.0
      %2029 = vmatpush1.msra.mxu0 0.0
      %2030 = vmatprep.subr.mxu0 0.0
      %2031 = vmatpush1.msra.mxu0 0.0
      %2032 = vmatprep.subr.mxu0 0.0
      %2033 = vmatpush1.msra.mxu0 0.0
      %2034 = vmatprep.subr.mxu0 0.0
      %2035 = vmatpush1.msra.mxu0 0.0
      %2036 = vmatprep.subr.mxu0 0.0
      %2037 = vmatpush1.msra.mxu0 0.0
      %2038 = vmatprep.subr.mxu0 0.0
      %2039 = vmatpush1.msra.mxu0 0.0
      %2040 = vmatprep.subr.mxu0 0.0
      %2041 = vmatpush1.msra.mxu0 0.0
      %2042 = vmatprep.subr.mxu0 0.0
      %2043 = vmatpush1.msra.mxu0 0.0
      %2044 = vmatprep.subr.mxu0 0.0
      %2045 = vmatpush1.msra.mxu0 0.0
      %2046 = vmatprep.subr.mxu0 0.0
      %2047 = vmatpush1.msra.mxu0 %v1979
      %2048 = vmatprep.subr.mxu0 0.0
      %2049 = vmatpush2.msra.mxu0 0.0
      %2050 = vmatprep.subr.mxu0 0.0
      %2051 = vmatpush2.msra.mxu0 0.0
      %2052 = vmatprep.subr.mxu0 0.0
      %2053 = vmatpush2.msra.mxu0 0.0
      %2054 = vmatprep.subr.mxu0 0.0
      %2055 = vmatpush2.msra.mxu0 0.0
      %2056 = vmatprep.subr.mxu0 0.0
      %2057 = vmatpush2.msra.mxu0 0.0
      %2058 = vmatprep.subr.mxu0 0.0
      %2059 = vmatpush2.msra.mxu0 0.0
      %2060 = vmatprep.subr.mxu0 0.0
      %2061 = vmatpush2.msra.mxu0 0.0
      %2062 = vmatprep.subr.mxu0 0.0
      %2063 = vmatpush2.msra.mxu0 0.0
      %2064 = vmatprep.subr.mxu0 0.0
      %2065 = vmatpush2.msra.mxu0 0.0
      %2066 = vmatprep.subr.mxu0 0.0
      %2067 = vmatpush2.msra.mxu0 0.0
      %2068 = vmatprep.subr.mxu0 0.0
      %2069 = vmatpush2.msra.mxu0 0.0
      %2070 = vmatprep.subr.mxu0 0.0
      %2071 = vmatpush2.msra.mxu0 0.0
      %2072 = vmatprep.subr.mxu0 0.0
      %2073 = vmatpush2.msra.mxu0 0.0
      %2074 = vmatprep.subr.mxu0 0.0
      %2075 = vmatpush2.msra.mxu0 0.0
      %2076 = vmatprep.subr.mxu0 0.0
      %2077 = vmatpush2.msra.mxu0 0.0
      %2078 = vmatprep.subr.mxu0 0.0
      %2079 = vmatpush2.msra.mxu0 0.0
      %2080 = vmatprep.mubr.f32.mxu0 0.0
      %2081 = vmatmul.mubr.f32.gmra.mxu0 %v1981
      %v2082 = vpop.f32.mrf.mxu0
      %v2083 = vadd.f32 0.0, %v2082
      %v2084 = vpop.f32.mrf.mxu0
      %2085 = vmatprep.mubr.f32.mxu0 0.0
      %2086 = vmatmul.mubr.f32.gmra.mxu0 %v1984
      %v2087 = vpop.f32.mrf.mxu0
      %v2088 = vadd.f32 0.0, %v2087
      %v2089 = vpop.f32.mrf.mxu0
      %2090 = vmatprep.mubr.f32.mxu0 0.0
      %2091 = vmatmul.mubr.f32.gmra.mxu0 %v1987
      %v2092 = vpop.f32.mrf.mxu0
      %v2093 = vadd.f32 0.0, %v2092
      %v2094 = vpop.f32.mrf.mxu0
      %2095 = vmatprep.mubr.f32.mxu0 0.0
      %2096 = vmatmul.mubr.f32.gmra.mxu0 %v1990
      %v2097 = vpop.f32.mrf.mxu0
      %v2098 = vadd.f32 0.0, %v2097
      %v2099 = vpop.f32.mrf.mxu0
      %2100 = vmatprep.mubr.f32.mxu0 0.0
      %2101 = vmatmul.mubr.f32.gmra.mxu0 %v1993
      %v2102 = vpop.f32.mrf.mxu0
      %v2103 = vadd.f32 0.0, %v2102
      %v2104 = vpop.f32.mrf.mxu0
      %2105 = vmatprep.mubr.f32.mxu0 0.0
      %2106 = vmatmul.mubr.f32.gmra.mxu0 %v1996
      %v2107 = vpop.f32.mrf.mxu0
      %v2108 = vadd.f32 0.0, %v2107
      %v2109 = vpop.f32.mrf.mxu0
      %2110 = vmatprep.mubr.f32.mxu0 0.0
      %2111 = vmatmul.mubr.f32.gmra.mxu0 %v1999
      %v2112 = vpop.f32.mrf.mxu0
      %v2113 = vadd.f32 0.0, %v2112
      %v2114 = vpop.f32.mrf.mxu0
      %2115 = vmatprep.mubr.f32.mxu0 0.0
      %2116 = vmatmul.mubr.f32.gmra.mxu0 %v2002
      %v2117 = vpop.f32.mrf.mxu0
      %v2118 = vadd.f32 0.0, %v2117
      %v2119 = vpop.f32.mrf.mxu0
      %2120 = vmatprep.mubr.f32.mxu0 0.0
      %2121 = vmatmul.mubr.f32.gmra.mxu0 %v2005
      %v2122 = vpop.f32.mrf.mxu0
      %v2123 = vadd.f32 0.0, %v2122
      %v2124 = vpop.f32.mrf.mxu0
      %2125 = vmatprep.mubr.f32.mxu0 0.0
      %2126 = vmatmul.mubr.f32.gmra.mxu0 %v2008
      %v2127 = vpop.f32.mrf.mxu0
      %v2128 = vadd.f32 0.0, %v2127
      %v2129 = vpop.f32.mrf.mxu0
      %2130 = vmatprep.mubr.f32.mxu0 0.0
      %2131 = vmatmul.mubr.f32.gmra.mxu0 %v2011
      %v2132 = vpop.f32.mrf.mxu0
      %v2133 = vadd.f32 0.0, %v2132
      %v2134 = vpop.f32.mrf.mxu0
      %2135 = vmatprep.mubr.f32.mxu0 0.0
      %2136 = vmatmul.mubr.f32.gmra.mxu0 %v2014
      %v2137 = vpop.f32.mrf.mxu0
      %v2138 = vadd.f32 0.0, %v2137
      %v2139 = vpop.f32.mrf.mxu0
      %2140 = vdwg.mxu0
      %v2141 = vadd.f32 %v1920, %v2083
      %v2142 = vadd.f32 %v1925, %v2088
      %v2143 = vadd.f32 %v1930, %v2093
      %v2144 = vadd.f32 %v1935, %v2098
      %v2145 = vadd.f32 %v1940, %v2103
      %v2146 = vadd.f32 %v1945, %v2108
      %v2147 = vadd.f32 %v1950, %v2113
      %v2148 = vadd.f32 %v1955, %v2118
      %v2149 = vadd.f32 %v1960, %v2123
      %v2150 = vadd.f32 %v1965, %v2128
      %v2151 = vadd.f32 %v1970, %v2133
      %v2152 = vadd.f32 %v1975, %v2138
      %v2153 = vld [vmem:[%s13] sm:$0x1]
      %v2155 = vlaneseq
      %v2156 = vshrl.u32 %v2155, 7
      %v2157 = vsub.s32 0, %v2156
      %v2158 = vrot.slane %v2153, %v2157
      %v2160 = vadd.f32 %v2141, %v2158
      %v2161 = vadd.f32 %v2142, %v2158
      %v2162 = vadd.f32 %v2143, %v2158
      %v2163 = vadd.f32 %v2144, %v2158
      %v2164 = vadd.f32 %v2145, %v2158
      %v2165 = vadd.f32 %v2146, %v2158
      %v2166 = vadd.f32 %v2147, %v2158
      %v2167 = vadd.f32 %v2148, %v2158
      %v2168 = vadd.f32 %v2149, %v2158
      %v2169 = vadd.f32 %v2150, %v2158
      %v2170 = vadd.f32 %v2151, %v2158
      %v2171 = vadd.f32 %v2152, %v2158
      %v2172 = vadd.f32 %v2160, %v713
      %v2173 = vadd.f32 %v2161, %v718
      %v2174 = vadd.f32 %v2162, %v723
      %v2175 = vadd.f32 %v2163, %v728
      %v2176 = vadd.f32 %v2164, %v733
      %v2177 = vadd.f32 %v2165, %v738
      %v2178 = vadd.f32 %v2166, %v743
      %v2179 = vadd.f32 %v2167, %v748
      %v2180 = vadd.f32 %v2168, %v753
      %v2181 = vadd.f32 %v2169, %v758
      %v2182 = vadd.f32 %v2170, %v763
      %v2183 = vadd.f32 %v2171, %v768
      %s2184 = scalar_lea.vmem %s7, 8
      %v2185 = vld [vmem:[%s2184] sm:$0xff]
      %s2186 = scalar_lea.vmem %s8, 8
      %v2187 = vld [vmem:[%s2186] sm:$0xff]
      %v2189 = vsel %vm773, %v2174, 0
      %v2192 = vsel %vm773, %v2175, 0
      %v2195 = vsel %vm773, %v2176, 0
      %v2198 = vsel %vm773, %v2177, 0
      %v2201 = vsel %vm773, %v2178, 0
      %v2204 = vsel %vm773, %v2179, 0
      %v2207 = vsel %vm773, %v2180, 0
      %v2210 = vsel %vm773, %v2181, 0
      %v2213 = vsel %vm773, %v2182, 0
      %v2216 = vsel %vm773, %v2183, 0
      %2218 = vmatprep.subr.mxu0 0.0
      %2219 = vmatpush1.msra.mxu0 0.0
      %2220 = vmatprep.subr.mxu0 0.0
      %2221 = vmatpush1.msra.mxu0 0.0
      %2222 = vmatprep.subr.mxu0 0.0
      %2223 = vmatpush1.msra.mxu0 0.0
      %2224 = vmatprep.subr.mxu0 0.0
      %2225 = vmatpush1.msra.mxu0 0.0
      %2226 = vmatprep.subr.mxu0 0.0
      %2227 = vmatpush1.msra.mxu0 0.0
      %2228 = vmatprep.subr.mxu0 0.0
      %2229 = vmatpush1.msra.mxu0 0.0
      %2230 = vmatprep.subr.mxu0 0.0
      %2231 = vmatpush1.msra.mxu0 0.0
      %2232 = vmatprep.subr.mxu0 0.0
      %2233 = vmatpush1.msra.mxu0 0.0
      %2234 = vmatprep.subr.mxu0 0.0
      %2235 = vmatpush1.msra.mxu0 0.0
      %2236 = vmatprep.subr.mxu0 0.0
      %2237 = vmatpush1.msra.mxu0 0.0
      %2238 = vmatprep.subr.mxu0 0.0
      %2239 = vmatpush1.msra.mxu0 0.0
      %2240 = vmatprep.subr.mxu0 0.0
      %2241 = vmatpush1.msra.mxu0 0.0
      %2242 = vmatprep.subr.mxu0 0.0
      %2243 = vmatpush1.msra.mxu0 0.0
      %2244 = vmatprep.subr.mxu0 0.0
      %2245 = vmatpush1.msra.mxu0 0.0
      %2246 = vmatprep.subr.mxu0 0.0
      %2247 = vmatpush1.msra.mxu0 0.0
      %2248 = vmatprep.subr.mxu0 0.0
      %2249 = vmatpush1.msra.mxu0 %v2187
      %2250 = vmatprep.subr.mxu0 0.0
      %2251 = vmatpush2.msra.mxu0 0.0
      %2252 = vmatprep.subr.mxu0 0.0
      %2253 = vmatpush2.msra.mxu0 0.0
      %2254 = vmatprep.subr.mxu0 0.0
      %2255 = vmatpush2.msra.mxu0 0.0
      %2256 = vmatprep.subr.mxu0 0.0
      %2257 = vmatpush2.msra.mxu0 0.0
      %2258 = vmatprep.subr.mxu0 0.0
      %2259 = vmatpush2.msra.mxu0 0.0
      %2260 = vmatprep.subr.mxu0 0.0
      %2261 = vmatpush2.msra.mxu0 0.0
      %2262 = vmatprep.subr.mxu0 0.0
      %2263 = vmatpush2.msra.mxu0 0.0
      %2264 = vmatprep.subr.mxu0 0.0
      %2265 = vmatpush2.msra.mxu0 0.0
      %2266 = vmatprep.subr.mxu0 0.0
      %2267 = vmatpush2.msra.mxu0 0.0
      %2268 = vmatprep.subr.mxu0 0.0
      %2269 = vmatpush2.msra.mxu0 0.0
      %2270 = vmatprep.subr.mxu0 0.0
      %2271 = vmatpush2.msra.mxu0 0.0
      %2272 = vmatprep.subr.mxu0 0.0
      %2273 = vmatpush2.msra.mxu0 0.0
      %2274 = vmatprep.subr.mxu0 0.0
      %2275 = vmatpush2.msra.mxu0 0.0
      %2276 = vmatprep.subr.mxu0 0.0
      %2277 = vmatpush2.msra.mxu0 0.0
      %2278 = vmatprep.subr.mxu0 0.0
      %2279 = vmatpush2.msra.mxu0 0.0
      %2280 = vmatprep.subr.mxu0 0.0
      %2281 = vmatpush2.msra.mxu0 0.0
      %2282 = vmatprep.mubr.f32.mxu0 0.0
      %2283 = vmatmul.mubr.f32.gmra.mxu0 %v2189
      %v2284 = vpop.f32.mrf.mxu0
      %v2285 = vadd.f32 0.0, %v2284
      %v2286 = vpop.f32.mrf.mxu0
      %2287 = vmatprep.mubr.f32.mxu0 0.0
      %2288 = vmatmul.mubr.f32.gmra.mxu0 %v2192
      %v2289 = vpop.f32.mrf.mxu0
      %v2290 = vadd.f32 0.0, %v2289
      %v2291 = vpop.f32.mrf.mxu0
      %2292 = vmatprep.mubr.f32.mxu0 0.0
      %2293 = vmatmul.mubr.f32.gmra.mxu0 %v2195
      %v2294 = vpop.f32.mrf.mxu0
      %v2295 = vadd.f32 0.0, %v2294
      %v2296 = vpop.f32.mrf.mxu0
      %2297 = vmatprep.mubr.f32.mxu0 0.0
      %2298 = vmatmul.mubr.f32.gmra.mxu0 %v2198
      %v2299 = vpop.f32.mrf.mxu0
      %v2300 = vadd.f32 0.0, %v2299
      %v2301 = vpop.f32.mrf.mxu0
      %2302 = vmatprep.mubr.f32.mxu0 0.0
      %2303 = vmatmul.mubr.f32.gmra.mxu0 %v2201
      %v2304 = vpop.f32.mrf.mxu0
      %v2305 = vadd.f32 0.0, %v2304
      %v2306 = vpop.f32.mrf.mxu0
      %2307 = vmatprep.mubr.f32.mxu0 0.0
      %2308 = vmatmul.mubr.f32.gmra.mxu0 %v2204
      %v2309 = vpop.f32.mrf.mxu0
      %v2310 = vadd.f32 0.0, %v2309
      %v2311 = vpop.f32.mrf.mxu0
      %2312 = vmatprep.mubr.f32.mxu0 0.0
      %2313 = vmatmul.mubr.f32.gmra.mxu0 %v2207
      %v2314 = vpop.f32.mrf.mxu0
      %v2315 = vadd.f32 0.0, %v2314
      %v2316 = vpop.f32.mrf.mxu0
      %2317 = vmatprep.mubr.f32.mxu0 0.0
      %2318 = vmatmul.mubr.f32.gmra.mxu0 %v2210
      %v2319 = vpop.f32.mrf.mxu0
      %v2320 = vadd.f32 0.0, %v2319
      %v2321 = vpop.f32.mrf.mxu0
      %2322 = vmatprep.mubr.f32.mxu0 0.0
      %2323 = vmatmul.mubr.f32.gmra.mxu0 %v2213
      %v2324 = vpop.f32.mrf.mxu0
      %v2325 = vadd.f32 0.0, %v2324
      %v2326 = vpop.f32.mrf.mxu0
      %2327 = vmatprep.mubr.f32.mxu0 0.0
      %2328 = vmatmul.mubr.f32.gmra.mxu0 %v2216
      %v2329 = vpop.f32.mrf.mxu0
      %v2330 = vadd.f32 0.0, %v2329
      %v2331 = vpop.f32.mrf.mxu0
      %2332 = vdwg.mxu0
      %v2334 = vsel %vm773, %v2172, 0
      %v2337 = vsel %vm773, %v2173, 0
      %2339 = vmatprep.subr.mxu0 0.0
      %2340 = vmatpush1.msra.mxu0 0.0
      %2341 = vmatprep.subr.mxu0 0.0
      %2342 = vmatpush1.msra.mxu0 0.0
      %2343 = vmatprep.subr.mxu0 0.0
      %2344 = vmatpush1.msra.mxu0 0.0
      %2345 = vmatprep.subr.mxu0 0.0
      %2346 = vmatpush1.msra.mxu0 0.0
      %2347 = vmatprep.subr.mxu0 0.0
      %2348 = vmatpush1.msra.mxu0 0.0
      %2349 = vmatprep.subr.mxu0 0.0
      %2350 = vmatpush1.msra.mxu0 0.0
      %2351 = vmatprep.subr.mxu0 0.0
      %2352 = vmatpush1.msra.mxu0 0.0
      %2353 = vmatprep.subr.mxu0 0.0
      %2354 = vmatpush1.msra.mxu0 0.0
      %2355 = vmatprep.subr.mxu0 0.0
      %2356 = vmatpush1.msra.mxu0 0.0
      %2357 = vmatprep.subr.mxu0 0.0
      %2358 = vmatpush1.msra.mxu0 0.0
      %2359 = vmatprep.subr.mxu0 0.0
      %2360 = vmatpush1.msra.mxu0 0.0
      %2361 = vmatprep.subr.mxu0 0.0
      %2362 = vmatpush1.msra.mxu0 0.0
      %2363 = vmatprep.subr.mxu0 0.0
      %2364 = vmatpush1.msra.mxu0 0.0
      %2365 = vmatprep.subr.mxu0 0.0
      %2366 = vmatpush1.msra.mxu0 0.0
      %2367 = vmatprep.subr.mxu0 0.0
      %2368 = vmatpush1.msra.mxu0 0.0
      %2369 = vmatprep.subr.mxu0 0.0
      %2370 = vmatpush1.msra.mxu0 %v2185
      %2371 = vmatprep.subr.mxu0 0.0
      %2372 = vmatpush2.msra.mxu0 0.0
      %2373 = vmatprep.subr.mxu0 0.0
      %2374 = vmatpush2.msra.mxu0 0.0
      %2375 = vmatprep.subr.mxu0 0.0
      %2376 = vmatpush2.msra.mxu0 0.0
      %2377 = vmatprep.subr.mxu0 0.0
      %2378 = vmatpush2.msra.mxu0 0.0
      %2379 = vmatprep.subr.mxu0 0.0
      %2380 = vmatpush2.msra.mxu0 0.0
      %2381 = vmatprep.subr.mxu0 0.0
      %2382 = vmatpush2.msra.mxu0 0.0
      %2383 = vmatprep.subr.mxu0 0.0
      %2384 = vmatpush2.msra.mxu0 0.0
      %2385 = vmatprep.subr.mxu0 0.0
      %2386 = vmatpush2.msra.mxu0 0.0
      %2387 = vmatprep.subr.mxu0 0.0
      %2388 = vmatpush2.msra.mxu0 0.0
      %2389 = vmatprep.subr.mxu0 0.0
      %2390 = vmatpush2.msra.mxu0 0.0
      %2391 = vmatprep.subr.mxu0 0.0
      %2392 = vmatpush2.msra.mxu0 0.0
      %2393 = vmatprep.subr.mxu0 0.0
      %2394 = vmatpush2.msra.mxu0 0.0
      %2395 = vmatprep.subr.mxu0 0.0
      %2396 = vmatpush2.msra.mxu0 0.0
      %2397 = vmatprep.subr.mxu0 0.0
      %2398 = vmatpush2.msra.mxu0 0.0
      %2399 = vmatprep.subr.mxu0 0.0
      %2400 = vmatpush2.msra.mxu0 0.0
      %2401 = vmatprep.subr.mxu0 0.0
      %2402 = vmatpush2.msra.mxu0 0.0
      %2403 = vmatprep.mubr.f32.mxu0 0.0
      %2404 = vmatmul.mubr.f32.gmra.mxu0 %v2334
      %v2405 = vpop.f32.mrf.mxu0
      %v2406 = vadd.f32 %v2285, %v2405
      %v2407 = vpop.f32.mrf.mxu0
      %2408 = vmatprep.mubr.f32.mxu0 0.0
      %2409 = vmatmul.mubr.f32.gmra.mxu0 %v2337
      %v2410 = vpop.f32.mrf.mxu0
      %v2411 = vadd.f32 %v2290, %v2410
      %v2412 = vpop.f32.mrf.mxu0
      %2413 = vmatprep.mubr.f32.mxu0 0.0
      %2414 = vmatmul.mubr.f32.gmra.mxu0 %v2189
      %v2415 = vpop.f32.mrf.mxu0
      %v2416 = vadd.f32 %v2295, %v2415
      %v2417 = vpop.f32.mrf.mxu0
      %2418 = vmatprep.mubr.f32.mxu0 0.0
      %2419 = vmatmul.mubr.f32.gmra.mxu0 %v2192
      %v2420 = vpop.f32.mrf.mxu0
      %v2421 = vadd.f32 %v2300, %v2420
      %v2422 = vpop.f32.mrf.mxu0
      %2423 = vmatprep.mubr.f32.mxu0 0.0
      %2424 = vmatmul.mubr.f32.gmra.mxu0 %v2195
      %v2425 = vpop.f32.mrf.mxu0
      %v2426 = vadd.f32 %v2305, %v2425
      %v2427 = vpop.f32.mrf.mxu0
      %2428 = vmatprep.mubr.f32.mxu0 0.0
      %2429 = vmatmul.mubr.f32.gmra.mxu0 %v2198
      %v2430 = vpop.f32.mrf.mxu0
      %v2431 = vadd.f32 %v2310, %v2430
      %v2432 = vpop.f32.mrf.mxu0
      %2433 = vmatprep.mubr.f32.mxu0 0.0
      %2434 = vmatmul.mubr.f32.gmra.mxu0 %v2201
      %v2435 = vpop.f32.mrf.mxu0
      %v2436 = vadd.f32 %v2315, %v2435
      %v2437 = vpop.f32.mrf.mxu0
      %2438 = vmatprep.mubr.f32.mxu0 0.0
      %2439 = vmatmul.mubr.f32.gmra.mxu0 %v2204
      %v2440 = vpop.f32.mrf.mxu0
      %v2441 = vadd.f32 %v2320, %v2440
      %v2442 = vpop.f32.mrf.mxu0
      %2443 = vmatprep.mubr.f32.mxu0 0.0
      %2444 = vmatmul.mubr.f32.gmra.mxu0 %v2207
      %v2445 = vpop.f32.mrf.mxu0
      %v2446 = vadd.f32 %v2325, %v2445
      %v2447 = vpop.f32.mrf.mxu0
      %2448 = vmatprep.mubr.f32.mxu0 0.0
      %2449 = vmatmul.mubr.f32.gmra.mxu0 %v2210
      %v2450 = vpop.f32.mrf.mxu0
      %v2451 = vadd.f32 %v2330, %v2450
      %v2452 = vpop.f32.mrf.mxu0
      %2453 = vdwg.mxu0
      %s2454 = scalar_lea.vmem %s9, 1
      %v2455 = vld [vmem:[%s2454] sm:$0x1]
      %v2457 = vlaneseq
      %v2458 = vshrl.u32 %v2457, 7
      %v2459 = vsub.s32 0, %v2458
      %v2460 = vrot.slane %v2455, %v2459
      %v2462 = vadd.f32 %v2406, %v2460
      %v2463 = vadd.f32 %v2411, %v2460
      %v2464 = vadd.f32 %v2416, %v2460
      %v2465 = vadd.f32 %v2421, %v2460
      %v2466 = vadd.f32 %v2426, %v2460
      %v2467 = vadd.f32 %v2431, %v2460
      %v2468 = vadd.f32 %v2436, %v2460
      %v2469 = vadd.f32 %v2441, %v2460
      %v2470 = vadd.f32 %v2446, %v2460
      %v2471 = vadd.f32 %v2451, %v2460
      %v2472 = vtanh.pop %v2462
      %v2473 = vtanh.pop %v2463
      %v2474 = vtanh.pop %v2464
      %v2475 = vtanh.pop %v2465
      %v2476 = vtanh.pop %v2466
      %v2477 = vtanh.pop %v2467
      %v2478 = vtanh.pop %v2468
      %v2479 = vtanh.pop %v2469
      %v2480 = vtanh.pop %v2470
      %v2481 = vtanh.pop %v2471
      %v2482 = vxor.u32 %v2462, 2147483648
      %v2483 = vxor.u32 %v2463, 2147483648
      %v2484 = vxor.u32 %v2464, 2147483648
      %v2485 = vxor.u32 %v2465, 2147483648
      %v2486 = vxor.u32 %v2466, 2147483648
      %v2487 = vxor.u32 %v2467, 2147483648
      %v2488 = vxor.u32 %v2468, 2147483648
      %v2489 = vxor.u32 %v2469, 2147483648
      %v2490 = vxor.u32 %v2470, 2147483648
      %v2491 = vxor.u32 %v2471, 2147483648
      %v2492 = vmul.f32 %v2482, 1.442695
      %v2493 = vpow.pop %v2492
      %v2494 = vmul.f32 %v2483, 1.442695
      %v2495 = vpow.pop %v2494
      %v2496 = vmul.f32 %v2484, 1.442695
      %v2497 = vpow.pop %v2496
      %v2498 = vmul.f32 %v2485, 1.442695
      %v2499 = vpow.pop %v2498
      %v2500 = vmul.f32 %v2486, 1.442695
      %v2501 = vpow.pop %v2500
      %v2502 = vmul.f32 %v2487, 1.442695
      %v2503 = vpow.pop %v2502
      %v2504 = vmul.f32 %v2488, 1.442695
      %v2505 = vpow.pop %v2504
      %v2506 = vmul.f32 %v2489, 1.442695
      %v2507 = vpow.pop %v2506
      %v2508 = vmul.f32 %v2490, 1.442695
      %v2509 = vpow.pop %v2508
      %v2510 = vmul.f32 %v2491, 1.442695
      %v2511 = vpow.pop %v2510
      %v2512 = vadd.f32 %v2493, 1.0
      %v2513 = vadd.f32 %v2495, 1.0
      %v2514 = vadd.f32 %v2497, 1.0
      %v2515 = vadd.f32 %v2499, 1.0
      %v2516 = vadd.f32 %v2501, 1.0
      %v2517 = vadd.f32 %v2503, 1.0
      %v2518 = vadd.f32 %v2505, 1.0
      %v2519 = vadd.f32 %v2507, 1.0
      %v2520 = vadd.f32 %v2509, 1.0
      %v2521 = vadd.f32 %v2511, 1.0
      %v2522 = vrcp.pop %v2512
      %v2523 = vmul.f32 1.0, %v2522
      %v2524 = vrcp.pop %v2513
      %v2525 = vmul.f32 1.0, %v2524
      %v2526 = vrcp.pop %v2514
      %v2527 = vmul.f32 1.0, %v2526
      %v2528 = vrcp.pop %v2515
      %v2529 = vmul.f32 1.0, %v2528
      %v2530 = vrcp.pop %v2516
      %v2531 = vmul.f32 1.0, %v2530
      %v2532 = vrcp.pop %v2517
      %v2533 = vmul.f32 1.0, %v2532
      %v2534 = vrcp.pop %v2518
      %v2535 = vmul.f32 1.0, %v2534
      %v2536 = vrcp.pop %v2519
      %v2537 = vmul.f32 1.0, %v2536
      %v2538 = vrcp.pop %v2520
      %v2539 = vmul.f32 1.0, %v2538
      %v2540 = vrcp.pop %v2521
      %v2541 = vmul.f32 1.0, %v2540
      %2552 = vrot.lane.b32.xlu0 %v2523, 120
      %v2553 = vpop.permute.xlu0 %2552
      %2554 = vrot.lane.b32.xlu0 %v2525, 120
      %v2555 = vpop.permute.xlu0 %2554
      %2556 = vrot.lane.b32.xlu0 %v2527, 120
      %v2557 = vpop.permute.xlu0 %2556
      %2558 = vrot.lane.b32.xlu0 %v2529, 120
      %v2559 = vpop.permute.xlu0 %2558
      %2560 = vrot.lane.b32.xlu0 %v2531, 120
      %v2561 = vpop.permute.xlu0 %2560
      %2562 = vrot.lane.b32.xlu0 %v2533, 120
      %v2563 = vpop.permute.xlu0 %2562
      %2564 = vrot.lane.b32.xlu0 %v2535, 120
      %v2565 = vpop.permute.xlu0 %2564
      %2566 = vrot.lane.b32.xlu0 %v2537, 120
      %v2567 = vpop.permute.xlu0 %2566
      %2568 = vrot.lane.b32.xlu0 %v2539, 120
      %v2569 = vpop.permute.xlu0 %2568
      %2570 = vrot.lane.b32.xlu0 %v2541, 120
      %v2571 = vpop.permute.xlu0 %2570
      %v2582 = vmul.f32 %v2472, %v2553
      %v2583 = vmul.f32 %v2473, %v2555
      %v2584 = vmul.f32 %v2474, %v2557
      %v2585 = vmul.f32 %v2475, %v2559
      %v2586 = vmul.f32 %v2476, %v2561
      %v2587 = vmul.f32 %v2477, %v2563
      %v2588 = vmul.f32 %v2478, %v2565
      %v2589 = vmul.f32 %v2479, %v2567
      %v2590 = vmul.f32 %v2480, %v2569
      %v2591 = vmul.f32 %v2481, %v2571
      %s2592 = scalar_lea.vmem %s10, 8
      %v2593 = vld [vmem:[%s2592] sm:$0xff]
      %s2594 = scalar_lea.vmem %s11, 1
      %v2595 = vld [vmem:[%s2594] sm:$0x1]
      %v2597 = vlaneseq
      %v2598 = vshrl.u32 %v2597, 7
      %v2599 = vsub.s32 0, %v2598
      %v2600 = vrot.slane %v2595, %v2599
      %v2603 = vsel %vm773, %v2582, 0
      %v2606 = vsel %vm773, %v2583, 0
      %v2609 = vsel %vm773, %v2584, 0
      %v2612 = vsel %vm773, %v2585, 0
      %v2615 = vsel %vm773, %v2586, 0
      %v2618 = vsel %vm773, %v2587, 0
      %v2621 = vsel %vm773, %v2588, 0
      %v2624 = vsel %vm773, %v2589, 0
      %v2627 = vsel %vm773, %v2590, 0
      %v2630 = vsel %vm773, %v2591, 0
      %2632 = vmatprep.subr.mxu0 0.0
      %2633 = vmatpush1.msra.mxu0 0.0
      %2634 = vmatprep.subr.mxu0 0.0
      %2635 = vmatpush1.msra.mxu0 0.0
      %2636 = vmatprep.subr.mxu0 0.0
      %2637 = vmatpush1.msra.mxu0 0.0
      %2638 = vmatprep.subr.mxu0 0.0
      %2639 = vmatpush1.msra.mxu0 0.0
      %2640 = vmatprep.subr.mxu0 0.0
      %2641 = vmatpush1.msra.mxu0 0.0
      %2642 = vmatprep.subr.mxu0 0.0
      %2643 = vmatpush1.msra.mxu0 0.0
      %2644 = vmatprep.subr.mxu0 0.0
      %2645 = vmatpush1.msra.mxu0 0.0
      %2646 = vmatprep.subr.mxu0 0.0
      %2647 = vmatpush1.msra.mxu0 0.0
      %2648 = vmatprep.subr.mxu0 0.0
      %2649 = vmatpush1.msra.mxu0 0.0
      %2650 = vmatprep.subr.mxu0 0.0
      %2651 = vmatpush1.msra.mxu0 0.0
      %2652 = vmatprep.subr.mxu0 0.0
      %2653 = vmatpush1.msra.mxu0 0.0
      %2654 = vmatprep.subr.mxu0 0.0
      %2655 = vmatpush1.msra.mxu0 0.0
      %2656 = vmatprep.subr.mxu0 0.0
      %2657 = vmatpush1.msra.mxu0 0.0
      %2658 = vmatprep.subr.mxu0 0.0
      %2659 = vmatpush1.msra.mxu0 0.0
      %2660 = vmatprep.subr.mxu0 0.0
      %2661 = vmatpush1.msra.mxu0 0.0
      %2662 = vmatprep.subr.mxu0 0.0
      %2663 = vmatpush1.msra.mxu0 %v2593
      %2664 = vmatprep.subr.mxu0 0.0
      %2665 = vmatpush2.msra.mxu0 0.0
      %2666 = vmatprep.subr.mxu0 0.0
      %2667 = vmatpush2.msra.mxu0 0.0
      %2668 = vmatprep.subr.mxu0 0.0
      %2669 = vmatpush2.msra.mxu0 0.0
      %2670 = vmatprep.subr.mxu0 0.0
      %2671 = vmatpush2.msra.mxu0 0.0
      %2672 = vmatprep.subr.mxu0 0.0
      %2673 = vmatpush2.msra.mxu0 0.0
      %2674 = vmatprep.subr.mxu0 0.0
      %2675 = vmatpush2.msra.mxu0 0.0
      %2676 = vmatprep.subr.mxu0 0.0
      %2677 = vmatpush2.msra.mxu0 0.0
      %2678 = vmatprep.subr.mxu0 0.0
      %2679 = vmatpush2.msra.mxu0 0.0
      %2680 = vmatprep.subr.mxu0 0.0
      %2681 = vmatpush2.msra.mxu0 0.0
      %2682 = vmatprep.subr.mxu0 0.0
      %2683 = vmatpush2.msra.mxu0 0.0
      %2684 = vmatprep.subr.mxu0 0.0
      %2685 = vmatpush2.msra.mxu0 0.0
      %2686 = vmatprep.subr.mxu0 0.0
      %2687 = vmatpush2.msra.mxu0 0.0
      %2688 = vmatprep.subr.mxu0 0.0
      %2689 = vmatpush2.msra.mxu0 0.0
      %2690 = vmatprep.subr.mxu0 0.0
      %2691 = vmatpush2.msra.mxu0 0.0
      %2692 = vmatprep.subr.mxu0 0.0
      %2693 = vmatpush2.msra.mxu0 0.0
      %2694 = vmatprep.subr.mxu0 0.0
      %2695 = vmatpush2.msra.mxu0 0.0
      %2696 = vmatprep.mubr.f32.mxu0 0.0
      %2697 = vmatmul.mubr.f32.gmra.mxu0 %v2603
      %v2698 = vpop.f32.mrf.mxu0
      %v2699 = vpop.f32.mrf.mxu0
      %2700 = vmatprep.mubr.f32.mxu0 0.0
      %2701 = vmatmul.mubr.f32.gmra.mxu0 %v2606
      %v2702 = vpop.f32.mrf.mxu0
      %v2703 = vpop.f32.mrf.mxu0
      %2704 = vmatprep.mubr.f32.mxu0 0.0
      %2705 = vmatmul.mubr.f32.gmra.mxu0 %v2609
      %v2706 = vpop.f32.mrf.mxu0
      %v2707 = vpop.f32.mrf.mxu0
      %2708 = vmatprep.mubr.f32.mxu0 0.0
      %2709 = vmatmul.mubr.f32.gmra.mxu0 %v2612
      %v2710 = vpop.f32.mrf.mxu0
      %v2711 = vadd.f32 %v2600, %v2710
      %v2712 = vpop.f32.mrf.mxu0
      %2713 = vmatprep.mubr.f32.mxu0 0.0
      %2714 = vmatmul.mubr.f32.gmra.mxu0 %v2615
      %v2715 = vpop.f32.mrf.mxu0
      %v2716 = vadd.f32 %v2600, %v2715
      %v2717 = vpop.f32.mrf.mxu0
      %2718 = vmatprep.mubr.f32.mxu0 0.0
      %2719 = vmatmul.mubr.f32.gmra.mxu0 %v2618
      %v2720 = vpop.f32.mrf.mxu0
      %v2721 = vadd.f32 %v2600, %v2720
      %v2722 = vpop.f32.mrf.mxu0
      %2723 = vmatprep.mubr.f32.mxu0 0.0
      %2724 = vmatmul.mubr.f32.gmra.mxu0 %v2621
      %v2725 = vpop.f32.mrf.mxu0
      %v2726 = vadd.f32 %v2600, %v2725
      %v2727 = vpop.f32.mrf.mxu0
      %2728 = vmatprep.mubr.f32.mxu0 0.0
      %2729 = vmatmul.mubr.f32.gmra.mxu0 %v2624
      %v2730 = vpop.f32.mrf.mxu0
      %v2731 = vadd.f32 %v2600, %v2730
      %v2732 = vpop.f32.mrf.mxu0
      %2733 = vmatprep.mubr.f32.mxu0 0.0
      %2734 = vmatmul.mubr.f32.gmra.mxu0 %v2627
      %v2735 = vpop.f32.mrf.mxu0
      %v2736 = vadd.f32 %v2600, %v2735
      %v2737 = vpop.f32.mrf.mxu0
      %2738 = vmatprep.mubr.f32.mxu0 0.0
      %2739 = vmatmul.mubr.f32.gmra.mxu0 %v2630
      %v2740 = vpop.f32.mrf.mxu0
      %v2741 = vadd.f32 %v2600, %v2740
      %v2742 = vpop.f32.mrf.mxu0
      %2743 = vdwg.mxu0
      %v2744 = vadd.f32 %v1357, %v2711
      %v2745 = vadd.f32 %v1362, %v2716
      %v2746 = vadd.f32 %v1367, %v2721
      %v2747 = vadd.f32 %v1372, %v2726
      %v2748 = vadd.f32 %v1377, %v2731
      %v2749 = vadd.f32 %v1382, %v2736
      %v2750 = vadd.f32 %v1387, %v2741
      %v2751 = vld [vmem:[%s2] sm:$0xff]
      %v2752 = vld [vmem:[%s2 + $0x8] sm:$0xff]
      %v2753 = vld [vmem:[%s2 + $0x10] sm:$0xff]
      %v2754 = vld [vmem:[%s2 + $0x18] sm:$0xff]
      %v2755 = vld [vmem:[%s2 + $0x20] sm:$0xff]
      %v2756 = vld [vmem:[%s2 + $0x28] sm:$0xff]
      %v2757 = vld [vmem:[%s2 + $0x30] sm:$0xff]
      %v2758 = vld [vmem:[%s2 + $0x38] sm:$0xff]
      %v2759 = vld [vmem:[%s2 + $0x40] sm:$0xff]
      %v2760 = vld [vmem:[%s2 + $0x48] sm:$0xff]
      %vm2761 = vcmask 654336
      %v2763 = vsel %vm2761, %v2751, 0
      %v2766 = vsel %vm2761, %v2752, 0
      %v2769 = vsel %vm2761, %v2753, 0
      %v2772 = vsel %vm2761, %v2754, 0
      %v2775 = vsel %vm2761, %v2755, 0
      %v2778 = vsel %vm2761, %v2756, 0
      %v2781 = vsel %vm2761, %v2757, 0
      %v2784 = vsel %vm2761, %v2758, 0
      %v2787 = vsel %vm2761, %v2759, 0
      %v2790 = vsel %vm2761, %v2760, 0
      %2792 = vmatprep.subr.mxu0 0.0
      %2793 = vmatpush1.msra.mxu0 0.0
      %2794 = vmatprep.subr.mxu0 0.0
      %2795 = vmatpush1.msra.mxu0 0.0
      %2796 = vmatprep.subr.mxu0 0.0
      %2797 = vmatpush1.msra.mxu0 0.0
      %2798 = vmatprep.subr.mxu0 0.0
      %2799 = vmatpush1.msra.mxu0 0.0
      %2800 = vmatprep.subr.mxu0 0.0
      %2801 = vmatpush1.msra.mxu0 0.0
      %2802 = vmatprep.subr.mxu0 0.0
      %2803 = vmatpush1.msra.mxu0 0.0
      %2804 = vmatprep.subr.mxu0 0.0
      %2805 = vmatpush1.msra.mxu0 %v2591
      %2806 = vmatprep.subr.mxu0 0.0
      %2807 = vmatpush1.msra.mxu0 %v2590
      %2808 = vmatprep.subr.mxu0 0.0
      %2809 = vmatpush1.msra.mxu0 %v2589
      %2810 = vmatprep.subr.mxu0 0.0
      %2811 = vmatpush1.msra.mxu0 %v2588
      %2812 = vmatprep.subr.mxu0 0.0
      %2813 = vmatpush1.msra.mxu0 %v2587
      %2814 = vmatprep.subr.mxu0 0.0
      %2815 = vmatpush1.msra.mxu0 %v2586
      %2816 = vmatprep.subr.mxu0 0.0
      %2817 = vmatpush1.msra.mxu0 %v2585
      %2818 = vmatprep.subr.mxu0 0.0
      %2819 = vmatpush1.msra.mxu0 %v2584
      %2820 = vmatprep.subr.mxu0 0.0
      %2821 = vmatpush1.msra.mxu0 %v2583
      %2822 = vmatprep.subr.mxu0 0.0
      %2823 = vmatpush1.msra.mxu0 %v2582
      %2824 = vmatprep.subr.mxu0 0.0
      %2825 = vmatpush2.msra.mxu0 0.0
      %2826 = vmatprep.subr.mxu0 0.0
      %2827 = vmatpush2.msra.mxu0 0.0
      %2828 = vmatprep.subr.mxu0 0.0
      %2829 = vmatpush2.msra.mxu0 0.0
      %2830 = vmatprep.subr.mxu0 0.0
      %2831 = vmatpush2.msra.mxu0 0.0
      %2832 = vmatprep.subr.mxu0 0.0
      %2833 = vmatpush2.msra.mxu0 0.0
      %2834 = vmatprep.subr.mxu0 0.0
      %2835 = vmatpush2.msra.mxu0 0.0
      %2836 = vmatprep.subr.mxu0 0.0
      %2837 = vmatpush2.msra.mxu0 0.0
      %2838 = vmatprep.subr.mxu0 0.0
      %2839 = vmatpush2.msra.mxu0 0.0
      %2840 = vmatprep.subr.mxu0 0.0
      %2841 = vmatpush2.msra.mxu0 0.0
      %2842 = vmatprep.subr.mxu0 0.0
      %2843 = vmatpush2.msra.mxu0 0.0
      %2844 = vmatprep.subr.mxu0 0.0
      %2845 = vmatpush2.msra.mxu0 0.0
      %2846 = vmatprep.subr.mxu0 0.0
      %2847 = vmatpush2.msra.mxu0 0.0
      %2848 = vmatprep.subr.mxu0 0.0
      %2849 = vmatpush2.msra.mxu0 0.0
      %2850 = vmatprep.subr.mxu0 0.0
      %2851 = vmatpush2.msra.mxu0 0.0
      %2852 = vmatprep.subr.mxu0 0.0
      %2853 = vmatpush2.msra.mxu0 0.0
      %2854 = vmatprep.subr.mxu0 0.0
      %2855 = vmatpush2.msra.mxu0 0.0
      %2856 = vmatprep.mubr.f32.mxu0 0.0
      %2857 = vmatmul.mubr.f32.gmra.mxu0 %v2763
      %v2858 = vpop.f32.mrf.mxu0
      %v2859 = vadd.f32 0.0, %v2858
      %v2860 = vpop.f32.mrf.mxu0
      %2861 = vmatprep.mubr.f32.mxu0 0.0
      %2862 = vmatmul.mubr.f32.gmra.mxu0 %v2766
      %v2863 = vpop.f32.mrf.mxu0
      %v2864 = vadd.f32 0.0, %v2863
      %v2865 = vpop.f32.mrf.mxu0
      %2866 = vmatprep.mubr.f32.mxu0 0.0
      %2867 = vmatmul.mubr.f32.gmra.mxu0 %v2769
      %v2868 = vpop.f32.mrf.mxu0
      %v2869 = vadd.f32 0.0, %v2868
      %v2870 = vpop.f32.mrf.mxu0
      %2871 = vmatprep.mubr.f32.mxu0 0.0
      %2872 = vmatmul.mubr.f32.gmra.mxu0 %v2772
      %v2873 = vpop.f32.mrf.mxu0
      %v2874 = vadd.f32 0.0, %v2873
      %v2875 = vpop.f32.mrf.mxu0
      %2876 = vmatprep.mubr.f32.mxu0 0.0
      %2877 = vmatmul.mubr.f32.gmra.mxu0 %v2775
      %v2878 = vpop.f32.mrf.mxu0
      %v2879 = vadd.f32 0.0, %v2878
      %v2880 = vpop.f32.mrf.mxu0
      %2881 = vmatprep.mubr.f32.mxu0 0.0
      %2882 = vmatmul.mubr.f32.gmra.mxu0 %v2778
      %v2883 = vpop.f32.mrf.mxu0
      %v2884 = vadd.f32 0.0, %v2883
      %v2885 = vpop.f32.mrf.mxu0
      %2886 = vmatprep.mubr.f32.mxu0 0.0
      %2887 = vmatmul.mubr.f32.gmra.mxu0 %v2781
      %v2888 = vpop.f32.mrf.mxu0
      %v2889 = vadd.f32 0.0, %v2888
      %v2890 = vpop.f32.mrf.mxu0
      %2891 = vmatprep.mubr.f32.mxu0 0.0
      %2892 = vmatmul.mubr.f32.gmra.mxu0 %v2784
      %v2893 = vpop.f32.mrf.mxu0
      %v2894 = vadd.f32 0.0, %v2893
      %v2895 = vpop.f32.mrf.mxu0
      %2896 = vmatprep.mubr.f32.mxu0 0.0
      %2897 = vmatmul.mubr.f32.gmra.mxu0 %v2787
      %v2898 = vpop.f32.mrf.mxu0
      %v2899 = vadd.f32 0.0, %v2898
      %v2900 = vpop.f32.mrf.mxu0
      %2901 = vmatprep.mubr.f32.mxu0 0.0
      %2902 = vmatmul.mubr.f32.gmra.mxu0 %v2790
      %v2903 = vpop.f32.mrf.mxu0
      %v2904 = vadd.f32 0.0, %v2903
      %v2905 = vpop.f32.mrf.mxu0
      %2906 = vdwg.mxu0
      %2907 = vmatprep.subr.mxu0 0.0
      %2908 = vmatpush1.msra.mxu0 0.0
      %2909 = vmatprep.subr.mxu0 0.0
      %2910 = vmatpush1.msra.mxu0 0.0
      %2911 = vmatprep.subr.mxu0 0.0
      %2912 = vmatpush1.msra.mxu0 0.0
      %2913 = vmatprep.subr.mxu0 0.0
      %2914 = vmatpush1.msra.mxu0 0.0
      %2915 = vmatprep.subr.mxu0 0.0
      %2916 = vmatpush1.msra.mxu0 0.0
      %2917 = vmatprep.subr.mxu0 0.0
      %2918 = vmatpush1.msra.mxu0 0.0
      %2919 = vmatprep.subr.mxu0 0.0
      %2920 = vmatpush1.msra.mxu0 %v2904
      %2921 = vmatprep.subr.mxu0 0.0
      %2922 = vmatpush1.msra.mxu0 %v2899
      %2923 = vmatprep.subr.mxu0 0.0
      %2924 = vmatpush1.msra.mxu0 %v2894
      %2925 = vmatprep.subr.mxu0 0.0
      %2926 = vmatpush1.msra.mxu0 %v2889
      %2927 = vmatprep.subr.mxu0 0.0
      %2928 = vmatpush1.msra.mxu0 %v2884
      %2929 = vmatprep.subr.mxu0 0.0
      %2930 = vmatpush1.msra.mxu0 %v2879
      %2931 = vmatprep.subr.mxu0 0.0
      %2932 = vmatpush1.msra.mxu0 %v2874
      %2933 = vmatprep.subr.mxu0 0.0
      %2934 = vmatpush1.msra.mxu0 %v2869
      %2935 = vmatprep.subr.mxu0 0.0
      %2936 = vmatpush1.msra.mxu0 %v2864
      %2937 = vmatprep.subr.mxu0 0.0
      %2938 = vmatpush1.msra.mxu0 %v2859
      %2939 = vmatprep.subr.mxu0 0.0
      %2940 = vmatpush2.msra.mxu0 0.0
      %2941 = vmatprep.subr.mxu0 0.0
      %2942 = vmatpush2.msra.mxu0 0.0
      %2943 = vmatprep.subr.mxu0 0.0
      %2944 = vmatpush2.msra.mxu0 0.0
      %2945 = vmatprep.subr.mxu0 0.0
      %2946 = vmatpush2.msra.mxu0 0.0
      %2947 = vmatprep.subr.mxu0 0.0
      %2948 = vmatpush2.msra.mxu0 0.0
      %2949 = vmatprep.subr.mxu0 0.0
      %2950 = vmatpush2.msra.mxu0 0.0
      %2951 = vmatprep.subr.mxu0 0.0
      %2952 = vmatpush2.msra.mxu0 0.0
      %2953 = vmatprep.subr.mxu0 0.0
      %2954 = vmatpush2.msra.mxu0 0.0
      %2955 = vmatprep.subr.mxu0 0.0
      %2956 = vmatpush2.msra.mxu0 0.0
      %2957 = vmatprep.subr.mxu0 0.0
      %2958 = vmatpush2.msra.mxu0 0.0
      %2959 = vmatprep.subr.mxu0 0.0
      %2960 = vmatpush2.msra.mxu0 0.0
      %2961 = vmatprep.subr.mxu0 0.0
      %2962 = vmatpush2.msra.mxu0 0.0
      %2963 = vmatprep.subr.mxu0 0.0
      %2964 = vmatpush2.msra.mxu0 0.0
      %2965 = vmatprep.subr.mxu0 0.0
      %2966 = vmatpush2.msra.mxu0 0.0
      %2967 = vmatprep.subr.mxu0 0.0
      %2968 = vmatpush2.msra.mxu0 0.0
      %2969 = vmatprep.subr.mxu0 0.0
      %2970 = vmatpush2.msra.mxu0 0.0
      %2971 = vmatprep.mubr.f32.mxu0 0.0
      %2972 = vmatmul.mubr.f32.gmra.mxu0 %v2763
      %v2973 = vpop.f32.mrf.mxu0
      %v2974 = vadd.f32 0.0, %v2973
      %v2975 = vpop.f32.mrf.mxu0
      %2976 = vmatprep.mubr.f32.mxu0 0.0
      %2977 = vmatmul.mubr.f32.gmra.mxu0 %v2766
      %v2978 = vpop.f32.mrf.mxu0
      %v2979 = vadd.f32 0.0, %v2978
      %v2980 = vpop.f32.mrf.mxu0
      %2981 = vmatprep.mubr.f32.mxu0 0.0
      %2982 = vmatmul.mubr.f32.gmra.mxu0 %v2769
      %v2983 = vpop.f32.mrf.mxu0
      %v2984 = vadd.f32 0.0, %v2983
      %v2985 = vpop.f32.mrf.mxu0
      %2986 = vmatprep.mubr.f32.mxu0 0.0
      %2987 = vmatmul.mubr.f32.gmra.mxu0 %v2772
      %v2988 = vpop.f32.mrf.mxu0
      %v2989 = vadd.f32 0.0, %v2988
      %v2990 = vpop.f32.mrf.mxu0
      %2991 = vmatprep.mubr.f32.mxu0 0.0
      %2992 = vmatmul.mubr.f32.gmra.mxu0 %v2775
      %v2993 = vpop.f32.mrf.mxu0
      %v2994 = vadd.f32 0.0, %v2993
      %v2995 = vpop.f32.mrf.mxu0
      %2996 = vmatprep.mubr.f32.mxu0 0.0
      %2997 = vmatmul.mubr.f32.gmra.mxu0 %v2778
      %v2998 = vpop.f32.mrf.mxu0
      %v2999 = vadd.f32 0.0, %v2998
      %v3000 = vpop.f32.mrf.mxu0
      %3001 = vmatprep.mubr.f32.mxu0 0.0
      %3002 = vmatmul.mubr.f32.gmra.mxu0 %v2781
      %v3003 = vpop.f32.mrf.mxu0
      %v3004 = vadd.f32 0.0, %v3003
      %v3005 = vpop.f32.mrf.mxu0
      %3006 = vmatprep.mubr.f32.mxu0 0.0
      %3007 = vmatmul.mubr.f32.gmra.mxu0 %v2784
      %v3008 = vpop.f32.mrf.mxu0
      %v3009 = vadd.f32 0.0, %v3008
      %v3010 = vpop.f32.mrf.mxu0
      %3011 = vmatprep.mubr.f32.mxu0 0.0
      %3012 = vmatmul.mubr.f32.gmra.mxu0 %v2787
      %v3013 = vpop.f32.mrf.mxu0
      %v3014 = vadd.f32 0.0, %v3013
      %v3015 = vpop.f32.mrf.mxu0
      %3016 = vmatprep.mubr.f32.mxu0 0.0
      %3017 = vmatmul.mubr.f32.gmra.mxu0 %v2790
      %v3018 = vpop.f32.mrf.mxu0
      %v3019 = vadd.f32 0.0, %v3018
      %v3020 = vpop.f32.mrf.mxu0
      %3021 = vdwg.mxu0
      %s3022 = scalar_lea.vmem %s12, 24
      %v3023 = vld [vmem:[%s3022] sm:$0xff]
      %s3024 = scalar_lea.vmem %s12, 32
      %v3025 = vld [vmem:[%s3024] sm:$0xff]
      %v3027 = vsel %vm773, %v2859, 0
      %v3030 = vsel %vm773, %v2864, 0
      %v3033 = vsel %vm773, %v2869, 0
      %v3036 = vsel %vm773, %v2874, 0
      %v3039 = vsel %vm773, %v2879, 0
      %v3042 = vsel %vm773, %v2884, 0
      %v3045 = vsel %vm773, %v2889, 0
      %v3048 = vsel %vm773, %v2894, 0
      %v3051 = vsel %vm773, %v2899, 0
      %v3054 = vsel %vm773, %v2904, 0
      %3056 = vmatprep.subr.mxu0 0.0
      %3057 = vmatpush1.msra.mxu0 0.0
      %3058 = vmatprep.subr.mxu0 0.0
      %3059 = vmatpush1.msra.mxu0 0.0
      %3060 = vmatprep.subr.mxu0 0.0
      %3061 = vmatpush1.msra.mxu0 0.0
      %3062 = vmatprep.subr.mxu0 0.0
      %3063 = vmatpush1.msra.mxu0 0.0
      %3064 = vmatprep.subr.mxu0 0.0
      %3065 = vmatpush1.msra.mxu0 0.0
      %3066 = vmatprep.subr.mxu0 0.0
      %3067 = vmatpush1.msra.mxu0 0.0
      %3068 = vmatprep.subr.mxu0 0.0
      %3069 = vmatpush1.msra.mxu0 0.0
      %3070 = vmatprep.subr.mxu0 0.0
      %3071 = vmatpush1.msra.mxu0 0.0
      %3072 = vmatprep.subr.mxu0 0.0
      %3073 = vmatpush1.msra.mxu0 0.0
      %3074 = vmatprep.subr.mxu0 0.0
      %3075 = vmatpush1.msra.mxu0 0.0
      %3076 = vmatprep.subr.mxu0 0.0
      %3077 = vmatpush1.msra.mxu0 0.0
      %3078 = vmatprep.subr.mxu0 0.0
      %3079 = vmatpush1.msra.mxu0 0.0
      %3080 = vmatprep.subr.mxu0 0.0
      %3081 = vmatpush1.msra.mxu0 0.0
      %3082 = vmatprep.subr.mxu0 0.0
      %3083 = vmatpush1.msra.mxu0 0.0
      %3084 = vmatprep.subr.mxu0 0.0
      %3085 = vmatpush1.msra.mxu0 0.0
      %3086 = vmatprep.subr.mxu0 0.0
      %3087 = vmatpush1.msra.mxu0 %v3025
      %3088 = vmatprep.subr.mxu0 0.0
      %3089 = vmatpush2.msra.mxu0 0.0
      %3090 = vmatprep.subr.mxu0 0.0
      %3091 = vmatpush2.msra.mxu0 0.0
      %3092 = vmatprep.subr.mxu0 0.0
      %3093 = vmatpush2.msra.mxu0 0.0
      %3094 = vmatprep.subr.mxu0 0.0
      %3095 = vmatpush2.msra.mxu0 0.0
      %3096 = vmatprep.subr.mxu0 0.0
      %3097 = vmatpush2.msra.mxu0 0.0
      %3098 = vmatprep.subr.mxu0 0.0
      %3099 = vmatpush2.msra.mxu0 0.0
      %3100 = vmatprep.subr.mxu0 0.0
      %3101 = vmatpush2.msra.mxu0 0.0
      %3102 = vmatprep.subr.mxu0 0.0
      %3103 = vmatpush2.msra.mxu0 0.0
      %3104 = vmatprep.subr.mxu0 0.0
      %3105 = vmatpush2.msra.mxu0 0.0
      %3106 = vmatprep.subr.mxu0 0.0
      %3107 = vmatpush2.msra.mxu0 0.0
      %3108 = vmatprep.subr.mxu0 0.0
      %3109 = vmatpush2.msra.mxu0 0.0
      %3110 = vmatprep.subr.mxu0 0.0
      %3111 = vmatpush2.msra.mxu0 0.0
      %3112 = vmatprep.subr.mxu0 0.0
      %3113 = vmatpush2.msra.mxu0 0.0
      %3114 = vmatprep.subr.mxu0 0.0
      %3115 = vmatpush2.msra.mxu0 0.0
      %3116 = vmatprep.subr.mxu0 0.0
      %3117 = vmatpush2.msra.mxu0 0.0
      %3118 = vmatprep.subr.mxu0 0.0
      %3119 = vmatpush2.msra.mxu0 0.0
      %3120 = vmatprep.mubr.f32.mxu0 0.0
      %3121 = vmatmul.mubr.f32.gmra.mxu0 %v3027
      %v3122 = vpop.f32.mrf.mxu0
      %v3123 = vadd.f32 0.0, %v3122
      %v3124 = vpop.f32.mrf.mxu0
      %3125 = vmatprep.mubr.f32.mxu0 0.0
      %3126 = vmatmul.mubr.f32.gmra.mxu0 %v3030
      %v3127 = vpop.f32.mrf.mxu0
      %v3128 = vadd.f32 0.0, %v3127
      %v3129 = vpop.f32.mrf.mxu0
      %3130 = vmatprep.mubr.f32.mxu0 0.0
      %3131 = vmatmul.mubr.f32.gmra.mxu0 %v3033
      %v3132 = vpop.f32.mrf.mxu0
      %v3133 = vadd.f32 0.0, %v3132
      %v3134 = vpop.f32.mrf.mxu0
      %3135 = vmatprep.mubr.f32.mxu0 0.0
      %3136 = vmatmul.mubr.f32.gmra.mxu0 %v3036
      %v3137 = vpop.f32.mrf.mxu0
      %v3138 = vadd.f32 0.0, %v3137
      %v3139 = vpop.f32.mrf.mxu0
      %3140 = vmatprep.mubr.f32.mxu0 0.0
      %3141 = vmatmul.mubr.f32.gmra.mxu0 %v3039
      %v3142 = vpop.f32.mrf.mxu0
      %v3143 = vadd.f32 0.0, %v3142
      %v3144 = vpop.f32.mrf.mxu0
      %3145 = vmatprep.mubr.f32.mxu0 0.0
      %3146 = vmatmul.mubr.f32.gmra.mxu0 %v3042
      %v3147 = vpop.f32.mrf.mxu0
      %v3148 = vadd.f32 0.0, %v3147
      %v3149 = vpop.f32.mrf.mxu0
      %3150 = vmatprep.mubr.f32.mxu0 0.0
      %3151 = vmatmul.mubr.f32.gmra.mxu0 %v3045
      %v3152 = vpop.f32.mrf.mxu0
      %v3153 = vadd.f32 0.0, %v3152
      %v3154 = vpop.f32.mrf.mxu0
      %3155 = vmatprep.mubr.f32.mxu0 0.0
      %3156 = vmatmul.mubr.f32.gmra.mxu0 %v3048
      %v3157 = vpop.f32.mrf.mxu0
      %v3158 = vadd.f32 0.0, %v3157
      %v3159 = vpop.f32.mrf.mxu0
      %3160 = vmatprep.mubr.f32.mxu0 0.0
      %3161 = vmatmul.mubr.f32.gmra.mxu0 %v3051
      %v3162 = vpop.f32.mrf.mxu0
      %v3163 = vadd.f32 0.0, %v3162
      %v3164 = vpop.f32.mrf.mxu0
      %3165 = vmatprep.mubr.f32.mxu0 0.0
      %3166 = vmatmul.mubr.f32.gmra.mxu0 %v3054
      %v3167 = vpop.f32.mrf.mxu0
      %v3168 = vadd.f32 0.0, %v3167
      %v3169 = vpop.f32.mrf.mxu0
      %3170 = vdwg.mxu0
      %3171 = vmatprep.subr.mxu0 0.0
      %3172 = vmatpush1.msra.mxu0 0.0
      %3173 = vmatprep.subr.mxu0 0.0
      %3174 = vmatpush1.msra.mxu0 0.0
      %3175 = vmatprep.subr.mxu0 0.0
      %3176 = vmatpush1.msra.mxu0 0.0
      %3177 = vmatprep.subr.mxu0 0.0
      %3178 = vmatpush1.msra.mxu0 0.0
      %3179 = vmatprep.subr.mxu0 0.0
      %3180 = vmatpush1.msra.mxu0 0.0
      %3181 = vmatprep.subr.mxu0 0.0
      %3182 = vmatpush1.msra.mxu0 0.0
      %3183 = vmatprep.subr.mxu0 0.0
      %3184 = vmatpush1.msra.mxu0 0.0
      %3185 = vmatprep.subr.mxu0 0.0
      %3186 = vmatpush1.msra.mxu0 0.0
      %3187 = vmatprep.subr.mxu0 0.0
      %3188 = vmatpush1.msra.mxu0 0.0
      %3189 = vmatprep.subr.mxu0 0.0
      %3190 = vmatpush1.msra.mxu0 0.0
      %3191 = vmatprep.subr.mxu0 0.0
      %3192 = vmatpush1.msra.mxu0 0.0
      %3193 = vmatprep.subr.mxu0 0.0
      %3194 = vmatpush1.msra.mxu0 0.0
      %3195 = vmatprep.subr.mxu0 0.0
      %3196 = vmatpush1.msra.mxu0 0.0
      %3197 = vmatprep.subr.mxu0 0.0
      %3198 = vmatpush1.msra.mxu0 0.0
      %3199 = vmatprep.subr.mxu0 0.0
      %3200 = vmatpush1.msra.mxu0 0.0
      %3201 = vmatprep.subr.mxu0 0.0
      %3202 = vmatpush1.msra.mxu0 %v3023
      %3203 = vmatprep.subr.mxu0 0.0
      %3204 = vmatpush2.msra.mxu0 0.0
      %3205 = vmatprep.subr.mxu0 0.0
      %3206 = vmatpush2.msra.mxu0 0.0
      %3207 = vmatprep.subr.mxu0 0.0
      %3208 = vmatpush2.msra.mxu0 0.0
      %3209 = vmatprep.subr.mxu0 0.0
      %3210 = vmatpush2.msra.mxu0 0.0
      %3211 = vmatprep.subr.mxu0 0.0
      %3212 = vmatpush2.msra.mxu0 0.0
      %3213 = vmatprep.subr.mxu0 0.0
      %3214 = vmatpush2.msra.mxu0 0.0
      %3215 = vmatprep.subr.mxu0 0.0
      %3216 = vmatpush2.msra.mxu0 0.0
      %3217 = vmatprep.subr.mxu0 0.0
      %3218 = vmatpush2.msra.mxu0 0.0
      %3219 = vmatprep.subr.mxu0 0.0
      %3220 = vmatpush2.msra.mxu0 0.0
      %3221 = vmatprep.subr.mxu0 0.0
      %3222 = vmatpush2.msra.mxu0 0.0
      %3223 = vmatprep.subr.mxu0 0.0
      %3224 = vmatpush2.msra.mxu0 0.0
      %3225 = vmatprep.subr.mxu0 0.0
      %3226 = vmatpush2.msra.mxu0 0.0
      %3227 = vmatprep.subr.mxu0 0.0
      %3228 = vmatpush2.msra.mxu0 0.0
      %3229 = vmatprep.subr.mxu0 0.0
      %3230 = vmatpush2.msra.mxu0 0.0
      %3231 = vmatprep.subr.mxu0 0.0
      %3232 = vmatpush2.msra.mxu0 0.0
      %3233 = vmatprep.subr.mxu0 0.0
      %3234 = vmatpush2.msra.mxu0 0.0
      %3235 = vmatprep.mubr.f32.mxu0 0.0
      %3236 = vmatmul.mubr.f32.gmra.mxu0 %v2603
      %v3237 = vpop.f32.mrf.mxu0
      %v3238 = vadd.f32 %v3123, %v3237
      %v3239 = vpop.f32.mrf.mxu0
      %3240 = vmatprep.mubr.f32.mxu0 0.0
      %3241 = vmatmul.mubr.f32.gmra.mxu0 %v2606
      %v3242 = vpop.f32.mrf.mxu0
      %v3243 = vadd.f32 %v3128, %v3242
      %v3244 = vpop.f32.mrf.mxu0
      %3245 = vmatprep.mubr.f32.mxu0 0.0
      %3246 = vmatmul.mubr.f32.gmra.mxu0 %v2609
      %v3247 = vpop.f32.mrf.mxu0
      %v3248 = vadd.f32 %v3133, %v3247
      %v3249 = vpop.f32.mrf.mxu0
      %3250 = vmatprep.mubr.f32.mxu0 0.0
      %3251 = vmatmul.mubr.f32.gmra.mxu0 %v2612
      %v3252 = vpop.f32.mrf.mxu0
      %v3253 = vadd.f32 %v3138, %v3252
      %v3254 = vpop.f32.mrf.mxu0
      %3255 = vmatprep.mubr.f32.mxu0 0.0
      %3256 = vmatmul.mubr.f32.gmra.mxu0 %v2615
      %v3257 = vpop.f32.mrf.mxu0
      %v3258 = vadd.f32 %v3143, %v3257
      %v3259 = vpop.f32.mrf.mxu0
      %3260 = vmatprep.mubr.f32.mxu0 0.0
      %3261 = vmatmul.mubr.f32.gmra.mxu0 %v2618
      %v3262 = vpop.f32.mrf.mxu0
      %v3263 = vadd.f32 %v3148, %v3262
      %v3264 = vpop.f32.mrf.mxu0
      %3265 = vmatprep.mubr.f32.mxu0 0.0
      %3266 = vmatmul.mubr.f32.gmra.mxu0 %v2621
      %v3267 = vpop.f32.mrf.mxu0
      %v3268 = vadd.f32 %v3153, %v3267
      %v3269 = vpop.f32.mrf.mxu0
      %3270 = vmatprep.mubr.f32.mxu0 0.0
      %3271 = vmatmul.mubr.f32.gmra.mxu0 %v2624
      %v3272 = vpop.f32.mrf.mxu0
      %v3273 = vadd.f32 %v3158, %v3272
      %v3274 = vpop.f32.mrf.mxu0
      %3275 = vmatprep.mubr.f32.mxu0 0.0
      %3276 = vmatmul.mubr.f32.gmra.mxu0 %v2627
      %v3277 = vpop.f32.mrf.mxu0
      %v3278 = vadd.f32 %v3163, %v3277
      %v3279 = vpop.f32.mrf.mxu0
      %3280 = vmatprep.mubr.f32.mxu0 0.0
      %3281 = vmatmul.mubr.f32.gmra.mxu0 %v2630
      %v3282 = vpop.f32.mrf.mxu0
      %v3283 = vadd.f32 %v3168, %v3282
      %v3284 = vpop.f32.mrf.mxu0
      %3285 = vdwg.mxu0
      %s3286 = scalar_lea.vmem %s12, 40
      %v3287 = vld [vmem:[%s3286] sm:$0xff]
      %v3289 = vsel %vm773, %v2974, 0
      %v3292 = vsel %vm773, %v2979, 0
      %v3295 = vsel %vm773, %v2984, 0
      %v3298 = vsel %vm773, %v2989, 0
      %v3301 = vsel %vm773, %v2994, 0
      %v3304 = vsel %vm773, %v2999, 0
      %v3307 = vsel %vm773, %v3004, 0
      %v3310 = vsel %vm773, %v3009, 0
      %v3313 = vsel %vm773, %v3014, 0
      %v3316 = vsel %vm773, %v3019, 0
      %3318 = vmatprep.subr.mxu0 0.0
      %3319 = vmatpush1.msra.mxu0 0.0
      %3320 = vmatprep.subr.mxu0 0.0
      %3321 = vmatpush1.msra.mxu0 0.0
      %3322 = vmatprep.subr.mxu0 0.0
      %3323 = vmatpush1.msra.mxu0 0.0
      %3324 = vmatprep.subr.mxu0 0.0
      %3325 = vmatpush1.msra.mxu0 0.0
      %3326 = vmatprep.subr.mxu0 0.0
      %3327 = vmatpush1.msra.mxu0 0.0
      %3328 = vmatprep.subr.mxu0 0.0
      %3329 = vmatpush1.msra.mxu0 0.0
      %3330 = vmatprep.subr.mxu0 0.0
      %3331 = vmatpush1.msra.mxu0 0.0
      %3332 = vmatprep.subr.mxu0 0.0
      %3333 = vmatpush1.msra.mxu0 0.0
      %3334 = vmatprep.subr.mxu0 0.0
      %3335 = vmatpush1.msra.mxu0 0.0
      %3336 = vmatprep.subr.mxu0 0.0
      %3337 = vmatpush1.msra.mxu0 0.0
      %3338 = vmatprep.subr.mxu0 0.0
      %3339 = vmatpush1.msra.mxu0 0.0
      %3340 = vmatprep.subr.mxu0 0.0
      %3341 = vmatpush1.msra.mxu0 0.0
      %3342 = vmatprep.subr.mxu0 0.0
      %3343 = vmatpush1.msra.mxu0 0.0
      %3344 = vmatprep.subr.mxu0 0.0
      %3345 = vmatpush1.msra.mxu0 0.0
      %3346 = vmatprep.subr.mxu0 0.0
      %3347 = vmatpush1.msra.mxu0 0.0
      %3348 = vmatprep.subr.mxu0 0.0
      %3349 = vmatpush1.msra.mxu0 %v3287
      %3350 = vmatprep.subr.mxu0 0.0
      %3351 = vmatpush2.msra.mxu0 0.0
      %3352 = vmatprep.subr.mxu0 0.0
      %3353 = vmatpush2.msra.mxu0 0.0
      %3354 = vmatprep.subr.mxu0 0.0
      %3355 = vmatpush2.msra.mxu0 0.0
      %3356 = vmatprep.subr.mxu0 0.0
      %3357 = vmatpush2.msra.mxu0 0.0
      %3358 = vmatprep.subr.mxu0 0.0
      %3359 = vmatpush2.msra.mxu0 0.0
      %3360 = vmatprep.subr.mxu0 0.0
      %3361 = vmatpush2.msra.mxu0 0.0
      %3362 = vmatprep.subr.mxu0 0.0
      %3363 = vmatpush2.msra.mxu0 0.0
      %3364 = vmatprep.subr.mxu0 0.0
      %3365 = vmatpush2.msra.mxu0 0.0
      %3366 = vmatprep.subr.mxu0 0.0
      %3367 = vmatpush2.msra.mxu0 0.0
      %3368 = vmatprep.subr.mxu0 0.0
      %3369 = vmatpush2.msra.mxu0 0.0
      %3370 = vmatprep.subr.mxu0 0.0
      %3371 = vmatpush2.msra.mxu0 0.0
      %3372 = vmatprep.subr.mxu0 0.0
      %3373 = vmatpush2.msra.mxu0 0.0
      %3374 = vmatprep.subr.mxu0 0.0
      %3375 = vmatpush2.msra.mxu0 0.0
      %3376 = vmatprep.subr.mxu0 0.0
      %3377 = vmatpush2.msra.mxu0 0.0
      %3378 = vmatprep.subr.mxu0 0.0
      %3379 = vmatpush2.msra.mxu0 0.0
      %3380 = vmatprep.subr.mxu0 0.0
      %3381 = vmatpush2.msra.mxu0 0.0
      %3382 = vmatprep.mubr.f32.mxu0 0.0
      %3383 = vmatmul.mubr.f32.gmra.mxu0 %v3289
      %v3384 = vpop.f32.mrf.mxu0
      %v3385 = vadd.f32 0.0, %v3384
      %v3386 = vpop.f32.mrf.mxu0
      %3387 = vmatprep.mubr.f32.mxu0 0.0
      %3388 = vmatmul.mubr.f32.gmra.mxu0 %v3292
      %v3389 = vpop.f32.mrf.mxu0
      %v3390 = vadd.f32 0.0, %v3389
      %v3391 = vpop.f32.mrf.mxu0
      %3392 = vmatprep.mubr.f32.mxu0 0.0
      %3393 = vmatmul.mubr.f32.gmra.mxu0 %v3295
      %v3394 = vpop.f32.mrf.mxu0
      %v3395 = vadd.f32 0.0, %v3394
      %v3396 = vpop.f32.mrf.mxu0
      %3397 = vmatprep.mubr.f32.mxu0 0.0
      %3398 = vmatmul.mubr.f32.gmra.mxu0 %v3298
      %v3399 = vpop.f32.mrf.mxu0
      %v3400 = vadd.f32 0.0, %v3399
      %v3401 = vpop.f32.mrf.mxu0
      %3402 = vmatprep.mubr.f32.mxu0 0.0
      %3403 = vmatmul.mubr.f32.gmra.mxu0 %v3301
      %v3404 = vpop.f32.mrf.mxu0
      %v3405 = vadd.f32 0.0, %v3404
      %v3406 = vpop.f32.mrf.mxu0
      %3407 = vmatprep.mubr.f32.mxu0 0.0
      %3408 = vmatmul.mubr.f32.gmra.mxu0 %v3304
      %v3409 = vpop.f32.mrf.mxu0
      %v3410 = vadd.f32 0.0, %v3409
      %v3411 = vpop.f32.mrf.mxu0
      %3412 = vmatprep.mubr.f32.mxu0 0.0
      %3413 = vmatmul.mubr.f32.gmra.mxu0 %v3307
      %v3414 = vpop.f32.mrf.mxu0
      %v3415 = vadd.f32 0.0, %v3414
      %v3416 = vpop.f32.mrf.mxu0
      %3417 = vmatprep.mubr.f32.mxu0 0.0
      %3418 = vmatmul.mubr.f32.gmra.mxu0 %v3310
      %v3419 = vpop.f32.mrf.mxu0
      %v3420 = vadd.f32 0.0, %v3419
      %v3421 = vpop.f32.mrf.mxu0
      %3422 = vmatprep.mubr.f32.mxu0 0.0
      %3423 = vmatmul.mubr.f32.gmra.mxu0 %v3313
      %v3424 = vpop.f32.mrf.mxu0
      %v3425 = vadd.f32 0.0, %v3424
      %v3426 = vpop.f32.mrf.mxu0
      %3427 = vmatprep.mubr.f32.mxu0 0.0
      %3428 = vmatmul.mubr.f32.gmra.mxu0 %v3316
      %v3429 = vpop.f32.mrf.mxu0
      %v3430 = vadd.f32 0.0, %v3429
      %v3431 = vpop.f32.mrf.mxu0
      %3432 = vdwg.mxu0
      %v3433 = vadd.f32 %v3238, %v3385
      %v3434 = vadd.f32 %v3243, %v3390
      %v3435 = vadd.f32 %v3248, %v3395
      %v3436 = vadd.f32 %v3253, %v3400
      %v3437 = vadd.f32 %v3258, %v3405
      %v3438 = vadd.f32 %v3263, %v3410
      %v3439 = vadd.f32 %v3268, %v3415
      %v3440 = vadd.f32 %v3273, %v3420
      %v3441 = vadd.f32 %v3278, %v3425
      %v3442 = vadd.f32 %v3283, %v3430
      %s3443 = scalar_lea.vmem %s13, 1
      %v3444 = vld [vmem:[%s3443] sm:$0x1]
      %v3446 = vlaneseq
      %v3447 = vshrl.u32 %v3446, 7
      %v3448 = vsub.s32 0, %v3447
      %v3449 = vrot.slane %v3444, %v3448
      %v3451 = vadd.f32 %v3433, %v3449
      %v3452 = vadd.f32 %v3434, %v3449
      %v3453 = vadd.f32 %v3435, %v3449
      %v3454 = vadd.f32 %v3436, %v3449
      %v3455 = vadd.f32 %v3437, %v3449
      %v3456 = vadd.f32 %v3438, %v3449
      %v3457 = vadd.f32 %v3439, %v3449
      %v3458 = vadd.f32 %v3440, %v3449
      %v3459 = vadd.f32 %v3441, %v3449
      %v3460 = vadd.f32 %v3442, %v3449
      %v3461 = vadd.f32 %v3451, %v2174
      %v3462 = vadd.f32 %v3452, %v2175
      %v3463 = vadd.f32 %v3453, %v2176
      %v3464 = vadd.f32 %v3454, %v2177
      %v3465 = vadd.f32 %v3455, %v2178
      %v3466 = vadd.f32 %v3456, %v2179
      %v3467 = vadd.f32 %v3457, %v2180
      %v3468 = vadd.f32 %v3458, %v2181
      %v3469 = vadd.f32 %v3459, %v2182
      %v3470 = vadd.f32 %v3460, %v2183
      %s3471 = scalar_lea.vmem %s7, 16
      %v3472 = vld [vmem:[%s3471] sm:$0xff]
      %s3473 = scalar_lea.vmem %s8, 16
      %v3474 = vld [vmem:[%s3473] sm:$0xff]
      %v3476 = vsel %vm773, %v3462, 0
      %v3479 = vsel %vm773, %v3463, 0
      %v3482 = vsel %vm773, %v3464, 0
      %v3485 = vsel %vm773, %v3465, 0
      %v3488 = vsel %vm773, %v3466, 0
      %v3491 = vsel %vm773, %v3467, 0
      %v3494 = vsel %vm773, %v3468, 0
      %v3497 = vsel %vm773, %v3469, 0
      %v3500 = vsel %vm773, %v3470, 0
      %3502 = vmatprep.subr.mxu0 0.0
      %3503 = vmatpush1.msra.mxu0 0.0
      %3504 = vmatprep.subr.mxu0 0.0
      %3505 = vmatpush1.msra.mxu0 0.0
      %3506 = vmatprep.subr.mxu0 0.0
      %3507 = vmatpush1.msra.mxu0 0.0
      %3508 = vmatprep.subr.mxu0 0.0
      %3509 = vmatpush1.msra.mxu0 0.0
      %3510 = vmatprep.subr.mxu0 0.0
      %3511 = vmatpush1.msra.mxu0 0.0
      %3512 = vmatprep.subr.mxu0 0.0
      %3513 = vmatpush1.msra.mxu0 0.0
      %3514 = vmatprep.subr.mxu0 0.0
      %3515 = vmatpush1.msra.mxu0 0.0
      %3516 = vmatprep.subr.mxu0 0.0
      %3517 = vmatpush1.msra.mxu0 0.0
      %3518 = vmatprep.subr.mxu0 0.0
      %3519 = vmatpush1.msra.mxu0 0.0
      %3520 = vmatprep.subr.mxu0 0.0
      %3521 = vmatpush1.msra.mxu0 0.0
      %3522 = vmatprep.subr.mxu0 0.0
      %3523 = vmatpush1.msra.mxu0 0.0
      %3524 = vmatprep.subr.mxu0 0.0
      %3525 = vmatpush1.msra.mxu0 0.0
      %3526 = vmatprep.subr.mxu0 0.0
      %3527 = vmatpush1.msra.mxu0 0.0
      %3528 = vmatprep.subr.mxu0 0.0
      %3529 = vmatpush1.msra.mxu0 0.0
      %3530 = vmatprep.subr.mxu0 0.0
      %3531 = vmatpush1.msra.mxu0 0.0
      %3532 = vmatprep.subr.mxu0 0.0
      %3533 = vmatpush1.msra.mxu0 %v3474
      %3534 = vmatprep.subr.mxu0 0.0
      %3535 = vmatpush2.msra.mxu0 0.0
      %3536 = vmatprep.subr.mxu0 0.0
      %3537 = vmatpush2.msra.mxu0 0.0
      %3538 = vmatprep.subr.mxu0 0.0
      %3539 = vmatpush2.msra.mxu0 0.0
      %3540 = vmatprep.subr.mxu0 0.0
      %3541 = vmatpush2.msra.mxu0 0.0
      %3542 = vmatprep.subr.mxu0 0.0
      %3543 = vmatpush2.msra.mxu0 0.0
      %3544 = vmatprep.subr.mxu0 0.0
      %3545 = vmatpush2.msra.mxu0 0.0
      %3546 = vmatprep.subr.mxu0 0.0
      %3547 = vmatpush2.msra.mxu0 0.0
      %3548 = vmatprep.subr.mxu0 0.0
      %3549 = vmatpush2.msra.mxu0 0.0
      %3550 = vmatprep.subr.mxu0 0.0
      %3551 = vmatpush2.msra.mxu0 0.0
      %3552 = vmatprep.subr.mxu0 0.0
      %3553 = vmatpush2.msra.mxu0 0.0
      %3554 = vmatprep.subr.mxu0 0.0
      %3555 = vmatpush2.msra.mxu0 0.0
      %3556 = vmatprep.subr.mxu0 0.0
      %3557 = vmatpush2.msra.mxu0 0.0
      %3558 = vmatprep.subr.mxu0 0.0
      %3559 = vmatpush2.msra.mxu0 0.0
      %3560 = vmatprep.subr.mxu0 0.0
      %3561 = vmatpush2.msra.mxu0 0.0
      %3562 = vmatprep.subr.mxu0 0.0
      %3563 = vmatpush2.msra.mxu0 0.0
      %3564 = vmatprep.subr.mxu0 0.0
      %3565 = vmatpush2.msra.mxu0 0.0
      %3566 = vmatprep.mubr.f32.mxu0 0.0
      %3567 = vmatmul.mubr.f32.gmra.mxu0 %v3476
      %v3568 = vpop.f32.mrf.mxu0
      %v3569 = vadd.f32 0.0, %v3568
      %v3570 = vpop.f32.mrf.mxu0
      %3571 = vmatprep.mubr.f32.mxu0 0.0
      %3572 = vmatmul.mubr.f32.gmra.mxu0 %v3479
      %v3573 = vpop.f32.mrf.mxu0
      %v3574 = vadd.f32 0.0, %v3573
      %v3575 = vpop.f32.mrf.mxu0
      %3576 = vmatprep.mubr.f32.mxu0 0.0
      %3577 = vmatmul.mubr.f32.gmra.mxu0 %v3482
      %v3578 = vpop.f32.mrf.mxu0
      %v3579 = vadd.f32 0.0, %v3578
      %v3580 = vpop.f32.mrf.mxu0
      %3581 = vmatprep.mubr.f32.mxu0 0.0
      %3582 = vmatmul.mubr.f32.gmra.mxu0 %v3485
      %v3583 = vpop.f32.mrf.mxu0
      %v3584 = vadd.f32 0.0, %v3583
      %v3585 = vpop.f32.mrf.mxu0
      %3586 = vmatprep.mubr.f32.mxu0 0.0
      %3587 = vmatmul.mubr.f32.gmra.mxu0 %v3488
      %v3588 = vpop.f32.mrf.mxu0
      %v3589 = vadd.f32 0.0, %v3588
      %v3590 = vpop.f32.mrf.mxu0
      %3591 = vmatprep.mubr.f32.mxu0 0.0
      %3592 = vmatmul.mubr.f32.gmra.mxu0 %v3491
      %v3593 = vpop.f32.mrf.mxu0
      %v3594 = vadd.f32 0.0, %v3593
      %v3595 = vpop.f32.mrf.mxu0
      %3596 = vmatprep.mubr.f32.mxu0 0.0
      %3597 = vmatmul.mubr.f32.gmra.mxu0 %v3494
      %v3598 = vpop.f32.mrf.mxu0
      %v3599 = vadd.f32 0.0, %v3598
      %v3600 = vpop.f32.mrf.mxu0
      %3601 = vmatprep.mubr.f32.mxu0 0.0
      %3602 = vmatmul.mubr.f32.gmra.mxu0 %v3497
      %v3603 = vpop.f32.mrf.mxu0
      %v3604 = vadd.f32 0.0, %v3603
      %v3605 = vpop.f32.mrf.mxu0
      %3606 = vmatprep.mubr.f32.mxu0 0.0
      %3607 = vmatmul.mubr.f32.gmra.mxu0 %v3500
      %v3608 = vpop.f32.mrf.mxu0
      %v3609 = vadd.f32 0.0, %v3608
      %v3610 = vpop.f32.mrf.mxu0
      %3611 = vdwg.mxu0
      %v3613 = vsel %vm773, %v3461, 0
      %3615 = vmatprep.subr.mxu0 0.0
      %3616 = vmatpush1.msra.mxu0 0.0
      %3617 = vmatprep.subr.mxu0 0.0
      %3618 = vmatpush1.msra.mxu0 0.0
      %3619 = vmatprep.subr.mxu0 0.0
      %3620 = vmatpush1.msra.mxu0 0.0
      %3621 = vmatprep.subr.mxu0 0.0
      %3622 = vmatpush1.msra.mxu0 0.0
      %3623 = vmatprep.subr.mxu0 0.0
      %3624 = vmatpush1.msra.mxu0 0.0
      %3625 = vmatprep.subr.mxu0 0.0
      %3626 = vmatpush1.msra.mxu0 0.0
      %3627 = vmatprep.subr.mxu0 0.0
      %3628 = vmatpush1.msra.mxu0 0.0
      %3629 = vmatprep.subr.mxu0 0.0
      %3630 = vmatpush1.msra.mxu0 0.0
      %3631 = vmatprep.subr.mxu0 0.0
      %3632 = vmatpush1.msra.mxu0 0.0
      %3633 = vmatprep.subr.mxu0 0.0
      %3634 = vmatpush1.msra.mxu0 0.0
      %3635 = vmatprep.subr.mxu0 0.0
      %3636 = vmatpush1.msra.mxu0 0.0
      %3637 = vmatprep.subr.mxu0 0.0
      %3638 = vmatpush1.msra.mxu0 0.0
      %3639 = vmatprep.subr.mxu0 0.0
      %3640 = vmatpush1.msra.mxu0 0.0
      %3641 = vmatprep.subr.mxu0 0.0
      %3642 = vmatpush1.msra.mxu0 0.0
      %3643 = vmatprep.subr.mxu0 0.0
      %3644 = vmatpush1.msra.mxu0 0.0
      %3645 = vmatprep.subr.mxu0 0.0
      %3646 = vmatpush1.msra.mxu0 %v3472
      %3647 = vmatprep.subr.mxu0 0.0
      %3648 = vmatpush2.msra.mxu0 0.0
      %3649 = vmatprep.subr.mxu0 0.0
      %3650 = vmatpush2.msra.mxu0 0.0
      %3651 = vmatprep.subr.mxu0 0.0
      %3652 = vmatpush2.msra.mxu0 0.0
      %3653 = vmatprep.subr.mxu0 0.0
      %3654 = vmatpush2.msra.mxu0 0.0
      %3655 = vmatprep.subr.mxu0 0.0
      %3656 = vmatpush2.msra.mxu0 0.0
      %3657 = vmatprep.subr.mxu0 0.0
      %3658 = vmatpush2.msra.mxu0 0.0
      %3659 = vmatprep.subr.mxu0 0.0
      %3660 = vmatpush2.msra.mxu0 0.0
      %3661 = vmatprep.subr.mxu0 0.0
      %3662 = vmatpush2.msra.mxu0 0.0
      %3663 = vmatprep.subr.mxu0 0.0
      %3664 = vmatpush2.msra.mxu0 0.0
      %3665 = vmatprep.subr.mxu0 0.0
      %3666 = vmatpush2.msra.mxu0 0.0
      %3667 = vmatprep.subr.mxu0 0.0
      %3668 = vmatpush2.msra.mxu0 0.0
      %3669 = vmatprep.subr.mxu0 0.0
      %3670 = vmatpush2.msra.mxu0 0.0
      %3671 = vmatprep.subr.mxu0 0.0
      %3672 = vmatpush2.msra.mxu0 0.0
      %3673 = vmatprep.subr.mxu0 0.0
      %3674 = vmatpush2.msra.mxu0 0.0
      %3675 = vmatprep.subr.mxu0 0.0
      %3676 = vmatpush2.msra.mxu0 0.0
      %3677 = vmatprep.subr.mxu0 0.0
      %3678 = vmatpush2.msra.mxu0 0.0
      %3679 = vmatprep.mubr.f32.mxu0 0.0
      %3680 = vmatmul.mubr.f32.gmra.mxu0 %v3613
      %v3681 = vpop.f32.mrf.mxu0
      %v3682 = vadd.f32 %v3569, %v3681
      %v3683 = vpop.f32.mrf.mxu0
      %3684 = vmatprep.mubr.f32.mxu0 0.0
      %3685 = vmatmul.mubr.f32.gmra.mxu0 %v3476
      %v3686 = vpop.f32.mrf.mxu0
      %v3687 = vadd.f32 %v3574, %v3686
      %v3688 = vpop.f32.mrf.mxu0
      %3689 = vmatprep.mubr.f32.mxu0 0.0
      %3690 = vmatmul.mubr.f32.gmra.mxu0 %v3479
      %v3691 = vpop.f32.mrf.mxu0
      %v3692 = vadd.f32 %v3579, %v3691
      %v3693 = vpop.f32.mrf.mxu0
      %3694 = vmatprep.mubr.f32.mxu0 0.0
      %3695 = vmatmul.mubr.f32.gmra.mxu0 %v3482
      %v3696 = vpop.f32.mrf.mxu0
      %v3697 = vadd.f32 %v3584, %v3696
      %v3698 = vpop.f32.mrf.mxu0
      %3699 = vmatprep.mubr.f32.mxu0 0.0
      %3700 = vmatmul.mubr.f32.gmra.mxu0 %v3485
      %v3701 = vpop.f32.mrf.mxu0
      %v3702 = vadd.f32 %v3589, %v3701
      %v3703 = vpop.f32.mrf.mxu0
      %3704 = vmatprep.mubr.f32.mxu0 0.0
      %3705 = vmatmul.mubr.f32.gmra.mxu0 %v3488
      %v3706 = vpop.f32.mrf.mxu0
      %v3707 = vadd.f32 %v3594, %v3706
      %v3708 = vpop.f32.mrf.mxu0
      %3709 = vmatprep.mubr.f32.mxu0 0.0
      %3710 = vmatmul.mubr.f32.gmra.mxu0 %v3491
      %v3711 = vpop.f32.mrf.mxu0
      %v3712 = vadd.f32 %v3599, %v3711
      %v3713 = vpop.f32.mrf.mxu0
      %3714 = vmatprep.mubr.f32.mxu0 0.0
      %3715 = vmatmul.mubr.f32.gmra.mxu0 %v3494
      %v3716 = vpop.f32.mrf.mxu0
      %v3717 = vadd.f32 %v3604, %v3716
      %v3718 = vpop.f32.mrf.mxu0
      %3719 = vmatprep.mubr.f32.mxu0 0.0
      %3720 = vmatmul.mubr.f32.gmra.mxu0 %v3497
      %v3721 = vpop.f32.mrf.mxu0
      %v3722 = vadd.f32 %v3609, %v3721
      %v3723 = vpop.f32.mrf.mxu0
      %3724 = vdwg.mxu0
      %s3725 = scalar_lea.vmem %s9, 2
      %v3726 = vld [vmem:[%s3725] sm:$0x1]
      %v3728 = vlaneseq
      %v3729 = vshrl.u32 %v3728, 7
      %v3730 = vsub.s32 0, %v3729
      %v3731 = vrot.slane %v3726, %v3730
      %v3733 = vadd.f32 %v3682, %v3731
      %v3734 = vadd.f32 %v3687, %v3731
      %v3735 = vadd.f32 %v3692, %v3731
      %v3736 = vadd.f32 %v3697, %v3731
      %v3737 = vadd.f32 %v3702, %v3731
      %v3738 = vadd.f32 %v3707, %v3731
      %v3739 = vadd.f32 %v3712, %v3731
      %v3740 = vadd.f32 %v3717, %v3731
      %v3741 = vadd.f32 %v3722, %v3731
      %v3742 = vtanh.pop %v3733
      %v3743 = vtanh.pop %v3734
      %v3744 = vtanh.pop %v3735
      %v3745 = vtanh.pop %v3736
      %v3746 = vtanh.pop %v3737
      %v3747 = vtanh.pop %v3738
      %v3748 = vtanh.pop %v3739
      %v3749 = vtanh.pop %v3740
      %v3750 = vtanh.pop %v3741
      %v3751 = vxor.u32 %v3733, 2147483648
      %v3752 = vxor.u32 %v3734, 2147483648
      %v3753 = vxor.u32 %v3735, 2147483648
      %v3754 = vxor.u32 %v3736, 2147483648
      %v3755 = vxor.u32 %v3737, 2147483648
      %v3756 = vxor.u32 %v3738, 2147483648
      %v3757 = vxor.u32 %v3739, 2147483648
      %v3758 = vxor.u32 %v3740, 2147483648
      %v3759 = vxor.u32 %v3741, 2147483648
      %v3760 = vmul.f32 %v3751, 1.442695
      %v3761 = vpow.pop %v3760
      %v3762 = vmul.f32 %v3752, 1.442695
      %v3763 = vpow.pop %v3762
      %v3764 = vmul.f32 %v3753, 1.442695
      %v3765 = vpow.pop %v3764
      %v3766 = vmul.f32 %v3754, 1.442695
      %v3767 = vpow.pop %v3766
      %v3768 = vmul.f32 %v3755, 1.442695
      %v3769 = vpow.pop %v3768
      %v3770 = vmul.f32 %v3756, 1.442695
      %v3771 = vpow.pop %v3770
      %v3772 = vmul.f32 %v3757, 1.442695
      %v3773 = vpow.pop %v3772
      %v3774 = vmul.f32 %v3758, 1.442695
      %v3775 = vpow.pop %v3774
      %v3776 = vmul.f32 %v3759, 1.442695
      %v3777 = vpow.pop %v3776
      %v3778 = vadd.f32 %v3761, 1.0
      %v3779 = vadd.f32 %v3763, 1.0
      %v3780 = vadd.f32 %v3765, 1.0
      %v3781 = vadd.f32 %v3767, 1.0
      %v3782 = vadd.f32 %v3769, 1.0
      %v3783 = vadd.f32 %v3771, 1.0
      %v3784 = vadd.f32 %v3773, 1.0
      %v3785 = vadd.f32 %v3775, 1.0
      %v3786 = vadd.f32 %v3777, 1.0
      %v3787 = vrcp.pop %v3778
      %v3788 = vmul.f32 1.0, %v3787
      %v3789 = vrcp.pop %v3779
      %v3790 = vmul.f32 1.0, %v3789
      %v3791 = vrcp.pop %v3780
      %v3792 = vmul.f32 1.0, %v3791
      %v3793 = vrcp.pop %v3781
      %v3794 = vmul.f32 1.0, %v3793
      %v3795 = vrcp.pop %v3782
      %v3796 = vmul.f32 1.0, %v3795
      %v3797 = vrcp.pop %v3783
      %v3798 = vmul.f32 1.0, %v3797
      %v3799 = vrcp.pop %v3784
      %v3800 = vmul.f32 1.0, %v3799
      %v3801 = vrcp.pop %v3785
      %v3802 = vmul.f32 1.0, %v3801
      %v3803 = vrcp.pop %v3786
      %v3804 = vmul.f32 1.0, %v3803
      %3814 = vrot.lane.b32.xlu0 %v3788, 120
      %v3815 = vpop.permute.xlu0 %3814
      %3816 = vrot.lane.b32.xlu0 %v3790, 120
      %v3817 = vpop.permute.xlu0 %3816
      %3818 = vrot.lane.b32.xlu0 %v3792, 120
      %v3819 = vpop.permute.xlu0 %3818
      %3820 = vrot.lane.b32.xlu0 %v3794, 120
      %v3821 = vpop.permute.xlu0 %3820
      %3822 = vrot.lane.b32.xlu0 %v3796, 120
      %v3823 = vpop.permute.xlu0 %3822
      %3824 = vrot.lane.b32.xlu0 %v3798, 120
      %v3825 = vpop.permute.xlu0 %3824
      %3826 = vrot.lane.b32.xlu0 %v3800, 120
      %v3827 = vpop.permute.xlu0 %3826
      %3828 = vrot.lane.b32.xlu0 %v3802, 120
      %v3829 = vpop.permute.xlu0 %3828
      %3830 = vrot.lane.b32.xlu0 %v3804, 120
      %v3831 = vpop.permute.xlu0 %3830
      %v3841 = vmul.f32 %v3742, %v3815
      %v3842 = vmul.f32 %v3743, %v3817
      %v3843 = vmul.f32 %v3744, %v3819
      %v3844 = vmul.f32 %v3745, %v3821
      %v3845 = vmul.f32 %v3746, %v3823
      %v3846 = vmul.f32 %v3747, %v3825
      %v3847 = vmul.f32 %v3748, %v3827
      %v3848 = vmul.f32 %v3749, %v3829
      %v3849 = vmul.f32 %v3750, %v3831
      %s3850 = scalar_lea.vmem %s10, 16
      %v3851 = vld [vmem:[%s3850] sm:$0xff]
      %s3852 = scalar_lea.vmem %s11, 2
      %v3853 = vld [vmem:[%s3852] sm:$0x1]
      %v3855 = vlaneseq
      %v3856 = vshrl.u32 %v3855, 7
      %v3857 = vsub.s32 0, %v3856
      %v3858 = vrot.slane %v3853, %v3857
      %v3861 = vsel %vm773, %v3841, 0
      %v3864 = vsel %vm773, %v3842, 0
      %v3867 = vsel %vm773, %v3843, 0
      %v3870 = vsel %vm773, %v3844, 0
      %v3873 = vsel %vm773, %v3845, 0
      %v3876 = vsel %vm773, %v3846, 0
      %v3879 = vsel %vm773, %v3847, 0
      %v3882 = vsel %vm773, %v3848, 0
      %v3885 = vsel %vm773, %v3849, 0
      %3887 = vmatprep.subr.mxu0 0.0
      %3888 = vmatpush1.msra.mxu0 0.0
      %3889 = vmatprep.subr.mxu0 0.0
      %3890 = vmatpush1.msra.mxu0 0.0
      %3891 = vmatprep.subr.mxu0 0.0
      %3892 = vmatpush1.msra.mxu0 0.0
      %3893 = vmatprep.subr.mxu0 0.0
      %3894 = vmatpush1.msra.mxu0 0.0
      %3895 = vmatprep.subr.mxu0 0.0
      %3896 = vmatpush1.msra.mxu0 0.0
      %3897 = vmatprep.subr.mxu0 0.0
      %3898 = vmatpush1.msra.mxu0 0.0
      %3899 = vmatprep.subr.mxu0 0.0
      %3900 = vmatpush1.msra.mxu0 0.0
      %3901 = vmatprep.subr.mxu0 0.0
      %3902 = vmatpush1.msra.mxu0 0.0
      %3903 = vmatprep.subr.mxu0 0.0
      %3904 = vmatpush1.msra.mxu0 0.0
      %3905 = vmatprep.subr.mxu0 0.0
      %3906 = vmatpush1.msra.mxu0 0.0
      %3907 = vmatprep.subr.mxu0 0.0
      %3908 = vmatpush1.msra.mxu0 0.0
      %3909 = vmatprep.subr.mxu0 0.0
      %3910 = vmatpush1.msra.mxu0 0.0
      %3911 = vmatprep.subr.mxu0 0.0
      %3912 = vmatpush1.msra.mxu0 0.0
      %3913 = vmatprep.subr.mxu0 0.0
      %3914 = vmatpush1.msra.mxu0 0.0
      %3915 = vmatprep.subr.mxu0 0.0
      %3916 = vmatpush1.msra.mxu0 0.0
      %3917 = vmatprep.subr.mxu0 0.0
      %3918 = vmatpush1.msra.mxu0 %v3851
      %3919 = vmatprep.subr.mxu0 0.0
      %3920 = vmatpush2.msra.mxu0 0.0
      %3921 = vmatprep.subr.mxu0 0.0
      %3922 = vmatpush2.msra.mxu0 0.0
      %3923 = vmatprep.subr.mxu0 0.0
      %3924 = vmatpush2.msra.mxu0 0.0
      %3925 = vmatprep.subr.mxu0 0.0
      %3926 = vmatpush2.msra.mxu0 0.0
      %3927 = vmatprep.subr.mxu0 0.0
      %3928 = vmatpush2.msra.mxu0 0.0
      %3929 = vmatprep.subr.mxu0 0.0
      %3930 = vmatpush2.msra.mxu0 0.0
      %3931 = vmatprep.subr.mxu0 0.0
      %3932 = vmatpush2.msra.mxu0 0.0
      %3933 = vmatprep.subr.mxu0 0.0
      %3934 = vmatpush2.msra.mxu0 0.0
      %3935 = vmatprep.subr.mxu0 0.0
      %3936 = vmatpush2.msra.mxu0 0.0
      %3937 = vmatprep.subr.mxu0 0.0
      %3938 = vmatpush2.msra.mxu0 0.0
      %3939 = vmatprep.subr.mxu0 0.0
      %3940 = vmatpush2.msra.mxu0 0.0
      %3941 = vmatprep.subr.mxu0 0.0
      %3942 = vmatpush2.msra.mxu0 0.0
      %3943 = vmatprep.subr.mxu0 0.0
      %3944 = vmatpush2.msra.mxu0 0.0
      %3945 = vmatprep.subr.mxu0 0.0
      %3946 = vmatpush2.msra.mxu0 0.0
      %3947 = vmatprep.subr.mxu0 0.0
      %3948 = vmatpush2.msra.mxu0 0.0
      %3949 = vmatprep.subr.mxu0 0.0
      %3950 = vmatpush2.msra.mxu0 0.0
      %3951 = vmatprep.mubr.f32.mxu0 0.0
      %3952 = vmatmul.mubr.f32.gmra.mxu0 %v3861
      %v3953 = vpop.f32.mrf.mxu0
      %v3954 = vpop.f32.mrf.mxu0
      %3955 = vmatprep.mubr.f32.mxu0 0.0
      %3956 = vmatmul.mubr.f32.gmra.mxu0 %v3864
      %v3957 = vpop.f32.mrf.mxu0
      %v3958 = vpop.f32.mrf.mxu0
      %3959 = vmatprep.mubr.f32.mxu0 0.0
      %3960 = vmatmul.mubr.f32.gmra.mxu0 %v3867
      %v3961 = vpop.f32.mrf.mxu0
      %v3962 = vadd.f32 %v3858, %v3961
      %v3963 = vpop.f32.mrf.mxu0
      %3964 = vmatprep.mubr.f32.mxu0 0.0
      %3965 = vmatmul.mubr.f32.gmra.mxu0 %v3870
      %v3966 = vpop.f32.mrf.mxu0
      %v3967 = vadd.f32 %v3858, %v3966
      %v3968 = vpop.f32.mrf.mxu0
      %3969 = vmatprep.mubr.f32.mxu0 0.0
      %3970 = vmatmul.mubr.f32.gmra.mxu0 %v3873
      %v3971 = vpop.f32.mrf.mxu0
      %v3972 = vadd.f32 %v3858, %v3971
      %v3973 = vpop.f32.mrf.mxu0
      %3974 = vmatprep.mubr.f32.mxu0 0.0
      %3975 = vmatmul.mubr.f32.gmra.mxu0 %v3876
      %v3976 = vpop.f32.mrf.mxu0
      %v3977 = vadd.f32 %v3858, %v3976
      %v3978 = vpop.f32.mrf.mxu0
      %3979 = vmatprep.mubr.f32.mxu0 0.0
      %3980 = vmatmul.mubr.f32.gmra.mxu0 %v3879
      %v3981 = vpop.f32.mrf.mxu0
      %v3982 = vadd.f32 %v3858, %v3981
      %v3983 = vpop.f32.mrf.mxu0
      %3984 = vmatprep.mubr.f32.mxu0 0.0
      %3985 = vmatmul.mubr.f32.gmra.mxu0 %v3882
      %v3986 = vpop.f32.mrf.mxu0
      %v3987 = vadd.f32 %v3858, %v3986
      %v3988 = vpop.f32.mrf.mxu0
      %3989 = vmatprep.mubr.f32.mxu0 0.0
      %3990 = vmatmul.mubr.f32.gmra.mxu0 %v3885
      %v3991 = vpop.f32.mrf.mxu0
      %v3992 = vadd.f32 %v3858, %v3991
      %v3993 = vpop.f32.mrf.mxu0
      %3994 = vdwg.mxu0
      %v3995 = vadd.f32 %v2744, %v3962
      %v3996 = vadd.f32 %v2745, %v3967
      %v3997 = vadd.f32 %v2746, %v3972
      %v3998 = vadd.f32 %v2747, %v3977
      %v3999 = vadd.f32 %v2748, %v3982
      %v4000 = vadd.f32 %v2749, %v3987
      %v4001 = vadd.f32 %v2750, %v3992
      %v4002 = vld [vmem:[%s3] sm:$0xff]
      %v4003 = vld [vmem:[%s3 + $0x8] sm:$0xff]
      %v4004 = vld [vmem:[%s3 + $0x10] sm:$0xff]
      %v4005 = vld [vmem:[%s3 + $0x18] sm:$0xff]
      %v4006 = vld [vmem:[%s3 + $0x20] sm:$0xff]
      %v4007 = vld [vmem:[%s3 + $0x28] sm:$0xff]
      %v4008 = vld [vmem:[%s3 + $0x30] sm:$0xff]
      %v4009 = vld [vmem:[%s3 + $0x38] sm:$0xff]
      %v4010 = vld [vmem:[%s3 + $0x40] sm:$0xff]
      %vm4011 = vcmask 588800
      %v4013 = vsel %vm4011, %v4002, 0
      %v4016 = vsel %vm4011, %v4003, 0
      %v4019 = vsel %vm4011, %v4004, 0
      %v4022 = vsel %vm4011, %v4005, 0
      %v4025 = vsel %vm4011, %v4006, 0
      %v4028 = vsel %vm4011, %v4007, 0
      %v4031 = vsel %vm4011, %v4008, 0
      %v4034 = vsel %vm4011, %v4009, 0
      %v4037 = vsel %vm4011, %v4010, 0
      %4039 = vmatprep.subr.mxu0 0.0
      %4040 = vmatpush1.msra.mxu0 0.0
      %4041 = vmatprep.subr.mxu0 0.0
      %4042 = vmatpush1.msra.mxu0 0.0
      %4043 = vmatprep.subr.mxu0 0.0
      %4044 = vmatpush1.msra.mxu0 0.0
      %4045 = vmatprep.subr.mxu0 0.0
      %4046 = vmatpush1.msra.mxu0 0.0
      %4047 = vmatprep.subr.mxu0 0.0
      %4048 = vmatpush1.msra.mxu0 0.0
      %4049 = vmatprep.subr.mxu0 0.0
      %4050 = vmatpush1.msra.mxu0 0.0
      %4051 = vmatprep.subr.mxu0 0.0
      %4052 = vmatpush1.msra.mxu0 0.0
      %4053 = vmatprep.subr.mxu0 0.0
      %4054 = vmatpush1.msra.mxu0 %v3849
      %4055 = vmatprep.subr.mxu0 0.0
      %4056 = vmatpush1.msra.mxu0 %v3848
      %4057 = vmatprep.subr.mxu0 0.0
      %4058 = vmatpush1.msra.mxu0 %v3847
      %4059 = vmatprep.subr.mxu0 0.0
      %4060 = vmatpush1.msra.mxu0 %v3846
      %4061 = vmatprep.subr.mxu0 0.0
      %4062 = vmatpush1.msra.mxu0 %v3845
      %4063 = vmatprep.subr.mxu0 0.0
      %4064 = vmatpush1.msra.mxu0 %v3844
      %4065 = vmatprep.subr.mxu0 0.0
      %4066 = vmatpush1.msra.mxu0 %v3843
      %4067 = vmatprep.subr.mxu0 0.0
      %4068 = vmatpush1.msra.mxu0 %v3842
      %4069 = vmatprep.subr.mxu0 0.0
      %4070 = vmatpush1.msra.mxu0 %v3841
      %4071 = vmatprep.subr.mxu0 0.0
      %4072 = vmatpush2.msra.mxu0 0.0
      %4073 = vmatprep.subr.mxu0 0.0
      %4074 = vmatpush2.msra.mxu0 0.0
      %4075 = vmatprep.subr.mxu0 0.0
      %4076 = vmatpush2.msra.mxu0 0.0
      %4077 = vmatprep.subr.mxu0 0.0
      %4078 = vmatpush2.msra.mxu0 0.0
      %4079 = vmatprep.subr.mxu0 0.0
      %4080 = vmatpush2.msra.mxu0 0.0
      %4081 = vmatprep.subr.mxu0 0.0
      %4082 = vmatpush2.msra.mxu0 0.0
      %4083 = vmatprep.subr.mxu0 0.0
      %4084 = vmatpush2.msra.mxu0 0.0
      %4085 = vmatprep.subr.mxu0 0.0
      %4086 = vmatpush2.msra.mxu0 0.0
      %4087 = vmatprep.subr.mxu0 0.0
      %4088 = vmatpush2.msra.mxu0 0.0
      %4089 = vmatprep.subr.mxu0 0.0
      %4090 = vmatpush2.msra.mxu0 0.0
      %4091 = vmatprep.subr.mxu0 0.0
      %4092 = vmatpush2.msra.mxu0 0.0
      %4093 = vmatprep.subr.mxu0 0.0
      %4094 = vmatpush2.msra.mxu0 0.0
      %4095 = vmatprep.subr.mxu0 0.0
      %4096 = vmatpush2.msra.mxu0 0.0
      %4097 = vmatprep.subr.mxu0 0.0
      %4098 = vmatpush2.msra.mxu0 0.0
      %4099 = vmatprep.subr.mxu0 0.0
      %4100 = vmatpush2.msra.mxu0 0.0
      %4101 = vmatprep.subr.mxu0 0.0
      %4102 = vmatpush2.msra.mxu0 0.0
      %4103 = vmatprep.mubr.f32.mxu0 0.0
      %4104 = vmatmul.mubr.f32.gmra.mxu0 %v4013
      %v4105 = vpop.f32.mrf.mxu0
      %v4106 = vadd.f32 0.0, %v4105
      %v4107 = vpop.f32.mrf.mxu0
      %4108 = vmatprep.mubr.f32.mxu0 0.0
      %4109 = vmatmul.mubr.f32.gmra.mxu0 %v4016
      %v4110 = vpop.f32.mrf.mxu0
      %v4111 = vadd.f32 0.0, %v4110
      %v4112 = vpop.f32.mrf.mxu0
      %4113 = vmatprep.mubr.f32.mxu0 0.0
      %4114 = vmatmul.mubr.f32.gmra.mxu0 %v4019
      %v4115 = vpop.f32.mrf.mxu0
      %v4116 = vadd.f32 0.0, %v4115
      %v4117 = vpop.f32.mrf.mxu0
      %4118 = vmatprep.mubr.f32.mxu0 0.0
      %4119 = vmatmul.mubr.f32.gmra.mxu0 %v4022
      %v4120 = vpop.f32.mrf.mxu0
      %v4121 = vadd.f32 0.0, %v4120
      %v4122 = vpop.f32.mrf.mxu0
      %4123 = vmatprep.mubr.f32.mxu0 0.0
      %4124 = vmatmul.mubr.f32.gmra.mxu0 %v4025
      %v4125 = vpop.f32.mrf.mxu0
      %v4126 = vadd.f32 0.0, %v4125
      %v4127 = vpop.f32.mrf.mxu0
      %4128 = vmatprep.mubr.f32.mxu0 0.0
      %4129 = vmatmul.mubr.f32.gmra.mxu0 %v4028
      %v4130 = vpop.f32.mrf.mxu0
      %v4131 = vadd.f32 0.0, %v4130
      %v4132 = vpop.f32.mrf.mxu0
      %4133 = vmatprep.mubr.f32.mxu0 0.0
      %4134 = vmatmul.mubr.f32.gmra.mxu0 %v4031
      %v4135 = vpop.f32.mrf.mxu0
      %v4136 = vadd.f32 0.0, %v4135
      %v4137 = vpop.f32.mrf.mxu0
      %4138 = vmatprep.mubr.f32.mxu0 0.0
      %4139 = vmatmul.mubr.f32.gmra.mxu0 %v4034
      %v4140 = vpop.f32.mrf.mxu0
      %v4141 = vadd.f32 0.0, %v4140
      %v4142 = vpop.f32.mrf.mxu0
      %4143 = vmatprep.mubr.f32.mxu0 0.0
      %4144 = vmatmul.mubr.f32.gmra.mxu0 %v4037
      %v4145 = vpop.f32.mrf.mxu0
      %v4146 = vadd.f32 0.0, %v4145
      %v4147 = vpop.f32.mrf.mxu0
      %4148 = vdwg.mxu0
      %4149 = vmatprep.subr.mxu0 0.0
      %4150 = vmatpush1.msra.mxu0 0.0
      %4151 = vmatprep.subr.mxu0 0.0
      %4152 = vmatpush1.msra.mxu0 0.0
      %4153 = vmatprep.subr.mxu0 0.0
      %4154 = vmatpush1.msra.mxu0 0.0
      %4155 = vmatprep.subr.mxu0 0.0
      %4156 = vmatpush1.msra.mxu0 0.0
      %4157 = vmatprep.subr.mxu0 0.0
      %4158 = vmatpush1.msra.mxu0 0.0
      %4159 = vmatprep.subr.mxu0 0.0
      %4160 = vmatpush1.msra.mxu0 0.0
      %4161 = vmatprep.subr.mxu0 0.0
      %4162 = vmatpush1.msra.mxu0 0.0
      %4163 = vmatprep.subr.mxu0 0.0
      %4164 = vmatpush1.msra.mxu0 %v4146
      %4165 = vmatprep.subr.mxu0 0.0
      %4166 = vmatpush1.msra.mxu0 %v4141
      %4167 = vmatprep.subr.mxu0 0.0
      %4168 = vmatpush1.msra.mxu0 %v4136
      %4169 = vmatprep.subr.mxu0 0.0
      %4170 = vmatpush1.msra.mxu0 %v4131
      %4171 = vmatprep.subr.mxu0 0.0
      %4172 = vmatpush1.msra.mxu0 %v4126
      %4173 = vmatprep.subr.mxu0 0.0
      %4174 = vmatpush1.msra.mxu0 %v4121
      %4175 = vmatprep.subr.mxu0 0.0
      %4176 = vmatpush1.msra.mxu0 %v4116
      %4177 = vmatprep.subr.mxu0 0.0
      %4178 = vmatpush1.msra.mxu0 %v4111
      %4179 = vmatprep.subr.mxu0 0.0
      %4180 = vmatpush1.msra.mxu0 %v4106
      %4181 = vmatprep.subr.mxu0 0.0
      %4182 = vmatpush2.msra.mxu0 0.0
      %4183 = vmatprep.subr.mxu0 0.0
      %4184 = vmatpush2.msra.mxu0 0.0
      %4185 = vmatprep.subr.mxu0 0.0
      %4186 = vmatpush2.msra.mxu0 0.0
      %4187 = vmatprep.subr.mxu0 0.0
      %4188 = vmatpush2.msra.mxu0 0.0
      %4189 = vmatprep.subr.mxu0 0.0
      %4190 = vmatpush2.msra.mxu0 0.0
      %4191 = vmatprep.subr.mxu0 0.0
      %4192 = vmatpush2.msra.mxu0 0.0
      %4193 = vmatprep.subr.mxu0 0.0
      %4194 = vmatpush2.msra.mxu0 0.0
      %4195 = vmatprep.subr.mxu0 0.0
      %4196 = vmatpush2.msra.mxu0 0.0
      %4197 = vmatprep.subr.mxu0 0.0
      %4198 = vmatpush2.msra.mxu0 0.0
      %4199 = vmatprep.subr.mxu0 0.0
      %4200 = vmatpush2.msra.mxu0 0.0
      %4201 = vmatprep.subr.mxu0 0.0
      %4202 = vmatpush2.msra.mxu0 0.0
      %4203 = vmatprep.subr.mxu0 0.0
      %4204 = vmatpush2.msra.mxu0 0.0
      %4205 = vmatprep.subr.mxu0 0.0
      %4206 = vmatpush2.msra.mxu0 0.0
      %4207 = vmatprep.subr.mxu0 0.0
      %4208 = vmatpush2.msra.mxu0 0.0
      %4209 = vmatprep.subr.mxu0 0.0
      %4210 = vmatpush2.msra.mxu0 0.0
      %4211 = vmatprep.subr.mxu0 0.0
      %4212 = vmatpush2.msra.mxu0 0.0
      %4213 = vmatprep.mubr.f32.mxu0 0.0
      %4214 = vmatmul.mubr.f32.gmra.mxu0 %v4013
      %v4215 = vpop.f32.mrf.mxu0
      %v4216 = vadd.f32 0.0, %v4215
      %v4217 = vpop.f32.mrf.mxu0
      %4218 = vmatprep.mubr.f32.mxu0 0.0
      %4219 = vmatmul.mubr.f32.gmra.mxu0 %v4016
      %v4220 = vpop.f32.mrf.mxu0
      %v4221 = vadd.f32 0.0, %v4220
      %v4222 = vpop.f32.mrf.mxu0
      %4223 = vmatprep.mubr.f32.mxu0 0.0
      %4224 = vmatmul.mubr.f32.gmra.mxu0 %v4019
      %v4225 = vpop.f32.mrf.mxu0
      %v4226 = vadd.f32 0.0, %v4225
      %v4227 = vpop.f32.mrf.mxu0
      %4228 = vmatprep.mubr.f32.mxu0 0.0
      %4229 = vmatmul.mubr.f32.gmra.mxu0 %v4022
      %v4230 = vpop.f32.mrf.mxu0
      %v4231 = vadd.f32 0.0, %v4230
      %v4232 = vpop.f32.mrf.mxu0
      %4233 = vmatprep.mubr.f32.mxu0 0.0
      %4234 = vmatmul.mubr.f32.gmra.mxu0 %v4025
      %v4235 = vpop.f32.mrf.mxu0
      %v4236 = vadd.f32 0.0, %v4235
      %v4237 = vpop.f32.mrf.mxu0
      %4238 = vmatprep.mubr.f32.mxu0 0.0
      %4239 = vmatmul.mubr.f32.gmra.mxu0 %v4028
      %v4240 = vpop.f32.mrf.mxu0
      %v4241 = vadd.f32 0.0, %v4240
      %v4242 = vpop.f32.mrf.mxu0
      %4243 = vmatprep.mubr.f32.mxu0 0.0
      %4244 = vmatmul.mubr.f32.gmra.mxu0 %v4031
      %v4245 = vpop.f32.mrf.mxu0
      %v4246 = vadd.f32 0.0, %v4245
      %v4247 = vpop.f32.mrf.mxu0
      %4248 = vmatprep.mubr.f32.mxu0 0.0
      %4249 = vmatmul.mubr.f32.gmra.mxu0 %v4034
      %v4250 = vpop.f32.mrf.mxu0
      %v4251 = vadd.f32 0.0, %v4250
      %v4252 = vpop.f32.mrf.mxu0
      %4253 = vmatprep.mubr.f32.mxu0 0.0
      %4254 = vmatmul.mubr.f32.gmra.mxu0 %v4037
      %v4255 = vpop.f32.mrf.mxu0
      %v4256 = vadd.f32 0.0, %v4255
      %v4257 = vpop.f32.mrf.mxu0
      %4258 = vdwg.mxu0
      %s4259 = scalar_lea.vmem %s12, 48
      %v4260 = vld [vmem:[%s4259] sm:$0xff]
      %s4261 = scalar_lea.vmem %s12, 56
      %v4262 = vld [vmem:[%s4261] sm:$0xff]
      %v4264 = vsel %vm773, %v4106, 0
      %v4267 = vsel %vm773, %v4111, 0
      %v4270 = vsel %vm773, %v4116, 0
      %v4273 = vsel %vm773, %v4121, 0
      %v4276 = vsel %vm773, %v4126, 0
      %v4279 = vsel %vm773, %v4131, 0
      %v4282 = vsel %vm773, %v4136, 0
      %v4285 = vsel %vm773, %v4141, 0
      %v4288 = vsel %vm773, %v4146, 0
      %4290 = vmatprep.subr.mxu0 0.0
      %4291 = vmatpush1.msra.mxu0 0.0
      %4292 = vmatprep.subr.mxu0 0.0
      %4293 = vmatpush1.msra.mxu0 0.0
      %4294 = vmatprep.subr.mxu0 0.0
      %4295 = vmatpush1.msra.mxu0 0.0
      %4296 = vmatprep.subr.mxu0 0.0
      %4297 = vmatpush1.msra.mxu0 0.0
      %4298 = vmatprep.subr.mxu0 0.0
      %4299 = vmatpush1.msra.mxu0 0.0
      %4300 = vmatprep.subr.mxu0 0.0
      %4301 = vmatpush1.msra.mxu0 0.0
      %4302 = vmatprep.subr.mxu0 0.0
      %4303 = vmatpush1.msra.mxu0 0.0
      %4304 = vmatprep.subr.mxu0 0.0
      %4305 = vmatpush1.msra.mxu0 0.0
      %4306 = vmatprep.subr.mxu0 0.0
      %4307 = vmatpush1.msra.mxu0 0.0
      %4308 = vmatprep.subr.mxu0 0.0
      %4309 = vmatpush1.msra.mxu0 0.0
      %4310 = vmatprep.subr.mxu0 0.0
      %4311 = vmatpush1.msra.mxu0 0.0
      %4312 = vmatprep.subr.mxu0 0.0
      %4313 = vmatpush1.msra.mxu0 0.0
      %4314 = vmatprep.subr.mxu0 0.0
      %4315 = vmatpush1.msra.mxu0 0.0
      %4316 = vmatprep.subr.mxu0 0.0
      %4317 = vmatpush1.msra.mxu0 0.0
      %4318 = vmatprep.subr.mxu0 0.0
      %4319 = vmatpush1.msra.mxu0 0.0
      %4320 = vmatprep.subr.mxu0 0.0
      %4321 = vmatpush1.msra.mxu0 %v4262
      %4322 = vmatprep.subr.mxu0 0.0
      %4323 = vmatpush2.msra.mxu0 0.0
      %4324 = vmatprep.subr.mxu0 0.0
      %4325 = vmatpush2.msra.mxu0 0.0
      %4326 = vmatprep.subr.mxu0 0.0
      %4327 = vmatpush2.msra.mxu0 0.0
      %4328 = vmatprep.subr.mxu0 0.0
      %4329 = vmatpush2.msra.mxu0 0.0
      %4330 = vmatprep.subr.mxu0 0.0
      %4331 = vmatpush2.msra.mxu0 0.0
      %4332 = vmatprep.subr.mxu0 0.0
      %4333 = vmatpush2.msra.mxu0 0.0
      %4334 = vmatprep.subr.mxu0 0.0
      %4335 = vmatpush2.msra.mxu0 0.0
      %4336 = vmatprep.subr.mxu0 0.0
      %4337 = vmatpush2.msra.mxu0 0.0
      %4338 = vmatprep.subr.mxu0 0.0
      %4339 = vmatpush2.msra.mxu0 0.0
      %4340 = vmatprep.subr.mxu0 0.0
      %4341 = vmatpush2.msra.mxu0 0.0
      %4342 = vmatprep.subr.mxu0 0.0
      %4343 = vmatpush2.msra.mxu0 0.0
      %4344 = vmatprep.subr.mxu0 0.0
      %4345 = vmatpush2.msra.mxu0 0.0
      %4346 = vmatprep.subr.mxu0 0.0
      %4347 = vmatpush2.msra.mxu0 0.0
      %4348 = vmatprep.subr.mxu0 0.0
      %4349 = vmatpush2.msra.mxu0 0.0
      %4350 = vmatprep.subr.mxu0 0.0
      %4351 = vmatpush2.msra.mxu0 0.0
      %4352 = vmatprep.subr.mxu0 0.0
      %4353 = vmatpush2.msra.mxu0 0.0
      %4354 = vmatprep.mubr.f32.mxu0 0.0
      %4355 = vmatmul.mubr.f32.gmra.mxu0 %v4264
      %v4356 = vpop.f32.mrf.mxu0
      %v4357 = vadd.f32 0.0, %v4356
      %v4358 = vpop.f32.mrf.mxu0
      %4359 = vmatprep.mubr.f32.mxu0 0.0
      %4360 = vmatmul.mubr.f32.gmra.mxu0 %v4267
      %v4361 = vpop.f32.mrf.mxu0
      %v4362 = vadd.f32 0.0, %v4361
      %v4363 = vpop.f32.mrf.mxu0
      %4364 = vmatprep.mubr.f32.mxu0 0.0
      %4365 = vmatmul.mubr.f32.gmra.mxu0 %v4270
      %v4366 = vpop.f32.mrf.mxu0
      %v4367 = vadd.f32 0.0, %v4366
      %v4368 = vpop.f32.mrf.mxu0
      %4369 = vmatprep.mubr.f32.mxu0 0.0
      %4370 = vmatmul.mubr.f32.gmra.mxu0 %v4273
      %v4371 = vpop.f32.mrf.mxu0
      %v4372 = vadd.f32 0.0, %v4371
      %v4373 = vpop.f32.mrf.mxu0
      %4374 = vmatprep.mubr.f32.mxu0 0.0
      %4375 = vmatmul.mubr.f32.gmra.mxu0 %v4276
      %v4376 = vpop.f32.mrf.mxu0
      %v4377 = vadd.f32 0.0, %v4376
      %v4378 = vpop.f32.mrf.mxu0
      %4379 = vmatprep.mubr.f32.mxu0 0.0
      %4380 = vmatmul.mubr.f32.gmra.mxu0 %v4279
      %v4381 = vpop.f32.mrf.mxu0
      %v4382 = vadd.f32 0.0, %v4381
      %v4383 = vpop.f32.mrf.mxu0
      %4384 = vmatprep.mubr.f32.mxu0 0.0
      %4385 = vmatmul.mubr.f32.gmra.mxu0 %v4282
      %v4386 = vpop.f32.mrf.mxu0
      %v4387 = vadd.f32 0.0, %v4386
      %v4388 = vpop.f32.mrf.mxu0
      %4389 = vmatprep.mubr.f32.mxu0 0.0
      %4390 = vmatmul.mubr.f32.gmra.mxu0 %v4285
      %v4391 = vpop.f32.mrf.mxu0
      %v4392 = vadd.f32 0.0, %v4391
      %v4393 = vpop.f32.mrf.mxu0
      %4394 = vmatprep.mubr.f32.mxu0 0.0
      %4395 = vmatmul.mubr.f32.gmra.mxu0 %v4288
      %v4396 = vpop.f32.mrf.mxu0
      %v4397 = vadd.f32 0.0, %v4396
      %v4398 = vpop.f32.mrf.mxu0
      %4399 = vdwg.mxu0
      %4400 = vmatprep.subr.mxu0 0.0
      %4401 = vmatpush1.msra.mxu0 0.0
      %4402 = vmatprep.subr.mxu0 0.0
      %4403 = vmatpush1.msra.mxu0 0.0
      %4404 = vmatprep.subr.mxu0 0.0
      %4405 = vmatpush1.msra.mxu0 0.0
      %4406 = vmatprep.subr.mxu0 0.0
      %4407 = vmatpush1.msra.mxu0 0.0
      %4408 = vmatprep.subr.mxu0 0.0
      %4409 = vmatpush1.msra.mxu0 0.0
      %4410 = vmatprep.subr.mxu0 0.0
      %4411 = vmatpush1.msra.mxu0 0.0
      %4412 = vmatprep.subr.mxu0 0.0
      %4413 = vmatpush1.msra.mxu0 0.0
      %4414 = vmatprep.subr.mxu0 0.0
      %4415 = vmatpush1.msra.mxu0 0.0
      %4416 = vmatprep.subr.mxu0 0.0
      %4417 = vmatpush1.msra.mxu0 0.0
      %4418 = vmatprep.subr.mxu0 0.0
      %4419 = vmatpush1.msra.mxu0 0.0
      %4420 = vmatprep.subr.mxu0 0.0
      %4421 = vmatpush1.msra.mxu0 0.0
      %4422 = vmatprep.subr.mxu0 0.0
      %4423 = vmatpush1.msra.mxu0 0.0
      %4424 = vmatprep.subr.mxu0 0.0
      %4425 = vmatpush1.msra.mxu0 0.0
      %4426 = vmatprep.subr.mxu0 0.0
      %4427 = vmatpush1.msra.mxu0 0.0
      %4428 = vmatprep.subr.mxu0 0.0
      %4429 = vmatpush1.msra.mxu0 0.0
      %4430 = vmatprep.subr.mxu0 0.0
      %4431 = vmatpush1.msra.mxu0 %v4260
      %4432 = vmatprep.subr.mxu0 0.0
      %4433 = vmatpush2.msra.mxu0 0.0
      %4434 = vmatprep.subr.mxu0 0.0
      %4435 = vmatpush2.msra.mxu0 0.0
      %4436 = vmatprep.subr.mxu0 0.0
      %4437 = vmatpush2.msra.mxu0 0.0
      %4438 = vmatprep.subr.mxu0 0.0
      %4439 = vmatpush2.msra.mxu0 0.0
      %4440 = vmatprep.subr.mxu0 0.0
      %4441 = vmatpush2.msra.mxu0 0.0
      %4442 = vmatprep.subr.mxu0 0.0
      %4443 = vmatpush2.msra.mxu0 0.0
      %4444 = vmatprep.subr.mxu0 0.0
      %4445 = vmatpush2.msra.mxu0 0.0
      %4446 = vmatprep.subr.mxu0 0.0
      %4447 = vmatpush2.msra.mxu0 0.0
      %4448 = vmatprep.subr.mxu0 0.0
      %4449 = vmatpush2.msra.mxu0 0.0
      %4450 = vmatprep.subr.mxu0 0.0
      %4451 = vmatpush2.msra.mxu0 0.0
      %4452 = vmatprep.subr.mxu0 0.0
      %4453 = vmatpush2.msra.mxu0 0.0
      %4454 = vmatprep.subr.mxu0 0.0
      %4455 = vmatpush2.msra.mxu0 0.0
      %4456 = vmatprep.subr.mxu0 0.0
      %4457 = vmatpush2.msra.mxu0 0.0
      %4458 = vmatprep.subr.mxu0 0.0
      %4459 = vmatpush2.msra.mxu0 0.0
      %4460 = vmatprep.subr.mxu0 0.0
      %4461 = vmatpush2.msra.mxu0 0.0
      %4462 = vmatprep.subr.mxu0 0.0
      %4463 = vmatpush2.msra.mxu0 0.0
      %4464 = vmatprep.mubr.f32.mxu0 0.0
      %4465 = vmatmul.mubr.f32.gmra.mxu0 %v3861
      %v4466 = vpop.f32.mrf.mxu0
      %v4467 = vadd.f32 %v4357, %v4466
      %v4468 = vpop.f32.mrf.mxu0
      %4469 = vmatprep.mubr.f32.mxu0 0.0
      %4470 = vmatmul.mubr.f32.gmra.mxu0 %v3864
      %v4471 = vpop.f32.mrf.mxu0
      %v4472 = vadd.f32 %v4362, %v4471
      %v4473 = vpop.f32.mrf.mxu0
      %4474 = vmatprep.mubr.f32.mxu0 0.0
      %4475 = vmatmul.mubr.f32.gmra.mxu0 %v3867
      %v4476 = vpop.f32.mrf.mxu0
      %v4477 = vadd.f32 %v4367, %v4476
      %v4478 = vpop.f32.mrf.mxu0
      %4479 = vmatprep.mubr.f32.mxu0 0.0
      %4480 = vmatmul.mubr.f32.gmra.mxu0 %v3870
      %v4481 = vpop.f32.mrf.mxu0
      %v4482 = vadd.f32 %v4372, %v4481
      %v4483 = vpop.f32.mrf.mxu0
      %4484 = vmatprep.mubr.f32.mxu0 0.0
      %4485 = vmatmul.mubr.f32.gmra.mxu0 %v3873
      %v4486 = vpop.f32.mrf.mxu0
      %v4487 = vadd.f32 %v4377, %v4486
      %v4488 = vpop.f32.mrf.mxu0
      %4489 = vmatprep.mubr.f32.mxu0 0.0
      %4490 = vmatmul.mubr.f32.gmra.mxu0 %v3876
      %v4491 = vpop.f32.mrf.mxu0
      %v4492 = vadd.f32 %v4382, %v4491
      %v4493 = vpop.f32.mrf.mxu0
      %4494 = vmatprep.mubr.f32.mxu0 0.0
      %4495 = vmatmul.mubr.f32.gmra.mxu0 %v3879
      %v4496 = vpop.f32.mrf.mxu0
      %v4497 = vadd.f32 %v4387, %v4496
      %v4498 = vpop.f32.mrf.mxu0
      %4499 = vmatprep.mubr.f32.mxu0 0.0
      %4500 = vmatmul.mubr.f32.gmra.mxu0 %v3882
      %v4501 = vpop.f32.mrf.mxu0
      %v4502 = vadd.f32 %v4392, %v4501
      %v4503 = vpop.f32.mrf.mxu0
      %4504 = vmatprep.mubr.f32.mxu0 0.0
      %4505 = vmatmul.mubr.f32.gmra.mxu0 %v3885
      %v4506 = vpop.f32.mrf.mxu0
      %v4507 = vadd.f32 %v4397, %v4506
      %v4508 = vpop.f32.mrf.mxu0
      %4509 = vdwg.mxu0
      %s4510 = scalar_lea.vmem %s12, 64
      %v4511 = vld [vmem:[%s4510] sm:$0xff]
      %v4513 = vsel %vm773, %v4216, 0
      %v4516 = vsel %vm773, %v4221, 0
      %v4519 = vsel %vm773, %v4226, 0
      %v4522 = vsel %vm773, %v4231, 0
      %v4525 = vsel %vm773, %v4236, 0
      %v4528 = vsel %vm773, %v4241, 0
      %v4531 = vsel %vm773, %v4246, 0
      %v4534 = vsel %vm773, %v4251, 0
      %v4537 = vsel %vm773, %v4256, 0
      %4539 = vmatprep.subr.mxu0 0.0
      %4540 = vmatpush1.msra.mxu0 0.0
      %4541 = vmatprep.subr.mxu0 0.0
      %4542 = vmatpush1.msra.mxu0 0.0
      %4543 = vmatprep.subr.mxu0 0.0
      %4544 = vmatpush1.msra.mxu0 0.0
      %4545 = vmatprep.subr.mxu0 0.0
      %4546 = vmatpush1.msra.mxu0 0.0
      %4547 = vmatprep.subr.mxu0 0.0
      %4548 = vmatpush1.msra.mxu0 0.0
      %4549 = vmatprep.subr.mxu0 0.0
      %4550 = vmatpush1.msra.mxu0 0.0
      %4551 = vmatprep.subr.mxu0 0.0
      %4552 = vmatpush1.msra.mxu0 0.0
      %4553 = vmatprep.subr.mxu0 0.0
      %4554 = vmatpush1.msra.mxu0 0.0
      %4555 = vmatprep.subr.mxu0 0.0
      %4556 = vmatpush1.msra.mxu0 0.0
      %4557 = vmatprep.subr.mxu0 0.0
      %4558 = vmatpush1.msra.mxu0 0.0
      %4559 = vmatprep.subr.mxu0 0.0
      %4560 = vmatpush1.msra.mxu0 0.0
      %4561 = vmatprep.subr.mxu0 0.0
      %4562 = vmatpush1.msra.mxu0 0.0
      %4563 = vmatprep.subr.mxu0 0.0
      %4564 = vmatpush1.msra.mxu0 0.0
      %4565 = vmatprep.subr.mxu0 0.0
      %4566 = vmatpush1.msra.mxu0 0.0
      %4567 = vmatprep.subr.mxu0 0.0
      %4568 = vmatpush1.msra.mxu0 0.0
      %4569 = vmatprep.subr.mxu0 0.0
      %4570 = vmatpush1.msra.mxu0 %v4511
      %4571 = vmatprep.subr.mxu0 0.0
      %4572 = vmatpush2.msra.mxu0 0.0
      %4573 = vmatprep.subr.mxu0 0.0
      %4574 = vmatpush2.msra.mxu0 0.0
      %4575 = vmatprep.subr.mxu0 0.0
      %4576 = vmatpush2.msra.mxu0 0.0
      %4577 = vmatprep.subr.mxu0 0.0
      %4578 = vmatpush2.msra.mxu0 0.0
      %4579 = vmatprep.subr.mxu0 0.0
      %4580 = vmatpush2.msra.mxu0 0.0
      %4581 = vmatprep.subr.mxu0 0.0
      %4582 = vmatpush2.msra.mxu0 0.0
      %4583 = vmatprep.subr.mxu0 0.0
      %4584 = vmatpush2.msra.mxu0 0.0
      %4585 = vmatprep.subr.mxu0 0.0
      %4586 = vmatpush2.msra.mxu0 0.0
      %4587 = vmatprep.subr.mxu0 0.0
      %4588 = vmatpush2.msra.mxu0 0.0
      %4589 = vmatprep.subr.mxu0 0.0
      %4590 = vmatpush2.msra.mxu0 0.0
      %4591 = vmatprep.subr.mxu0 0.0
      %4592 = vmatpush2.msra.mxu0 0.0
      %4593 = vmatprep.subr.mxu0 0.0
      %4594 = vmatpush2.msra.mxu0 0.0
      %4595 = vmatprep.subr.mxu0 0.0
      %4596 = vmatpush2.msra.mxu0 0.0
      %4597 = vmatprep.subr.mxu0 0.0
      %4598 = vmatpush2.msra.mxu0 0.0
      %4599 = vmatprep.subr.mxu0 0.0
      %4600 = vmatpush2.msra.mxu0 0.0
      %4601 = vmatprep.subr.mxu0 0.0
      %4602 = vmatpush2.msra.mxu0 0.0
      %4603 = vmatprep.mubr.f32.mxu0 0.0
      %4604 = vmatmul.mubr.f32.gmra.mxu0 %v4513
      %v4605 = vpop.f32.mrf.mxu0
      %v4606 = vadd.f32 0.0, %v4605
      %v4607 = vpop.f32.mrf.mxu0
      %4608 = vmatprep.mubr.f32.mxu0 0.0
      %4609 = vmatmul.mubr.f32.gmra.mxu0 %v4516
      %v4610 = vpop.f32.mrf.mxu0
      %v4611 = vadd.f32 0.0, %v4610
      %v4612 = vpop.f32.mrf.mxu0
      %4613 = vmatprep.mubr.f32.mxu0 0.0
      %4614 = vmatmul.mubr.f32.gmra.mxu0 %v4519
      %v4615 = vpop.f32.mrf.mxu0
      %v4616 = vadd.f32 0.0, %v4615
      %v4617 = vpop.f32.mrf.mxu0
      %4618 = vmatprep.mubr.f32.mxu0 0.0
      %4619 = vmatmul.mubr.f32.gmra.mxu0 %v4522
      %v4620 = vpop.f32.mrf.mxu0
      %v4621 = vadd.f32 0.0, %v4620
      %v4622 = vpop.f32.mrf.mxu0
      %4623 = vmatprep.mubr.f32.mxu0 0.0
      %4624 = vmatmul.mubr.f32.gmra.mxu0 %v4525
      %v4625 = vpop.f32.mrf.mxu0
      %v4626 = vadd.f32 0.0, %v4625
      %v4627 = vpop.f32.mrf.mxu0
      %4628 = vmatprep.mubr.f32.mxu0 0.0
      %4629 = vmatmul.mubr.f32.gmra.mxu0 %v4528
      %v4630 = vpop.f32.mrf.mxu0
      %v4631 = vadd.f32 0.0, %v4630
      %v4632 = vpop.f32.mrf.mxu0
      %4633 = vmatprep.mubr.f32.mxu0 0.0
      %4634 = vmatmul.mubr.f32.gmra.mxu0 %v4531
      %v4635 = vpop.f32.mrf.mxu0
      %v4636 = vadd.f32 0.0, %v4635
      %v4637 = vpop.f32.mrf.mxu0
      %4638 = vmatprep.mubr.f32.mxu0 0.0
      %4639 = vmatmul.mubr.f32.gmra.mxu0 %v4534
      %v4640 = vpop.f32.mrf.mxu0
      %v4641 = vadd.f32 0.0, %v4640
      %v4642 = vpop.f32.mrf.mxu0
      %4643 = vmatprep.mubr.f32.mxu0 0.0
      %4644 = vmatmul.mubr.f32.gmra.mxu0 %v4537
      %v4645 = vpop.f32.mrf.mxu0
      %v4646 = vadd.f32 0.0, %v4645
      %v4647 = vpop.f32.mrf.mxu0
      %4648 = vdwg.mxu0
      %v4649 = vadd.f32 %v4467, %v4606
      %v4650 = vadd.f32 %v4472, %v4611
      %v4651 = vadd.f32 %v4477, %v4616
      %v4652 = vadd.f32 %v4482, %v4621
      %v4653 = vadd.f32 %v4487, %v4626
      %v4654 = vadd.f32 %v4492, %v4631
      %v4655 = vadd.f32 %v4497, %v4636
      %v4656 = vadd.f32 %v4502, %v4641
      %v4657 = vadd.f32 %v4507, %v4646
      %s4658 = scalar_lea.vmem %s13, 2
      %v4659 = vld [vmem:[%s4658] sm:$0x1]
      %v4661 = vlaneseq
      %v4662 = vshrl.u32 %v4661, 7
      %v4663 = vsub.s32 0, %v4662
      %v4664 = vrot.slane %v4659, %v4663
      %v4666 = vadd.f32 %v4649, %v4664
      %v4667 = vadd.f32 %v4650, %v4664
      %v4668 = vadd.f32 %v4651, %v4664
      %v4669 = vadd.f32 %v4652, %v4664
      %v4670 = vadd.f32 %v4653, %v4664
      %v4671 = vadd.f32 %v4654, %v4664
      %v4672 = vadd.f32 %v4655, %v4664
      %v4673 = vadd.f32 %v4656, %v4664
      %v4674 = vadd.f32 %v4657, %v4664
      %v4675 = vadd.f32 %v4666, %v3462
      %v4676 = vadd.f32 %v4667, %v3463
      %v4677 = vadd.f32 %v4668, %v3464
      %v4678 = vadd.f32 %v4669, %v3465
      %v4679 = vadd.f32 %v4670, %v3466
      %v4680 = vadd.f32 %v4671, %v3467
      %v4681 = vadd.f32 %v4672, %v3468
      %v4682 = vadd.f32 %v4673, %v3469
      %v4683 = vadd.f32 %v4674, %v3470
      %s4684 = scalar_lea.vmem %s7, 24
      %v4685 = vld [vmem:[%s4684] sm:$0xff]
      %s4686 = scalar_lea.vmem %s8, 24
      %v4687 = vld [vmem:[%s4686] sm:$0xff]
      %v4689 = vsel %vm773, %v4677, 0
      %v4692 = vsel %vm773, %v4678, 0
      %v4695 = vsel %vm773, %v4679, 0
      %v4698 = vsel %vm773, %v4680, 0
      %v4701 = vsel %vm773, %v4681, 0
      %v4704 = vsel %vm773, %v4682, 0
      %v4707 = vsel %vm773, %v4683, 0
      %4709 = vmatprep.subr.mxu0 0.0
      %4710 = vmatpush1.msra.mxu0 0.0
      %4711 = vmatprep.subr.mxu0 0.0
      %4712 = vmatpush1.msra.mxu0 0.0
      %4713 = vmatprep.subr.mxu0 0.0
      %4714 = vmatpush1.msra.mxu0 0.0
      %4715 = vmatprep.subr.mxu0 0.0
      %4716 = vmatpush1.msra.mxu0 0.0
      %4717 = vmatprep.subr.mxu0 0.0
      %4718 = vmatpush1.msra.mxu0 0.0
      %4719 = vmatprep.subr.mxu0 0.0
      %4720 = vmatpush1.msra.mxu0 0.0
      %4721 = vmatprep.subr.mxu0 0.0
      %4722 = vmatpush1.msra.mxu0 0.0
      %4723 = vmatprep.subr.mxu0 0.0
      %4724 = vmatpush1.msra.mxu0 0.0
      %4725 = vmatprep.subr.mxu0 0.0
      %4726 = vmatpush1.msra.mxu0 0.0
      %4727 = vmatprep.subr.mxu0 0.0
      %4728 = vmatpush1.msra.mxu0 0.0
      %4729 = vmatprep.subr.mxu0 0.0
      %4730 = vmatpush1.msra.mxu0 0.0
      %4731 = vmatprep.subr.mxu0 0.0
      %4732 = vmatpush1.msra.mxu0 0.0
      %4733 = vmatprep.subr.mxu0 0.0
      %4734 = vmatpush1.msra.mxu0 0.0
      %4735 = vmatprep.subr.mxu0 0.0
      %4736 = vmatpush1.msra.mxu0 0.0
      %4737 = vmatprep.subr.mxu0 0.0
      %4738 = vmatpush1.msra.mxu0 0.0
      %4739 = vmatprep.subr.mxu0 0.0
      %4740 = vmatpush1.msra.mxu0 %v4687
      %4741 = vmatprep.subr.mxu0 0.0
      %4742 = vmatpush2.msra.mxu0 0.0
      %4743 = vmatprep.subr.mxu0 0.0
      %4744 = vmatpush2.msra.mxu0 0.0
      %4745 = vmatprep.subr.mxu0 0.0
      %4746 = vmatpush2.msra.mxu0 0.0
      %4747 = vmatprep.subr.mxu0 0.0
      %4748 = vmatpush2.msra.mxu0 0.0
      %4749 = vmatprep.subr.mxu0 0.0
      %4750 = vmatpush2.msra.mxu0 0.0
      %4751 = vmatprep.subr.mxu0 0.0
      %4752 = vmatpush2.msra.mxu0 0.0
      %4753 = vmatprep.subr.mxu0 0.0
      %4754 = vmatpush2.msra.mxu0 0.0
      %4755 = vmatprep.subr.mxu0 0.0
      %4756 = vmatpush2.msra.mxu0 0.0
      %4757 = vmatprep.subr.mxu0 0.0
      %4758 = vmatpush2.msra.mxu0 0.0
      %4759 = vmatprep.subr.mxu0 0.0
      %4760 = vmatpush2.msra.mxu0 0.0
      %4761 = vmatprep.subr.mxu0 0.0
      %4762 = vmatpush2.msra.mxu0 0.0
      %4763 = vmatprep.subr.mxu0 0.0
      %4764 = vmatpush2.msra.mxu0 0.0
      %4765 = vmatprep.subr.mxu0 0.0
      %4766 = vmatpush2.msra.mxu0 0.0
      %4767 = vmatprep.subr.mxu0 0.0
      %4768 = vmatpush2.msra.mxu0 0.0
      %4769 = vmatprep.subr.mxu0 0.0
      %4770 = vmatpush2.msra.mxu0 0.0
      %4771 = vmatprep.subr.mxu0 0.0
      %4772 = vmatpush2.msra.mxu0 0.0
      %4773 = vmatprep.mubr.f32.mxu0 0.0
      %4774 = vmatmul.mubr.f32.gmra.mxu0 %v4689
      %v4775 = vpop.f32.mrf.mxu0
      %v4776 = vadd.f32 0.0, %v4775
      %v4777 = vpop.f32.mrf.mxu0
      %4778 = vmatprep.mubr.f32.mxu0 0.0
      %4779 = vmatmul.mubr.f32.gmra.mxu0 %v4692
      %v4780 = vpop.f32.mrf.mxu0
      %v4781 = vadd.f32 0.0, %v4780
      %v4782 = vpop.f32.mrf.mxu0
      %4783 = vmatprep.mubr.f32.mxu0 0.0
      %4784 = vmatmul.mubr.f32.gmra.mxu0 %v4695
      %v4785 = vpop.f32.mrf.mxu0
      %v4786 = vadd.f32 0.0, %v4785
      %v4787 = vpop.f32.mrf.mxu0
      %4788 = vmatprep.mubr.f32.mxu0 0.0
      %4789 = vmatmul.mubr.f32.gmra.mxu0 %v4698
      %v4790 = vpop.f32.mrf.mxu0
      %v4791 = vadd.f32 0.0, %v4790
      %v4792 = vpop.f32.mrf.mxu0
      %4793 = vmatprep.mubr.f32.mxu0 0.0
      %4794 = vmatmul.mubr.f32.gmra.mxu0 %v4701
      %v4795 = vpop.f32.mrf.mxu0
      %v4796 = vadd.f32 0.0, %v4795
      %v4797 = vpop.f32.mrf.mxu0
      %4798 = vmatprep.mubr.f32.mxu0 0.0
      %4799 = vmatmul.mubr.f32.gmra.mxu0 %v4704
      %v4800 = vpop.f32.mrf.mxu0
      %v4801 = vadd.f32 0.0, %v4800
      %v4802 = vpop.f32.mrf.mxu0
      %4803 = vmatprep.mubr.f32.mxu0 0.0
      %4804 = vmatmul.mubr.f32.gmra.mxu0 %v4707
      %v4805 = vpop.f32.mrf.mxu0
      %v4806 = vadd.f32 0.0, %v4805
      %v4807 = vpop.f32.mrf.mxu0
      %4808 = vdwg.mxu0
      %v4810 = vsel %vm773, %v4675, 0
      %v4813 = vsel %vm773, %v4676, 0
      %4815 = vmatprep.subr.mxu0 0.0
      %4816 = vmatpush1.msra.mxu0 0.0
      %4817 = vmatprep.subr.mxu0 0.0
      %4818 = vmatpush1.msra.mxu0 0.0
      %4819 = vmatprep.subr.mxu0 0.0
      %4820 = vmatpush1.msra.mxu0 0.0
      %4821 = vmatprep.subr.mxu0 0.0
      %4822 = vmatpush1.msra.mxu0 0.0
      %4823 = vmatprep.subr.mxu0 0.0
      %4824 = vmatpush1.msra.mxu0 0.0
      %4825 = vmatprep.subr.mxu0 0.0
      %4826 = vmatpush1.msra.mxu0 0.0
      %4827 = vmatprep.subr.mxu0 0.0
      %4828 = vmatpush1.msra.mxu0 0.0
      %4829 = vmatprep.subr.mxu0 0.0
      %4830 = vmatpush1.msra.mxu0 0.0
      %4831 = vmatprep.subr.mxu0 0.0
      %4832 = vmatpush1.msra.mxu0 0.0
      %4833 = vmatprep.subr.mxu0 0.0
      %4834 = vmatpush1.msra.mxu0 0.0
      %4835 = vmatprep.subr.mxu0 0.0
      %4836 = vmatpush1.msra.mxu0 0.0
      %4837 = vmatprep.subr.mxu0 0.0
      %4838 = vmatpush1.msra.mxu0 0.0
      %4839 = vmatprep.subr.mxu0 0.0
      %4840 = vmatpush1.msra.mxu0 0.0
      %4841 = vmatprep.subr.mxu0 0.0
      %4842 = vmatpush1.msra.mxu0 0.0
      %4843 = vmatprep.subr.mxu0 0.0
      %4844 = vmatpush1.msra.mxu0 0.0
      %4845 = vmatprep.subr.mxu0 0.0
      %4846 = vmatpush1.msra.mxu0 %v4685
      %4847 = vmatprep.subr.mxu0 0.0
      %4848 = vmatpush2.msra.mxu0 0.0
      %4849 = vmatprep.subr.mxu0 0.0
      %4850 = vmatpush2.msra.mxu0 0.0
      %4851 = vmatprep.subr.mxu0 0.0
      %4852 = vmatpush2.msra.mxu0 0.0
      %4853 = vmatprep.subr.mxu0 0.0
      %4854 = vmatpush2.msra.mxu0 0.0
      %4855 = vmatprep.subr.mxu0 0.0
      %4856 = vmatpush2.msra.mxu0 0.0
      %4857 = vmatprep.subr.mxu0 0.0
      %4858 = vmatpush2.msra.mxu0 0.0
      %4859 = vmatprep.subr.mxu0 0.0
      %4860 = vmatpush2.msra.mxu0 0.0
      %4861 = vmatprep.subr.mxu0 0.0
      %4862 = vmatpush2.msra.mxu0 0.0
      %4863 = vmatprep.subr.mxu0 0.0
      %4864 = vmatpush2.msra.mxu0 0.0
      %4865 = vmatprep.subr.mxu0 0.0
      %4866 = vmatpush2.msra.mxu0 0.0
      %4867 = vmatprep.subr.mxu0 0.0
      %4868 = vmatpush2.msra.mxu0 0.0
      %4869 = vmatprep.subr.mxu0 0.0
      %4870 = vmatpush2.msra.mxu0 0.0
      %4871 = vmatprep.subr.mxu0 0.0
      %4872 = vmatpush2.msra.mxu0 0.0
      %4873 = vmatprep.subr.mxu0 0.0
      %4874 = vmatpush2.msra.mxu0 0.0
      %4875 = vmatprep.subr.mxu0 0.0
      %4876 = vmatpush2.msra.mxu0 0.0
      %4877 = vmatprep.subr.mxu0 0.0
      %4878 = vmatpush2.msra.mxu0 0.0
      %4879 = vmatprep.mubr.f32.mxu0 0.0
      %4880 = vmatmul.mubr.f32.gmra.mxu0 %v4810
      %v4881 = vpop.f32.mrf.mxu0
      %v4882 = vadd.f32 %v4776, %v4881
      %v4883 = vpop.f32.mrf.mxu0
      %4884 = vmatprep.mubr.f32.mxu0 0.0
      %4885 = vmatmul.mubr.f32.gmra.mxu0 %v4813
      %v4886 = vpop.f32.mrf.mxu0
      %v4887 = vadd.f32 %v4781, %v4886
      %v4888 = vpop.f32.mrf.mxu0
      %4889 = vmatprep.mubr.f32.mxu0 0.0
      %4890 = vmatmul.mubr.f32.gmra.mxu0 %v4689
      %v4891 = vpop.f32.mrf.mxu0
      %v4892 = vadd.f32 %v4786, %v4891
      %v4893 = vpop.f32.mrf.mxu0
      %4894 = vmatprep.mubr.f32.mxu0 0.0
      %4895 = vmatmul.mubr.f32.gmra.mxu0 %v4692
      %v4896 = vpop.f32.mrf.mxu0
      %v4897 = vadd.f32 %v4791, %v4896
      %v4898 = vpop.f32.mrf.mxu0
      %4899 = vmatprep.mubr.f32.mxu0 0.0
      %4900 = vmatmul.mubr.f32.gmra.mxu0 %v4695
      %v4901 = vpop.f32.mrf.mxu0
      %v4902 = vadd.f32 %v4796, %v4901
      %v4903 = vpop.f32.mrf.mxu0
      %4904 = vmatprep.mubr.f32.mxu0 0.0
      %4905 = vmatmul.mubr.f32.gmra.mxu0 %v4698
      %v4906 = vpop.f32.mrf.mxu0
      %v4907 = vadd.f32 %v4801, %v4906
      %v4908 = vpop.f32.mrf.mxu0
      %4909 = vmatprep.mubr.f32.mxu0 0.0
      %4910 = vmatmul.mubr.f32.gmra.mxu0 %v4701
      %v4911 = vpop.f32.mrf.mxu0
      %v4912 = vadd.f32 %v4806, %v4911
      %v4913 = vpop.f32.mrf.mxu0
      %4914 = vdwg.mxu0
      %s4915 = scalar_lea.vmem %s9, 3
      %v4916 = vld [vmem:[%s4915] sm:$0x1]
      %v4918 = vlaneseq
      %v4919 = vshrl.u32 %v4918, 7
      %v4920 = vsub.s32 0, %v4919
      %v4921 = vrot.slane %v4916, %v4920
      %v4923 = vadd.f32 %v4882, %v4921
      %v4924 = vadd.f32 %v4887, %v4921
      %v4925 = vadd.f32 %v4892, %v4921
      %v4926 = vadd.f32 %v4897, %v4921
      %v4927 = vadd.f32 %v4902, %v4921
      %v4928 = vadd.f32 %v4907, %v4921
      %v4929 = vadd.f32 %v4912, %v4921
      %v4930 = vtanh.pop %v4923
      %v4931 = vtanh.pop %v4924
      %v4932 = vtanh.pop %v4925
      %v4933 = vtanh.pop %v4926
      %v4934 = vtanh.pop %v4927
      %v4935 = vtanh.pop %v4928
      %v4936 = vtanh.pop %v4929
      %v4937 = vxor.u32 %v4923, 2147483648
      %v4938 = vxor.u32 %v4924, 2147483648
      %v4939 = vxor.u32 %v4925, 2147483648
      %v4940 = vxor.u32 %v4926, 2147483648
      %v4941 = vxor.u32 %v4927, 2147483648
      %v4942 = vxor.u32 %v4928, 2147483648
      %v4943 = vxor.u32 %v4929, 2147483648
      %v4944 = vmul.f32 %v4937, 1.442695
      %v4945 = vpow.pop %v4944
      %v4946 = vmul.f32 %v4938, 1.442695
      %v4947 = vpow.pop %v4946
      %v4948 = vmul.f32 %v4939, 1.442695
      %v4949 = vpow.pop %v4948
      %v4950 = vmul.f32 %v4940, 1.442695
      %v4951 = vpow.pop %v4950
      %v4952 = vmul.f32 %v4941, 1.442695
      %v4953 = vpow.pop %v4952
      %v4954 = vmul.f32 %v4942, 1.442695
      %v4955 = vpow.pop %v4954
      %v4956 = vmul.f32 %v4943, 1.442695
      %v4957 = vpow.pop %v4956
      %v4958 = vadd.f32 %v4945, 1.0
      %v4959 = vadd.f32 %v4947, 1.0
      %v4960 = vadd.f32 %v4949, 1.0
      %v4961 = vadd.f32 %v4951, 1.0
      %v4962 = vadd.f32 %v4953, 1.0
      %v4963 = vadd.f32 %v4955, 1.0
      %v4964 = vadd.f32 %v4957, 1.0
      %v4965 = vrcp.pop %v4958
      %v4966 = vmul.f32 1.0, %v4965
      %v4967 = vrcp.pop %v4959
      %v4968 = vmul.f32 1.0, %v4967
      %v4969 = vrcp.pop %v4960
      %v4970 = vmul.f32 1.0, %v4969
      %v4971 = vrcp.pop %v4961
      %v4972 = vmul.f32 1.0, %v4971
      %v4973 = vrcp.pop %v4962
      %v4974 = vmul.f32 1.0, %v4973
      %v4975 = vrcp.pop %v4963
      %v4976 = vmul.f32 1.0, %v4975
      %v4977 = vrcp.pop %v4964
      %v4978 = vmul.f32 1.0, %v4977
      %4986 = vrot.lane.b32.xlu0 %v4966, 120
      %v4987 = vpop.permute.xlu0 %4986
      %4988 = vrot.lane.b32.xlu0 %v4968, 120
      %v4989 = vpop.permute.xlu0 %4988
      %4990 = vrot.lane.b32.xlu0 %v4970, 120
      %v4991 = vpop.permute.xlu0 %4990
      %4992 = vrot.lane.b32.xlu0 %v4972, 120
      %v4993 = vpop.permute.xlu0 %4992
      %4994 = vrot.lane.b32.xlu0 %v4974, 120
      %v4995 = vpop.permute.xlu0 %4994
      %4996 = vrot.lane.b32.xlu0 %v4976, 120
      %v4997 = vpop.permute.xlu0 %4996
      %4998 = vrot.lane.b32.xlu0 %v4978, 120
      %v4999 = vpop.permute.xlu0 %4998
      %v5007 = vmul.f32 %v4930, %v4987
      %v5008 = vmul.f32 %v4931, %v4989
      %v5009 = vmul.f32 %v4932, %v4991
      %v5010 = vmul.f32 %v4933, %v4993
      %v5011 = vmul.f32 %v4934, %v4995
      %v5012 = vmul.f32 %v4935, %v4997
      %v5013 = vmul.f32 %v4936, %v4999
      %s5014 = scalar_lea.vmem %s10, 24
      %v5015 = vld [vmem:[%s5014] sm:$0xff]
      %s5016 = scalar_lea.vmem %s11, 3
      %v5017 = vld [vmem:[%s5016] sm:$0x1]
      %v5019 = vlaneseq
      %v5020 = vshrl.u32 %v5019, 7
      %v5021 = vsub.s32 0, %v5020
      %v5022 = vrot.slane %v5017, %v5021
      %v5025 = vsel %vm773, %v5007, 0
      %v5028 = vsel %vm773, %v5008, 0
      %v5031 = vsel %vm773, %v5009, 0
      %v5034 = vsel %vm773, %v5010, 0
      %v5037 = vsel %vm773, %v5011, 0
      %v5040 = vsel %vm773, %v5012, 0
      %v5043 = vsel %vm773, %v5013, 0
      %5045 = vmatprep.subr.mxu0 0.0
      %5046 = vmatpush1.msra.mxu0 0.0
      %5047 = vmatprep.subr.mxu0 0.0
      %5048 = vmatpush1.msra.mxu0 0.0
      %5049 = vmatprep.subr.mxu0 0.0
      %5050 = vmatpush1.msra.mxu0 0.0
      %5051 = vmatprep.subr.mxu0 0.0
      %5052 = vmatpush1.msra.mxu0 0.0
      %5053 = vmatprep.subr.mxu0 0.0
      %5054 = vmatpush1.msra.mxu0 0.0
      %5055 = vmatprep.subr.mxu0 0.0
      %5056 = vmatpush1.msra.mxu0 0.0
      %5057 = vmatprep.subr.mxu0 0.0
      %5058 = vmatpush1.msra.mxu0 0.0
      %5059 = vmatprep.subr.mxu0 0.0
      %5060 = vmatpush1.msra.mxu0 0.0
      %5061 = vmatprep.subr.mxu0 0.0
      %5062 = vmatpush1.msra.mxu0 0.0
      %5063 = vmatprep.subr.mxu0 0.0
      %5064 = vmatpush1.msra.mxu0 0.0
      %5065 = vmatprep.subr.mxu0 0.0
      %5066 = vmatpush1.msra.mxu0 0.0
      %5067 = vmatprep.subr.mxu0 0.0
      %5068 = vmatpush1.msra.mxu0 0.0
      %5069 = vmatprep.subr.mxu0 0.0
      %5070 = vmatpush1.msra.mxu0 0.0
      %5071 = vmatprep.subr.mxu0 0.0
      %5072 = vmatpush1.msra.mxu0 0.0
      %5073 = vmatprep.subr.mxu0 0.0
      %5074 = vmatpush1.msra.mxu0 0.0
      %5075 = vmatprep.subr.mxu0 0.0
      %5076 = vmatpush1.msra.mxu0 %v5015
      %5077 = vmatprep.subr.mxu0 0.0
      %5078 = vmatpush2.msra.mxu0 0.0
      %5079 = vmatprep.subr.mxu0 0.0
      %5080 = vmatpush2.msra.mxu0 0.0
      %5081 = vmatprep.subr.mxu0 0.0
      %5082 = vmatpush2.msra.mxu0 0.0
      %5083 = vmatprep.subr.mxu0 0.0
      %5084 = vmatpush2.msra.mxu0 0.0
      %5085 = vmatprep.subr.mxu0 0.0
      %5086 = vmatpush2.msra.mxu0 0.0
      %5087 = vmatprep.subr.mxu0 0.0
      %5088 = vmatpush2.msra.mxu0 0.0
      %5089 = vmatprep.subr.mxu0 0.0
      %5090 = vmatpush2.msra.mxu0 0.0
      %5091 = vmatprep.subr.mxu0 0.0
      %5092 = vmatpush2.msra.mxu0 0.0
      %5093 = vmatprep.subr.mxu0 0.0
      %5094 = vmatpush2.msra.mxu0 0.0
      %5095 = vmatprep.subr.mxu0 0.0
      %5096 = vmatpush2.msra.mxu0 0.0
      %5097 = vmatprep.subr.mxu0 0.0
      %5098 = vmatpush2.msra.mxu0 0.0
      %5099 = vmatprep.subr.mxu0 0.0
      %5100 = vmatpush2.msra.mxu0 0.0
      %5101 = vmatprep.subr.mxu0 0.0
      %5102 = vmatpush2.msra.mxu0 0.0
      %5103 = vmatprep.subr.mxu0 0.0
      %5104 = vmatpush2.msra.mxu0 0.0
      %5105 = vmatprep.subr.mxu0 0.0
      %5106 = vmatpush2.msra.mxu0 0.0
      %5107 = vmatprep.subr.mxu0 0.0
      %5108 = vmatpush2.msra.mxu0 0.0
      %5109 = vmatprep.mubr.f32.mxu0 0.0
      %5110 = vmatmul.mubr.f32.gmra.mxu0 %v5025
      %v5111 = vpop.f32.mrf.mxu0
      %v5112 = vadd.f32 %v5022, %v5111
      %v5113 = vpop.f32.mrf.mxu0
      %5114 = vmatprep.mubr.f32.mxu0 0.0
      %5115 = vmatmul.mubr.f32.gmra.mxu0 %v5028
      %v5116 = vpop.f32.mrf.mxu0
      %v5117 = vadd.f32 %v5022, %v5116
      %v5118 = vpop.f32.mrf.mxu0
      %5119 = vmatprep.mubr.f32.mxu0 0.0
      %5120 = vmatmul.mubr.f32.gmra.mxu0 %v5031
      %v5121 = vpop.f32.mrf.mxu0
      %v5122 = vadd.f32 %v5022, %v5121
      %v5123 = vpop.f32.mrf.mxu0
      %5124 = vmatprep.mubr.f32.mxu0 0.0
      %5125 = vmatmul.mubr.f32.gmra.mxu0 %v5034
      %v5126 = vpop.f32.mrf.mxu0
      %v5127 = vadd.f32 %v5022, %v5126
      %v5128 = vpop.f32.mrf.mxu0
      %5129 = vmatprep.mubr.f32.mxu0 0.0
      %5130 = vmatmul.mubr.f32.gmra.mxu0 %v5037
      %v5131 = vpop.f32.mrf.mxu0
      %v5132 = vadd.f32 %v5022, %v5131
      %v5133 = vpop.f32.mrf.mxu0
      %5134 = vmatprep.mubr.f32.mxu0 0.0
      %5135 = vmatmul.mubr.f32.gmra.mxu0 %v5040
      %v5136 = vpop.f32.mrf.mxu0
      %v5137 = vadd.f32 %v5022, %v5136
      %v5138 = vpop.f32.mrf.mxu0
      %5139 = vmatprep.mubr.f32.mxu0 0.0
      %5140 = vmatmul.mubr.f32.gmra.mxu0 %v5043
      %v5141 = vpop.f32.mrf.mxu0
      %v5142 = vadd.f32 %v5022, %v5141
      %v5143 = vpop.f32.mrf.mxu0
      %5144 = vdwg.mxu0
      %v5145 = vadd.f32 %v3995, %v5112
      %v5146 = vadd.f32 %v3996, %v5117
      %v5147 = vadd.f32 %v3997, %v5122
      %v5148 = vadd.f32 %v3998, %v5127
      %v5149 = vadd.f32 %v3999, %v5132
      %v5150 = vadd.f32 %v4000, %v5137
      %v5151 = vadd.f32 %v4001, %v5142
      %v5152 = vmax.f32 %v5145, 0.0
      %v5153 = vmax.f32 %v5146, 0.0
      %v5154 = vmax.f32 %v5147, 0.0
      %v5155 = vmax.f32 %v5148, 0.0
      %v5156 = vmax.f32 %v5149, 0.0
      %v5157 = vmax.f32 %v5150, 0.0
      %v5158 = vmax.f32 %v5151, 0.0
      %v5159 = vld [vmem:[%s14] sm:$0xff]
      %v5160 = vld [vmem:[%s14 + $0x8] sm:$0xff]
      %v5161 = vld [vmem:[%s15] sm:$0x1]
      %v5163 = vlaneseq
      %v5164 = vshrl.u32 %v5163, 7
      %v5165 = vsub.s32 0, %v5164
      %v5166 = vrot.slane %v5161, %v5165
      %vm5168 = vcmask 130048
      %v5170 = vsel %vm5168, %v5152, 0
      %v5173 = vsel %vm5168, %v5153, 0
      %v5176 = vsel %vm5168, %v5154, 0
      %v5179 = vsel %vm5168, %v5155, 0
      %v5182 = vsel %vm5168, %v5156, 0
      %v5185 = vsel %vm5168, %v5157, 0
      %v5188 = vsel %vm5168, %v5158, 0
      %5190 = vmatprep.subr.mxu0 0.0
      %5191 = vmatpush1.msra.mxu0 0.0
      %5192 = vmatprep.subr.mxu0 0.0
      %5193 = vmatpush1.msra.mxu0 0.0
      %5194 = vmatprep.subr.mxu0 0.0
      %5195 = vmatpush1.msra.mxu0 0.0
      %5196 = vmatprep.subr.mxu0 0.0
      %5197 = vmatpush1.msra.mxu0 0.0
      %5198 = vmatprep.subr.mxu0 0.0
      %5199 = vmatpush1.msra.mxu0 0.0
      %5200 = vmatprep.subr.mxu0 0.0
      %5201 = vmatpush1.msra.mxu0 0.0
      %5202 = vmatprep.subr.mxu0 0.0
      %5203 = vmatpush1.msra.mxu0 0.0
      %5204 = vmatprep.subr.mxu0 0.0
      %5205 = vmatpush1.msra.mxu0 0.0
      %5206 = vmatprep.subr.mxu0 0.0
      %5207 = vmatpush1.msra.mxu0 0.0
      %5208 = vmatprep.subr.mxu0 0.0
      %5209 = vmatpush1.msra.mxu0 0.0
      %5210 = vmatprep.subr.mxu0 0.0
      %5211 = vmatpush1.msra.mxu0 0.0
      %5212 = vmatprep.subr.mxu0 0.0
      %5213 = vmatpush1.msra.mxu0 0.0
      %5214 = vmatprep.subr.mxu0 0.0
      %5215 = vmatpush1.msra.mxu0 0.0
      %5216 = vmatprep.subr.mxu0 0.0
      %5217 = vmatpush1.msra.mxu0 0.0
      %5218 = vmatprep.subr.mxu0 0.0
      %5219 = vmatpush1.msra.mxu0 %v5160
      %5220 = vmatprep.subr.mxu0 0.0
      %5221 = vmatpush1.msra.mxu0 %v5159
      %5222 = vmatprep.subr.mxu0 0.0
      %5223 = vmatpush2.msra.mxu0 0.0
      %5224 = vmatprep.subr.mxu0 0.0
      %5225 = vmatpush2.msra.mxu0 0.0
      %5226 = vmatprep.subr.mxu0 0.0
      %5227 = vmatpush2.msra.mxu0 0.0
      %5228 = vmatprep.subr.mxu0 0.0
      %5229 = vmatpush2.msra.mxu0 0.0
      %5230 = vmatprep.subr.mxu0 0.0
      %5231 = vmatpush2.msra.mxu0 0.0
      %5232 = vmatprep.subr.mxu0 0.0
      %5233 = vmatpush2.msra.mxu0 0.0
      %5234 = vmatprep.subr.mxu0 0.0
      %5235 = vmatpush2.msra.mxu0 0.0
      %5236 = vmatprep.subr.mxu0 0.0
      %5237 = vmatpush2.msra.mxu0 0.0
      %5238 = vmatprep.subr.mxu0 0.0
      %5239 = vmatpush2.msra.mxu0 0.0
      %5240 = vmatprep.subr.mxu0 0.0
      %5241 = vmatpush2.msra.mxu0 0.0
      %5242 = vmatprep.subr.mxu0 0.0
      %5243 = vmatpush2.msra.mxu0 0.0
      %5244 = vmatprep.subr.mxu0 0.0
      %5245 = vmatpush2.msra.mxu0 0.0
      %5246 = vmatprep.subr.mxu0 0.0
      %5247 = vmatpush2.msra.mxu0 0.0
      %5248 = vmatprep.subr.mxu0 0.0
      %5249 = vmatpush2.msra.mxu0 0.0
      %5250 = vmatprep.subr.mxu0 0.0
      %5251 = vmatpush2.msra.mxu0 0.0
      %5252 = vmatprep.subr.mxu0 0.0
      %5253 = vmatpush2.msra.mxu0 0.0
      %5254 = vmatprep.mubr.f32.mxu0 0.0
      %5255 = vmatmul.mubr.f32.gmra.mxu0 %v5170
      %v5256 = vpop.f32.mrf.mxu0
      %v5257 = vadd.f32 %v5166, %v5256
      %v5258 = vpop.f32.mrf.mxu0
      %5259 = vmatprep.mubr.f32.mxu0 0.0
      %5260 = vmatmul.mubr.f32.gmra.mxu0 %v5173
      %v5261 = vpop.f32.mrf.mxu0
      %v5262 = vadd.f32 %v5166, %v5261
      %v5263 = vpop.f32.mrf.mxu0
      %5264 = vmatprep.mubr.f32.mxu0 0.0
      %5265 = vmatmul.mubr.f32.gmra.mxu0 %v5176
      %v5266 = vpop.f32.mrf.mxu0
      %v5267 = vadd.f32 %v5166, %v5266
      %v5268 = vpop.f32.mrf.mxu0
      %5269 = vmatprep.mubr.f32.mxu0 0.0
      %5270 = vmatmul.mubr.f32.gmra.mxu0 %v5179
      %v5271 = vpop.f32.mrf.mxu0
      %v5272 = vadd.f32 %v5166, %v5271
      %v5273 = vpop.f32.mrf.mxu0
      %5274 = vmatprep.mubr.f32.mxu0 0.0
      %5275 = vmatmul.mubr.f32.gmra.mxu0 %v5182
      %v5276 = vpop.f32.mrf.mxu0
      %v5277 = vadd.f32 %v5166, %v5276
      %v5278 = vpop.f32.mrf.mxu0
      %5279 = vmatprep.mubr.f32.mxu0 0.0
      %5280 = vmatmul.mubr.f32.gmra.mxu0 %v5185
      %v5281 = vpop.f32.mrf.mxu0
      %v5282 = vadd.f32 %v5166, %v5281
      %v5283 = vpop.f32.mrf.mxu0
      %5284 = vmatprep.mubr.f32.mxu0 0.0
      %5285 = vmatmul.mubr.f32.gmra.mxu0 %v5188
      %v5286 = vpop.f32.mrf.mxu0
      %v5287 = vadd.f32 %v5166, %v5286
      %v5288 = vpop.f32.mrf.mxu0
      %5289 = vdwg.mxu0
      %v5290 = vmax.f32 %v5257, 0.0
      %v5291 = vmax.f32 %v5262, 0.0
      %v5292 = vmax.f32 %v5267, 0.0
      %v5293 = vmax.f32 %v5272, 0.0
      %v5294 = vmax.f32 %v5277, 0.0
      %v5295 = vmax.f32 %v5282, 0.0
      %v5296 = vmax.f32 %v5287, 0.0
      %v5297 = vld [vmem:[%s16] sm:$0xff]
      %v5298 = vld [vmem:[%s16 + $0x8] sm:$0xff]
      %v5299 = vld [vmem:[%s16 + $0x10] sm:$0xff]
      %v5300 = vld [vmem:[%s16 + $0x18] sm:$0xff]
      %v5301 = vld [vmem:[%s17] sm:$0x1]
      %v5303 = vlaneseq
      %v5304 = vshrl.u32 %v5303, 7
      %v5305 = vsub.s32 0, %v5304
      %v5306 = vrot.slane %v5301, %v5305
      %vm5308 = vcmask 261120
      %v5310 = vsel %vm5308, %v5290, 0
      %v5313 = vsel %vm5308, %v5291, 0
      %v5316 = vsel %vm5308, %v5292, 0
      %v5319 = vsel %vm5308, %v5293, 0
      %v5322 = vsel %vm5308, %v5294, 0
      %v5325 = vsel %vm5308, %v5295, 0
      %v5328 = vsel %vm5308, %v5296, 0
      %5330 = vmatprep.subr.mxu0 0.0
      %5331 = vmatpush1.msra.mxu0 0.0
      %5332 = vmatprep.subr.mxu0 0.0
      %5333 = vmatpush1.msra.mxu0 0.0
      %5334 = vmatprep.subr.mxu0 0.0
      %5335 = vmatpush1.msra.mxu0 0.0
      %5336 = vmatprep.subr.mxu0 0.0
      %5337 = vmatpush1.msra.mxu0 0.0
      %5338 = vmatprep.subr.mxu0 0.0
      %5339 = vmatpush1.msra.mxu0 0.0
      %5340 = vmatprep.subr.mxu0 0.0
      %5341 = vmatpush1.msra.mxu0 0.0
      %5342 = vmatprep.subr.mxu0 0.0
      %5343 = vmatpush1.msra.mxu0 0.0
      %5344 = vmatprep.subr.mxu0 0.0
      %5345 = vmatpush1.msra.mxu0 0.0
      %5346 = vmatprep.subr.mxu0 0.0
      %5347 = vmatpush1.msra.mxu0 0.0
      %5348 = vmatprep.subr.mxu0 0.0
      %5349 = vmatpush1.msra.mxu0 0.0
      %5350 = vmatprep.subr.mxu0 0.0
      %5351 = vmatpush1.msra.mxu0 0.0
      %5352 = vmatprep.subr.mxu0 0.0
      %5353 = vmatpush1.msra.mxu0 0.0
      %5354 = vmatprep.subr.mxu0 0.0
      %5355 = vmatpush1.msra.mxu0 %v5300
      %5356 = vmatprep.subr.mxu0 0.0
      %5357 = vmatpush1.msra.mxu0 %v5299
      %5358 = vmatprep.subr.mxu0 0.0
      %5359 = vmatpush1.msra.mxu0 %v5298
      %5360 = vmatprep.subr.mxu0 0.0
      %5361 = vmatpush1.msra.mxu0 %v5297
      %5362 = vmatprep.subr.mxu0 0.0
      %5363 = vmatpush2.msra.mxu0 0.0
      %5364 = vmatprep.subr.mxu0 0.0
      %5365 = vmatpush2.msra.mxu0 0.0
      %5366 = vmatprep.subr.mxu0 0.0
      %5367 = vmatpush2.msra.mxu0 0.0
      %5368 = vmatprep.subr.mxu0 0.0
      %5369 = vmatpush2.msra.mxu0 0.0
      %5370 = vmatprep.subr.mxu0 0.0
      %5371 = vmatpush2.msra.mxu0 0.0
      %5372 = vmatprep.subr.mxu0 0.0
      %5373 = vmatpush2.msra.mxu0 0.0
      %5374 = vmatprep.subr.mxu0 0.0
      %5375 = vmatpush2.msra.mxu0 0.0
      %5376 = vmatprep.subr.mxu0 0.0
      %5377 = vmatpush2.msra.mxu0 0.0
      %5378 = vmatprep.subr.mxu0 0.0
      %5379 = vmatpush2.msra.mxu0 0.0
      %5380 = vmatprep.subr.mxu0 0.0
      %5381 = vmatpush2.msra.mxu0 0.0
      %5382 = vmatprep.subr.mxu0 0.0
      %5383 = vmatpush2.msra.mxu0 0.0
      %5384 = vmatprep.subr.mxu0 0.0
      %5385 = vmatpush2.msra.mxu0 0.0
      %5386 = vmatprep.subr.mxu0 0.0
      %5387 = vmatpush2.msra.mxu0 0.0
      %5388 = vmatprep.subr.mxu0 0.0
      %5389 = vmatpush2.msra.mxu0 0.0
      %5390 = vmatprep.subr.mxu0 0.0
      %5391 = vmatpush2.msra.mxu0 0.0
      %5392 = vmatprep.subr.mxu0 0.0
      %5393 = vmatpush2.msra.mxu0 0.0
      %5394 = vmatprep.mubr.f32.mxu0 0.0
      %5395 = vmatmul.mubr.f32.gmra.mxu0 %v5310
      %v5396 = vpop.f32.mrf.mxu0
      %v5397 = vadd.f32 %v5306, %v5396
      %v5398 = vpop.f32.mrf.mxu0
      %5399 = vmatprep.mubr.f32.mxu0 0.0
      %5400 = vmatmul.mubr.f32.gmra.mxu0 %v5313
      %v5401 = vpop.f32.mrf.mxu0
      %v5402 = vadd.f32 %v5306, %v5401
      %v5403 = vpop.f32.mrf.mxu0
      %5404 = vmatprep.mubr.f32.mxu0 0.0
      %5405 = vmatmul.mubr.f32.gmra.mxu0 %v5316
      %v5406 = vpop.f32.mrf.mxu0
      %v5407 = vadd.f32 %v5306, %v5406
      %v5408 = vpop.f32.mrf.mxu0
      %5409 = vmatprep.mubr.f32.mxu0 0.0
      %5410 = vmatmul.mubr.f32.gmra.mxu0 %v5319
      %v5411 = vpop.f32.mrf.mxu0
      %v5412 = vadd.f32 %v5306, %v5411
      %v5413 = vpop.f32.mrf.mxu0
      %5414 = vmatprep.mubr.f32.mxu0 0.0
      %5415 = vmatmul.mubr.f32.gmra.mxu0 %v5322
      %v5416 = vpop.f32.mrf.mxu0
      %v5417 = vadd.f32 %v5306, %v5416
      %v5418 = vpop.f32.mrf.mxu0
      %5419 = vmatprep.mubr.f32.mxu0 0.0
      %5420 = vmatmul.mubr.f32.gmra.mxu0 %v5325
      %v5421 = vpop.f32.mrf.mxu0
      %v5422 = vadd.f32 %v5306, %v5421
      %v5423 = vpop.f32.mrf.mxu0
      %5424 = vmatprep.mubr.f32.mxu0 0.0
      %5425 = vmatmul.mubr.f32.gmra.mxu0 %v5328
      %v5426 = vpop.f32.mrf.mxu0
      %v5427 = vadd.f32 %v5306, %v5426
      %v5428 = vpop.f32.mrf.mxu0
      %5429 = vdwg.mxu0
      %vm5430 = vcmask 31744
      %5431 = vst.msk [vmem:[%s575] sm:$0xff] %vm5430, %v5397
      %5432 = vst.msk [vmem:[%s575 + $0x8] sm:$0xff] %vm5430, %v5402
      %5433 = vst.msk [vmem:[%s575 + $0x10] sm:$0xff] %vm5430, %v5407
      %5434 = vst.msk [vmem:[%s575 + $0x18] sm:$0xff] %vm5430, %v5412
      %5435 = vst.msk [vmem:[%s575 + $0x20] sm:$0xff] %vm5430, %v5417
      %5436 = vst.msk [vmem:[%s575 + $0x28] sm:$0xff] %vm5430, %v5422
      %5437 = vst.msk [vmem:[%s575 + $0x30] sm:$0xff] %vm5430, %v5427
      %p5438 = scmp.lt.s32.totalorder %s29, 1
      %s5439 = scalar_select %p5438, %s29, 1
      %s5440 = smul.addr %s5439, 7
      %s5441 = smul.addr %s5440, 8
      %s5442 = scalar_lea.vmem %s18, %s5441
      // Predicated region
      $region93: #{forward.1} parent=91 // pred_check
        %p5443 = pneg %p430
      $region94: #{forward.1} parent=91 // pred_check_branch
        %5445 = sbr.rel (%p5443) target = $region96
      $region95: #{forward.1} parent=91 // pred_region
        _
      $region96: #{forward.1} parent=91 // pred_fallthru
        _
    $region92: #{forward.1} parent=5 // pred_fallthru
      _
    %p5446 = scmp.le.s32.totalorder 2, %s24
    // Predicated region
    $region97: #{forward.1} parent=5 // pred_check
      %p5447 = pneg %p5446
    $region98: #{forward.1} parent=5 // pred_check_branch
      %5449 = sbr.rel (%p5447) target = $region100
    $region99: #{forward.1} parent=5 // pred_region
      %s5450 = ssub.s32 %s24, 2
      // Predicated region
      $region101: #{forward.1} parent=99 // pred_check
        %p5451 = pneg %p436
      $region102: #{forward.1} parent=99 // pred_check_branch
        %5453 = sbr.rel (%p5451) target = $region104
      $region103: #{forward.1} parent=99 // pred_region
        %p5454 = scmp.lt.s32.totalorder %s30, 1
        %s5455 = scalar_select %p5454, %s30, 1
        %s5456 = smul.addr %s5455, 7
        %s5457 = smul.addr %s5456, 8
        %s5458 = scalar_lea.vmem %s18, %s5457
      $region104: #{forward.1} parent=99 // pred_fallthru
        _
    $region100: #{forward.1} parent=5 // pred_fallthru
      _
  $region6: #{forward.1} parent=0 // loop_footer
    %s28 = sadd.s32 1, %s24
  $region7: #{forward.1} parent=0 // loop_footer_branch
    %23 = sbr.rel target = $region3
  $region8: #{forward.1} parent=0 // loop_exit
    _

</llo_original>
